<compile_context>
chip_gen: v6e
topology: v6e:2x2x1
jax: 0.10.0
libtpu: 0.0.40
codegen_flags: <defaults>
</compile_context>

<pallas_src>
import functools
import math

import jax
import jax.numpy as jnp
from jax import lax
from jax.experimental import pallas as pl
from jax.experimental.pallas import tpu as pltpu

LANE = 128                       # lane width
SUBLANE = 8                      # f32 sublane width
TM_MAX = 512                     # lanes (flattened N*Ho*Wo) per grid step
TK_MAX = 2048                    # contraction rows (Cin*KH*KW) per grid step
STATS_LANES = 128                # lane width of the per-tile partial-stat outputs
VMEM_LIMIT = 48 * 1024 * 1024    # scoped-VMEM budget (headroom under v7x's 64 MiB)
BN_EPS = 1e-5
LRELU_SLOPE = 0.2


def _round_up(x, m):
    return ((x + m - 1) // m) * m


# --------------------- single-buffering (Buffered(1)) probe ---------------------

@functools.lru_cache(maxsize=None)
def _single_buffering_ok():
    """True iff pipeline_mode=pl.Buffered(1) compiles+runs here (single-buffered
    grid-invariant operands -> halves their VMEM footprint).  Runs eagerly even if
    called under tracing, and falls back safely on any failure."""
    try:
        def _probe(x_ref, c_ref, o_ref):
            o_ref[...] = x_ref[...] + c_ref[...]

        with jax.ensure_compile_time_eval():
            f = pl.pallas_call(
                _probe,
                out_shape=jax.ShapeDtypeStruct((8, 256), jnp.float32),
                grid=(2,),
                in_specs=[
                    pl.BlockSpec((8, 128), lambda i: (0, i)),
                    pl.BlockSpec((8, 128), lambda i: (0, 0),
                                 pipeline_mode=pl.Buffered(1)),
                ],
                out_specs=pl.BlockSpec((8, 128), lambda i: (0, i)),
            )
            jax.block_until_ready(f(jnp.ones((8, 256), jnp.float32),
                                    jnp.ones((8, 128), jnp.float32)))
        return True
    except Exception:   # any rejection -> default double buffering
        return False


def _const_spec(shape):
    """BlockSpec for a grid-invariant operand (same block at every grid step)."""
    index_map = lambda *_: (0,) * len(shape)
    if _single_buffering_ok():
        return pl.BlockSpec(shape, index_map, pipeline_mode=pl.Buffered(1))
    return pl.BlockSpec(shape, index_map)


# --------------------------------- kernels ---------------------------------------

def _conv_bias_act_kernel(p_ref, w_ref, b_ref, o_ref, acc_ref, *, slope):
    """out[:, i-tile] = [leaky_relu](W @ P[:, i-tile] + b), K-tiled accumulation."""
    k = pl.program_id(1)

    @pl.when(k == 0)
    def _():
        acc_ref[...] = jnp.zeros_like(acc_ref)

    acc_ref[...] += jnp.dot(w_ref[...], p_ref[...],
                            preferred_element_type=jnp.float32)

    @pl.when(k == pl.num_programs(1) - 1)
    def _():
        y = acc_ref[...] + b_ref[...]
        if slope is not None:
            y = jnp.where(y >= 0.0, y, slope * y)
        o_ref[...] = y.astype(o_ref.dtype)


def _conv_stats_kernel(p_ref, w_ref, y_ref, psum_ref, pssq_ref, acc_ref):
    """Conv matmul (K-tiled) + per-channel PARTIAL sum / sum-of-squares per M tile.

    Stats are lane reductions over the f32 accumulator while it is still in vregs.
    Partials are stored per M tile (not accumulated across tiles), keeping the M
    grid axis 'parallel'; they are combined exactly over the true M in plain JAX.
    Zero-padded lanes beyond the valid M produce zero patches, so they add nothing.
    """
    k = pl.program_id(1)

    @pl.when(k == 0)
    def _():
        acc_ref[...] = jnp.zeros_like(acc_ref)

    acc_ref[...] += jnp.dot(w_ref[...], p_ref[...],
                            preferred_element_type=jnp.float32)

    @pl.when(k == pl.num_programs(1) - 1)
    def _():
        acc = acc_ref[...]
        y_ref[...] = acc.astype(y_ref.dtype)
        s = jnp.sum(acc, axis=1, keepdims=True)
        q = jnp.sum(acc * acc, axis=1, keepdims=True)
        # Lane-broadcast so the partial-stat stores are full 128-lane (unmasked) vst's.
        psum_ref[...] = jnp.broadcast_to(s, psum_ref.shape)
        pssq_ref[...] = jnp.broadcast_to(q, pssq_ref.shape)


def _bn_act_kernel(y_ref, scale_ref, shift_ref, o_ref, *, slope):
    """y * scale + shift, then LeakyReLU; 'parallel' over M tiles; bf16 output."""
    y = y_ref[...] * scale_ref[...] + shift_ref[...]
    o_ref[...] = jnp.where(y >= 0.0, y, slope * y).astype(o_ref.dtype)


# ------------------------------ layer wrappers ------------------------------------

def _grid_dims(p_shape):
    kp, mp = p_shape
    tm = min(TM_MAX, mp)
    tk = min(TK_MAX, kp)
    assert mp % tm == 0 and kp % tk == 0
    return tm, tk, mp // tm, kp // tk


def _conv_bias_act(P, Wm, bias, *, slope, out_dtype):
    """Conv (im2col matmul) + bias (+ LeakyReLU).  Grid: (M 'parallel', K 'arbitrary')."""
    _, Mp = P.shape
    cout_p = Wm.shape[0]
    tm, tk, nm, nk = _grid_dims(P.shape)
    w_spec = (_const_spec((cout_p, tk)) if nk == 1
              else pl.BlockSpec((cout_p, tk), lambda i, k: (0, k)))
    return pl.pallas_call(
        functools.partial(_conv_bias_act_kernel, slope=slope),
        out_shape=jax.ShapeDtypeStruct((cout_p, Mp), out_dtype),
        grid_spec=pltpu.PrefetchScalarGridSpec(
            num_scalar_prefetch=0,
            grid=(nm, nk),
            in_specs=[
                pl.BlockSpec((tk, tm), lambda i, k: (k, i)),
                w_spec,
                _const_spec((cout_p, 1)),
            ],
            out_specs=pl.BlockSpec((cout_p, tm), lambda i, k: (0, i)),
            scratch_shapes=[pltpu.VMEM((cout_p, tm), jnp.float32)],
        ),
        compiler_params=pltpu.CompilerParams(
            dimension_semantics=("parallel", "arbitrary"),
            vmem_limit_bytes=VMEM_LIMIT),
    )(P, Wm, bias.reshape(cout_p, 1).astype(jnp.float32))


def _conv_stats(P, Wm):
    """Conv matmul + per-channel batch statistics.  Returns (y_preBN_f32, sum, sumsq)."""
    _, Mp = P.shape
    cout_p = Wm.shape[0]
    tm, tk, nm, nk = _grid_dims(P.shape)
    w_spec = (_const_spec((cout_p, tk)) if nk == 1
              else pl.BlockSpec((cout_p, tk), lambda i, k: (0, k)))
    y, psum, pssq = pl.pallas_call(
        _conv_stats_kernel,
        out_shape=(
            # pre-BN conv output stays f32: the apply pass normalizes exactly the
            # values the statistics were computed on; traffic is small vs the P read.
            jax.ShapeDtypeStruct((cout_p, Mp), jnp.float32),
            jax.ShapeDtypeStruct((cout_p, nm * STATS_LANES), jnp.float32),
            jax.ShapeDtypeStruct((cout_p, nm * STATS_LANES), jnp.float32),
        ),
        grid_spec=pltpu.PrefetchScalarGridSpec(
            num_scalar_prefetch=0,
            grid=(nm, nk),
            in_specs=[
                pl.BlockSpec((tk, tm), lambda i, k: (k, i)),
                w_spec,
            ],
            out_specs=(
                pl.BlockSpec((cout_p, tm), lambda i, k: (0, i)),
                pl.BlockSpec((cout_p, STATS_LANES), lambda i, k: (0, i)),
                pl.BlockSpec((cout_p, STATS_LANES), lambda i, k: (0, i)),
            ),
            scratch_shapes=[pltpu.VMEM((cout_p, tm), jnp.float32)],
        ),
        compiler_params=pltpu.CompilerParams(
            dimension_semantics=("parallel", "arbitrary"),
            vmem_limit_bytes=VMEM_LIMIT),
    )(P, Wm)
    # Every lane of a tile's 128-lane partial block holds the same value: take lane 0
    # of each tile and sum the per-tile partials exactly (over the full valid M).
    tot_sum = psum.reshape(cout_p, nm, STATS_LANES)[:, :, 0].sum(axis=1)
    tot_ssq = pssq.reshape(cout_p, nm, STATS_LANES)[:, :, 0].sum(axis=1)
    return y, tot_sum, tot_ssq


def _bn_act(y, scale, shift, *, out_dtype):
    """BN scale/shift + LeakyReLU, 'parallel' over M tiles (feeds both TCs on v7x)."""
    cout_p, Mp = y.shape
    tm = min(TM_MAX, Mp)
    nm = Mp // tm
    return pl.pallas_call(
        functools.partial(_bn_act_kernel, slope=LRELU_SLOPE),
        out_shape=jax.ShapeDtypeStruct((cout_p, Mp), out_dtype),
        grid_spec=pltpu.PrefetchScalarGridSpec(
            num_scalar_prefetch=0,
            grid=(nm,),
            in_specs=[
                pl.BlockSpec((cout_p, tm), lambda i: (0, i)),
                _const_spec((cout_p, 1)),
                _const_spec((cout_p, 1)),
            ],
            out_specs=pl.BlockSpec((cout_p, tm), lambda i: (0, i)),
        ),
        compiler_params=pltpu.CompilerParams(
            dimension_semantics=("parallel",),
            vmem_limit_bytes=VMEM_LIMIT),
    )(y, scale.reshape(cout_p, 1).astype(jnp.float32),
      shift.reshape(cout_p, 1).astype(jnp.float32))


# ------------------------------ im2col (JAX glue) ---------------------------------

def _im2col_cnhw(x_cnhw, *, stride, kh=4, kw=4, pad=1):
    """Patch extraction to (Kp, Mp) bf16; K ordered (cin, ky, kx) to match OIHW
    weights reshaped to (Cout, Cin*KH*KW).  M is padded to a multiple of the chosen
    M tile (not just 128) and K to a multiple of the K tile (inert zero rows)."""
    C, N, H, W = x_cnhw.shape
    Ho = (H + 2 * pad - kh) // stride + 1
    Wo = (W + 2 * pad - kw) // stride + 1
    M = N * Ho * Wo
    tm = min(TM_MAX, _round_up(M, LANE))
    Mp = _round_up(M, tm)

    xp = jnp.pad(x_cnhw.astype(jnp.bfloat16),
                 ((0, 0), (0, 0), (pad, pad), (pad, pad)))
    cols = []
    for ky in range(kh):
        for kx in range(kw):
            cols.append(xp[:, :, ky:ky + stride * Ho:stride,
                           kx:kx + stride * Wo:stride])
    P = jnp.stack(cols, axis=1).reshape(C * kh * kw, M)
    if Mp > M:
        P = jnp.pad(P, ((0, 0), (0, Mp - M)))        # zero lanes beyond valid M

    K = C * kh * kw
    tk = min(TK_MAX, K)
    Kp = _round_up(K, tk)
    if Kp > K:
        P = jnp.pad(P, ((0, Kp - K), (0, 0)))        # zero contraction rows are inert
    return P, Ho, Wo, M


# --------------------------- parameter construction -------------------------------

def xavier_normal(key, cout, cin, kh, kw, gain=0.02):
    fan_in = cin * kh * kw
    fan_out = cout * kh * kw
    std = gain * math.sqrt(2.0 / (fan_in + fan_out))
    return std * jax.random.normal(key, (cout, cin, kh, kw), dtype=jnp.float32)


def init_params(key, input_nc=3, ndf=8, n_layers=3):
    """Deterministic synthetic init mirroring init_weights(..., 'xavier')."""
    channels = [input_nc, ndf]
    strides = [2]
    has_norm = [False]
    acts = [True]
    for n in range(1, n_layers):
        channels.append(ndf * min(2 ** n, 8))
        strides.append(2)
        has_norm.append(True)
        acts.append(True)
    channels.append(ndf * min(2 ** n_layers, 8))
    strides.append(1)
    has_norm.append(True)
    acts.append(True)
    channels.append(1)
    strides.append(1)
    has_norm.append(False)
    acts.append(False)

    params = []
    keys = jax.random.split(key, 2 * len(strides))
    for li, (cin, cout, s, norm, act) in enumerate(
            zip(channels[:-1], channels[1:], strides, has_norm, acts)):
        w = xavier_normal(keys[2 * li], cout, cin, 4, 4)
        b = jnp.zeros((cout,), jnp.float32)           # Conv2d bias (non-normed layers)
        if norm:
            gamma = 1.0 + 0.02 * jax.random.normal(keys[2 * li + 1], (cout,),
                                                   dtype=jnp.float32)
            beta = jnp.zeros((cout,), jnp.float32)
        else:
            gamma = beta = None
        params.append(dict(w=w, b=b, stride=s, norm=norm, act=act,
                           gamma=gamma, beta=beta))
    return params


# ----------------------------------- forward --------------------------------------

def nlayer_discriminator_forward(x_nchw, params):
    N = x_nchw.shape[0]
    x = jnp.transpose(x_nchw, (1, 0, 2, 3))           # (C, N, H, W): lane-dense M
    for li, layer in enumerate(params):
        is_last = li == len(params) - 1
        P, Ho, Wo, M = _im2col_cnhw(x, stride=layer["stride"])
        Kp = P.shape[0]
        cout = layer["w"].shape[0]
        cout_p = _round_up(cout, SUBLANE)             # pad Cout=1 head to 8 sublanes
        Wm = layer["w"].reshape(cout, -1).astype(jnp.bfloat16)
        Wm = jnp.pad(Wm, ((0, cout_p - cout), (0, Kp - Wm.shape[1])))
        out_dtype = jnp.float32 if is_last else jnp.bfloat16   # bf16 inter-layer acts

        if layer["norm"]:
            y, tot_sum, tot_ssq = _conv_stats(P, Wm)
            mean = tot_sum / M
            # TODO(synk): E[x^2]-E[x]^2 in f32 is cancellation-prone vs PyTorch's
            #             centered variance when |mean| >> std; acceptable here since
            #             the conv already runs with bf16 MXU operands.
            var = jnp.maximum(tot_ssq / M - mean * mean, 0.0)   # biased var, as BN
            gamma = jnp.pad(layer["gamma"], (0, cout_p - cout), constant_values=1.0)
            beta = jnp.pad(layer["beta"], (0, cout_p - cout))
            scale = gamma * lax.rsqrt(var + BN_EPS)
            shift = beta - mean * scale
            out = _bn_act(y, scale, shift, out_dtype=out_dtype)
        else:
            bias = jnp.pad(layer["b"], (0, cout_p - cout)).astype(jnp.float32)
            slope = LRELU_SLOPE if layer["act"] else None
            out = _conv_bias_act(P, Wm, bias, slope=slope, out_dtype=out_dtype)

        x = out[:cout, :M].reshape(cout, N, Ho, Wo)
    return jnp.transpose(x, (1, 0, 2, 3)).astype(jnp.float32)   # (N, 1, Ho', Wo')


if __name__ == "__main__":
    # Prime the Buffered(1) probe eagerly (outside any jit trace).
    _single_buffering_ok()

    key = jax.random.PRNGKey(0)
    k_x, k_p = jax.random.split(key)

    # Small config: input_nc=3, ndf=8, n_layers=3; spatial 32 so the final
    # 4x4 / stride-1 convs still produce a non-empty patch map.
    x = jax.random.normal(k_x, (2, 3, 32, 32), dtype=jnp.float32)   # NCHW
    params = init_params(k_p, input_nc=3, ndf=8, n_layers=3)

    fwd = jax.jit(lambda inp: nlayer_discriminator_forward(inp, params))
    out = fwd(x)
    jax.block_until_ready(out)
    assert out.shape == (2, 1, 2, 2), out.shape
    assert bool(jnp.all(jnp.isfinite(out))), "non-finite output"
    print("KERNEL_OK")
</pallas_src>

<mosaic_0001>
module attributes {stable_mosaic.version = 11 : i64} {
  func.func @_probe(%arg0: i32, %arg1: memref<8x128xf32, #tpu.memory_space<vmem>>, %arg2: memref<8x128xf32, #tpu.memory_space<vmem>>, %arg3: memref<8x128xf32, #tpu.memory_space<vmem>>) attributes {dimension_semantics = [#tpu.dimension_semantics<arbitrary>], iteration_bounds = array<i64: 2>, scalar_prefetch = 0 : i64, scratch_operands = 0 : i64, tpu.core_type = #tpu.core_type<tc>, window_params = [{transform_indices = @transform_0, window_bounds = array<i64: 8, 128>}, {pipeline_mode = #tpu.pipeline_mode<synchronous>, transform_indices = @transform_1, window_bounds = array<i64: 8, 128>}, {transform_indices = @transform_2, window_bounds = array<i64: 8, 128>}]} {
    %c0 = arith.constant 0 : index
    %c0_0 = arith.constant 0 : index
    %0 = vector.load %arg1[%c0, %c0_0] : memref<8x128xf32, #tpu.memory_space<vmem>>, vector<8x128xf32>
    %c0_1 = arith.constant 0 : index
    %c0_2 = arith.constant 0 : index
    %1 = vector.load %arg2[%c0_1, %c0_2] : memref<8x128xf32, #tpu.memory_space<vmem>>, vector<8x128xf32>
    %2 = arith.addf %0, %1 : vector<8x128xf32>
    %c0_3 = arith.constant 0 : index
    %c0_4 = arith.constant 0 : index
    %3 = vector.load %arg3[%c0_3, %c0_4] : memref<8x128xf32, #tpu.memory_space<vmem>>, vector<8x128xf32>
    tpu.vector_store %arg3[%c0_3, %c0_4], %2 {strides = array<i32>} : memref<8x128xf32, #tpu.memory_space<vmem>>, vector<8x128xf32>,
    return
  }
  func.func @transform_0(%arg0: i32) -> (i32, i32) {
    %c0_i32 = arith.constant 0 : i32
    %c0_i32_0 = arith.constant 0 : i32
    return %c0_i32, %arg0 : i32, i32
  }
  func.func @transform_1(%arg0: i32) -> (i32, i32) {
    %c0_i32 = arith.constant 0 : i32
    %c0_i32_0 = arith.constant 0 : i32
    %c0_i32_1 = arith.constant 0 : i32
    return %c0_i32, %c0_i32_0 : i32, i32
  }
  func.func @transform_2(%arg0: i32) -> (i32, i32) {
    %c0_i32 = arith.constant 0 : i32
    %c0_i32_0 = arith.constant 0 : i32
    return %c0_i32, %arg0 : i32, i32
  }
}

module attributes {stable_mosaic.version = 11 : i64} {
  func.func @_conv_bias_act_kernel(%arg0: i32, %arg1: i32, %arg2: memref<48x512xbf16, #tpu.memory_space<vmem>>, %arg3: memref<8x48xbf16, #tpu.memory_space<vmem>>, %arg4: memref<8x1xf32, #tpu.memory_space<vmem>>, %arg5: memref<8x512xbf16, #tpu.memory_space<vmem>>, %arg6: memref<8x512xf32, #tpu.memory_space<vmem>>) attributes {dimension_semantics = [#tpu.dimension_semantics<parallel>, #tpu.dimension_semantics<arbitrary>], iteration_bounds = array<i64: 1, 1>, scalar_prefetch = 0 : i64, scratch_operands = 1 : i64, tpu.core_type = #tpu.core_type<tc>, window_params = [{transform_indices = @transform_0, window_bounds = array<i64: 48, 512>}, {pipeline_mode = #tpu.pipeline_mode<synchronous>, transform_indices = @transform_1, window_bounds = array<i64: 8, 48>}, {pipeline_mode = #tpu.pipeline_mode<synchronous>, transform_indices = @transform_2, window_bounds = array<i64: 8, 1>}, {transform_indices = @transform_3, window_bounds = array<i64: 8, 512>}]} {
    %c0_i32 = arith.constant 0 : i32
    %0 = arith.cmpi eq, %arg1, %c0_i32 : i32
    %1 = arith.extui %0 : i1 to i32
    %c0_i32_0 = arith.constant 0 : i32
    %2 = arith.cmpi ne, %1, %c0_i32_0 : i32
    scf.if %2 {
      %cst_10 = arith.constant 0.000000e+00 : f32
      %12 = vector.broadcast %cst_10 : f32 to vector<8x512xf32>
      %c0_11 = arith.constant 0 : index
      %c0_12 = arith.constant 0 : index
      %13 = vector.load %arg6[%c0_11, %c0_12] : memref<8x512xf32, #tpu.memory_space<vmem>>, vector<8x512xf32>
      tpu.vector_store %arg6[%c0_11, %c0_12], %12 {strides = array<i32>} : memref<8x512xf32, #tpu.memory_space<vmem>>, vector<8x512xf32>,
    } else {
    }
    %c0 = arith.constant 0 : index
    %c0_1 = arith.constant 0 : index
    %3 = vector.load %arg6[%c0, %c0_1] : memref<8x512xf32, #tpu.memory_space<vmem>>, vector<8x512xf32>
    %c0_2 = arith.constant 0 : index
    %c0_3 = arith.constant 0 : index
    %4 = vector.load %arg3[%c0_2, %c0_3] : memref<8x48xbf16, #tpu.memory_space<vmem>>, vector<8x48xbf16>
    %c0_4 = arith.constant 0 : index
    %c0_5 = arith.constant 0 : index
    %5 = vector.load %arg2[%c0_4, %c0_5] : memref<48x512xbf16, #tpu.memory_space<vmem>>, vector<48x512xbf16>
    %cst = arith.constant dense<0.000000e+00> : vector<8x512xf32>
    %6 = tpu.matmul %4, %5, %cst {dimension_numbers = #tpu.dot_dimension_numbers<[1], [0], [0], [1], [0, 0, 1, 1], [], []>} : vector<8x48xbf16>, vector<48x512xbf16>, vector<8x512xf32> -> vector<8x512xf32>
    %7 = arith.addf %3, %6 : vector<8x512xf32>
    %c0_6 = arith.constant 0 : index
    %c0_7 = arith.constant 0 : index
    %8 = vector.load %arg6[%c0_6, %c0_7] : memref<8x512xf32, #tpu.memory_space<vmem>>, vector<8x512xf32>
    tpu.vector_store %arg6[%c0_6, %c0_7], %7 {strides = array<i32>} : memref<8x512xf32, #tpu.memory_space<vmem>>, vector<8x512xf32>,
    %c0_i32_8 = arith.constant 0 : i32
    %9 = arith.cmpi eq, %arg1, %c0_i32_8 : i32
    %10 = arith.extui %9 : i1 to i32
    %c0_i32_9 = arith.constant 0 : i32
    %11 = arith.cmpi ne, %10, %c0_i32_9 : i32
    scf.if %11 {
      %c0_10 = arith.constant 0 : index
      %c0_11 = arith.constant 0 : index
      %12 = vector.load %arg6[%c0_10, %c0_11] : memref<8x512xf32, #tpu.memory_space<vmem>>, vector<8x512xf32>
      %c0_12 = arith.constant 0 : index
      %c0_13 = arith.constant 0 : index
      %13 = vector.load %arg4[%c0_12, %c0_13] : memref<8x1xf32, #tpu.memory_space<vmem>>, vector<8x1xf32>
      %14 = vector.broadcast %13 : vector<8x1xf32> to vector<8x512xf32>
      %15 = arith.addf %12, %14 : vector<8x512xf32>
      %cst_14 = arith.constant 0.000000e+00 : f32
      %16 = vector.broadcast %cst_14 : f32 to vector<8x512xf32>
      %17 = arith.cmpf oge, %15, %16 : vector<8x512xf32>
      %cst_15 = arith.constant 2.000000e-01 : f32
      %18 = vector.broadcast %cst_15 : f32 to vector<8x512xf32>
      %19 = arith.mulf %18, %15 : vector<8x512xf32>
      %20 = arith.select %17, %15, %19 : vector<8x512xi1>, vector<8x512xf32>
      %21 = arith.truncf %20 : vector<8x512xf32> to vector<8x512xbf16>
      %c0_16 = arith.constant 0 : index
      %c0_17 = arith.constant 0 : index
      %22 = vector.load %arg5[%c0_16, %c0_17] : memref<8x512xbf16, #tpu.memory_space<vmem>>, vector<8x512xbf16>
      tpu.vector_store %arg5[%c0_16, %c0_17], %21 {strides = array<i32>} : memref<8x512xbf16, #tpu.memory_space<vmem>>, vector<8x512xbf16>,
    } else {
    }
    return
  }
  func.func @transform_0(%arg0: i32, %arg1: i32) -> (i32, i32) {
    %c0_i32 = arith.constant 0 : i32
    return %arg1, %arg0 : i32, i32
  }
  func.func @transform_1(%arg0: i32, %arg1: i32) -> (i32, i32) {
    %c0_i32 = arith.constant 0 : i32
    %c0_i32_0 = arith.constant 0 : i32
    %c0_i32_1 = arith.constant 0 : i32
    return %c0_i32, %c0_i32_0 : i32, i32
  }
  func.func @transform_2(%arg0: i32, %arg1: i32) -> (i32, i32) {
    %c0_i32 = arith.constant 0 : i32
    %c0_i32_0 = arith.constant 0 : i32
    %c0_i32_1 = arith.constant 0 : i32
    return %c0_i32, %c0_i32_0 : i32, i32
  }
  func.func @transform_3(%arg0: i32, %arg1: i32) -> (i32, i32) {
    %c0_i32 = arith.constant 0 : i32
    %c0_i32_0 = arith.constant 0 : i32
    return %c0_i32, %arg0 : i32, i32
  }
}

module attributes {stable_mosaic.version = 11 : i64} {
  func.func @_conv_stats_kernel(%arg0: i32, %arg1: i32, %arg2: memref<128x128xbf16, #tpu.memory_space<vmem>>, %arg3: memref<16x128xbf16, #tpu.memory_space<vmem>>, %arg4: memref<16x128xf32, #tpu.memory_space<vmem>>, %arg5: memref<16x128xf32, #tpu.memory_space<vmem>>, %arg6: memref<16x128xf32, #tpu.memory_space<vmem>>, %arg7: memref<16x128xf32, #tpu.memory_space<vmem>>) attributes {dimension_semantics = [#tpu.dimension_semantics<parallel>, #tpu.dimension_semantics<arbitrary>], iteration_bounds = array<i64: 1, 1>, scalar_prefetch = 0 : i64, scratch_operands = 1 : i64, tpu.core_type = #tpu.core_type<tc>, window_params = [{transform_indices = @transform_0, window_bounds = array<i64: 128, 128>}, {pipeline_mode = #tpu.pipeline_mode<synchronous>, transform_indices = @transform_1, window_bounds = array<i64: 16, 128>}, {transform_indices = @transform_2, window_bounds = array<i64: 16, 128>}, {transform_indices = @transform_3, window_bounds = array<i64: 16, 128>}, {transform_indices = @transform_4, window_bounds = array<i64: 16, 128>}]} {
    %c0_i32 = arith.constant 0 : i32
    %0 = arith.cmpi eq, %arg1, %c0_i32 : i32
    %1 = arith.extui %0 : i1 to i32
    %c0_i32_0 = arith.constant 0 : i32
    %2 = arith.cmpi ne, %1, %c0_i32_0 : i32
    scf.if %2 {
      %cst_10 = arith.constant 0.000000e+00 : f32
      %12 = vector.broadcast %cst_10 : f32 to vector<16x128xf32>
      %c0_11 = arith.constant 0 : index
      %c0_12 = arith.constant 0 : index
      %13 = vector.load %arg7[%c0_11, %c0_12] : memref<16x128xf32, #tpu.memory_space<vmem>>, vector<16x128xf32>
      tpu.vector_store %arg7[%c0_11, %c0_12], %12 {strides = array<i32>} : memref<16x128xf32, #tpu.memory_space<vmem>>, vector<16x128xf32>,
    } else {
    }
    %c0 = arith.constant 0 : index
    %c0_1 = arith.constant 0 : index
    %3 = vector.load %arg7[%c0, %c0_1] : memref<16x128xf32, #tpu.memory_space<vmem>>, vector<16x128xf32>
    %c0_2 = arith.constant 0 : index
    %c0_3 = arith.constant 0 : index
    %4 = vector.load %arg3[%c0_2, %c0_3] : memref<16x128xbf16, #tpu.memory_space<vmem>>, vector<16x128xbf16>
    %c0_4 = arith.constant 0 : index
    %c0_5 = arith.constant 0 : index
    %5 = vector.load %arg2[%c0_4, %c0_5] : memref<128x128xbf16, #tpu.memory_space<vmem>>, vector<128x128xbf16>
    %cst = arith.constant dense<0.000000e+00> : vector<16x128xf32>
    %6 = tpu.matmul %4, %5, %cst {dimension_numbers = #tpu.dot_dimension_numbers<[1], [0], [0], [1], [0, 0, 1, 1], [], []>} : vector<16x128xbf16>, vector<128x128xbf16>, vector<16x128xf32> -> vector<16x128xf32>
    %7 = arith.addf %3, %6 : vector<16x128xf32>
    %c0_6 = arith.constant 0 : index
    %c0_7 = arith.constant 0 : index
    %8 = vector.load %arg7[%c0_6, %c0_7] : memref<16x128xf32, #tpu.memory_space<vmem>>, vector<16x128xf32>
    tpu.vector_store %arg7[%c0_6, %c0_7], %7 {strides = array<i32>} : memref<16x128xf32, #tpu.memory_space<vmem>>, vector<16x128xf32>,
    %c0_i32_8 = arith.constant 0 : i32
    %9 = arith.cmpi eq, %arg1, %c0_i32_8 : i32
    %10 = arith.extui %9 : i1 to i32
    %c0_i32_9 = arith.constant 0 : i32
    %11 = arith.cmpi ne, %10, %c0_i32_9 : i32
    scf.if %11 {
      %c0_10 = arith.constant 0 : index
      %c0_11 = arith.constant 0 : index
      %12 = vector.load %arg7[%c0_10, %c0_11] : memref<16x128xf32, #tpu.memory_space<vmem>>, vector<16x128xf32>
      %c0_12 = arith.constant 0 : index
      %c0_13 = arith.constant 0 : index
      %13 = vector.load %arg4[%c0_12, %c0_13] : memref<16x128xf32, #tpu.memory_space<vmem>>, vector<16x128xf32>
      tpu.vector_store %arg4[%c0_12, %c0_13], %12 {strides = array<i32>} : memref<16x128xf32, #tpu.memory_space<vmem>>, vector<16x128xf32>,
      %cst_14 = arith.constant dense<0.000000e+00> : vector<16xf32>
      %14 = vector.multi_reduction <add>, %12, %cst_14 [1] : vector<16x128xf32> to vector<16xf32>
      %15 = vector.shape_cast %14 : vector<16xf32> to vector<16x1xf32>
      %16 = arith.mulf %12, %12 : vector<16x128xf32>
      %cst_15 = arith.constant dense<0.000000e+00> : vector<16xf32>
      %17 = vector.multi_reduction <add>, %16, %cst_15 [1] : vector<16x128xf32> to vector<16xf32>
      %18 = vector.shape_cast %17 : vector<16xf32> to vector<16x1xf32>
      %19 = vector.shape_cast %15 : vector<16x1xf32> to vector<16x1xf32>
      %20 = vector.broadcast %19 : vector<16x1xf32> to vector<16x128xf32>
      %c0_16 = arith.constant 0 : index
      %c0_17 = arith.constant 0 : index
      %21 = vector.load %arg5[%c0_16, %c0_17] : memref<16x128xf32, #tpu.memory_space<vmem>>, vector<16x128xf32>
      tpu.vector_store %arg5[%c0_16, %c0_17], %20 {strides = array<i32>} : memref<16x128xf32, #tpu.memory_space<vmem>>, vector<16x128xf32>,
      %22 = vector.shape_cast %18 : vector<16x1xf32> to vector<16x1xf32>
      %23 = vector.broadcast %22 : vector<16x1xf32> to vector<16x128xf32>
      %c0_18 = arith.constant 0 : index
      %c0_19 = arith.constant 0 : index
      %24 = vector.load %arg6[%c0_18, %c0_19] : memref<16x128xf32, #tpu.memory_space<vmem>>, vector<16x128xf32>
      tpu.vector_store %arg6[%c0_18, %c0_19], %23 {strides = array<i32>} : memref<16x128xf32, #tpu.memory_space<vmem>>, vector<16x128xf32>,
    } else {
    }
    return
  }
  func.func @transform_0(%arg0: i32, %arg1: i32) -> (i32, i32) {
    %c0_i32 = arith.constant 0 : i32
    return %arg1, %arg0 : i32, i32
  }
  func.func @transform_1(%arg0: i32, %arg1: i32) -> (i32, i32) {
    %c0_i32 = arith.constant 0 : i32
    %c0_i32_0 = arith.constant 0 : i32
    %c0_i32_1 = arith.constant 0 : i32
    return %c0_i32, %c0_i32_0 : i32, i32
  }
  func.func @transform_2(%arg0: i32, %arg1: i32) -> (i32, i32) {
    %c0_i32 = arith.constant 0 : i32
    %c0_i32_0 = arith.constant 0 : i32
    return %c0_i32, %arg0 : i32, i32
  }
  func.func @transform_3(%arg0: i32, %arg1: i32) -> (i32, i32) {
    %c0_i32 = arith.constant 0 : i32
    %c0_i32_0 = arith.constant 0 : i32
    return %c0_i32, %arg0 : i32, i32
  }
  func.func @transform_4(%arg0: i32, %arg1: i32) -> (i32, i32) {
    %c0_i32 = arith.constant 0 : i32
    %c0_i32_0 = arith.constant 0 : i32
    return %c0_i32, %arg0 : i32, i32
  }
}

module attributes {stable_mosaic.version = 11 : i64} {
  func.func @_bn_act_kernel(%arg0: i32, %arg1: memref<16x128xf32, #tpu.memory_space<vmem>>, %arg2: memref<16x1xf32, #tpu.memory_space<vmem>>, %arg3: memref<16x1xf32, #tpu.memory_space<vmem>>, %arg4: memref<16x128xbf16, #tpu.memory_space<vmem>>) attributes {dimension_semantics = [#tpu.dimension_semantics<parallel>], iteration_bounds = array<i64: 1>, scalar_prefetch = 0 : i64, scratch_operands = 0 : i64, tpu.core_type = #tpu.core_type<tc>, window_params = [{transform_indices = @transform_0, window_bounds = array<i64: 16, 128>}, {pipeline_mode = #tpu.pipeline_mode<synchronous>, transform_indices = @transform_1, window_bounds = array<i64: 16, 1>}, {pipeline_mode = #tpu.pipeline_mode<synchronous>, transform_indices = @transform_2, window_bounds = array<i64: 16, 1>}, {transform_indices = @transform_3, window_bounds = array<i64: 16, 128>}]} {
    %c0 = arith.constant 0 : index
    %c0_0 = arith.constant 0 : index
    %0 = vector.load %arg1[%c0, %c0_0] : memref<16x128xf32, #tpu.memory_space<vmem>>, vector<16x128xf32>
    %c0_1 = arith.constant 0 : index
    %c0_2 = arith.constant 0 : index
    %1 = vector.load %arg2[%c0_1, %c0_2] : memref<16x1xf32, #tpu.memory_space<vmem>>, vector<16x1xf32>
    %2 = vector.broadcast %1 : vector<16x1xf32> to vector<16x128xf32>
    %3 = arith.mulf %0, %2 : vector<16x128xf32>
    %c0_3 = arith.constant 0 : index
    %c0_4 = arith.constant 0 : index
    %4 = vector.load %arg3[%c0_3, %c0_4] : memref<16x1xf32, #tpu.memory_space<vmem>>, vector<16x1xf32>
    %5 = vector.broadcast %4 : vector<16x1xf32> to vector<16x128xf32>
    %6 = arith.addf %3, %5 : vector<16x128xf32>
    %cst = arith.constant 0.000000e+00 : f32
    %7 = vector.broadcast %cst : f32 to vector<16x128xf32>
    %8 = arith.cmpf oge, %6, %7 : vector<16x128xf32>
    %cst_5 = arith.constant 2.000000e-01 : f32
    %9 = vector.broadcast %cst_5 : f32 to vector<16x128xf32>
    %10 = arith.mulf %9, %6 : vector<16x128xf32>
    %11 = arith.select %8, %6, %10 : vector<16x128xi1>, vector<16x128xf32>
    %12 = arith.truncf %11 : vector<16x128xf32> to vector<16x128xbf16>
    %c0_6 = arith.constant 0 : index
    %c0_7 = arith.constant 0 : index
    %13 = vector.load %arg4[%c0_6, %c0_7] : memref<16x128xbf16, #tpu.memory_space<vmem>>, vector<16x128xbf16>
    tpu.vector_store %arg4[%c0_6, %c0_7], %12 {strides = array<i32>} : memref<16x128xbf16, #tpu.memory_space<vmem>>, vector<16x128xbf16>,
    return
  }
  func.func @transform_0(%arg0: i32) -> (i32, i32) {
    %c0_i32 = arith.constant 0 : i32
    %c0_i32_0 = arith.constant 0 : i32
    return %c0_i32, %arg0 : i32, i32
  }
  func.func @transform_1(%arg0: i32) -> (i32, i32) {
    %c0_i32 = arith.constant 0 : i32
    %c0_i32_0 = arith.constant 0 : i32
    %c0_i32_1 = arith.constant 0 : i32
    return %c0_i32, %c0_i32_0 : i32, i32
  }
  func.func @transform_2(%arg0: i32) -> (i32, i32) {
    %c0_i32 = arith.constant 0 : i32
    %c0_i32_0 = arith.constant 0 : i32
    %c0_i32_1 = arith.constant 0 : i32
    return %c0_i32, %c0_i32_0 : i32, i32
  }
  func.func @transform_3(%arg0: i32) -> (i32, i32) {
    %c0_i32 = arith.constant 0 : i32
    %c0_i32_0 = arith.constant 0 : i32
    return %c0_i32, %arg0 : i32, i32
  }
}

module attributes {stable_mosaic.version = 11 : i64} {
  func.func @_conv_stats_kernel(%arg0: i32, %arg1: i32, %arg2: memref<256x128xbf16, #tpu.memory_space<vmem>>, %arg3: memref<32x256xbf16, #tpu.memory_space<vmem>>, %arg4: memref<32x128xf32, #tpu.memory_space<vmem>>, %arg5: memref<32x128xf32, #tpu.memory_space<vmem>>, %arg6: memref<32x128xf32, #tpu.memory_space<vmem>>, %arg7: memref<32x128xf32, #tpu.memory_space<vmem>>) attributes {dimension_semantics = [#tpu.dimension_semantics<parallel>, #tpu.dimension_semantics<arbitrary>], iteration_bounds = array<i64: 1, 1>, scalar_prefetch = 0 : i64, scratch_operands = 1 : i64, tpu.core_type = #tpu.core_type<tc>, window_params = [{transform_indices = @transform_0, window_bounds = array<i64: 256, 128>}, {pipeline_mode = #tpu.pipeline_mode<synchronous>, transform_indices = @transform_1, window_bounds = array<i64: 32, 256>}, {transform_indices = @transform_2, window_bounds = array<i64: 32, 128>}, {transform_indices = @transform_3, window_bounds = array<i64: 32, 128>}, {transform_indices = @transform_4, window_bounds = array<i64: 32, 128>}]} {
    %c0_i32 = arith.constant 0 : i32
    %0 = arith.cmpi eq, %arg1, %c0_i32 : i32
    %1 = arith.extui %0 : i1 to i32
    %c0_i32_0 = arith.constant 0 : i32
    %2 = arith.cmpi ne, %1, %c0_i32_0 : i32
    scf.if %2 {
      %cst_10 = arith.constant 0.000000e+00 : f32
      %12 = vector.broadcast %cst_10 : f32 to vector<32x128xf32>
      %c0_11 = arith.constant 0 : index
      %c0_12 = arith.constant 0 : index
      %13 = vector.load %arg7[%c0_11, %c0_12] : memref<32x128xf32, #tpu.memory_space<vmem>>, vector<32x128xf32>
      tpu.vector_store %arg7[%c0_11, %c0_12], %12 {strides = array<i32>} : memref<32x128xf32, #tpu.memory_space<vmem>>, vector<32x128xf32>,
    } else {
    }
    %c0 = arith.constant 0 : index
    %c0_1 = arith.constant 0 : index
    %3 = vector.load %arg7[%c0, %c0_1] : memref<32x128xf32, #tpu.memory_space<vmem>>, vector<32x128xf32>
    %c0_2 = arith.constant 0 : index
    %c0_3 = arith.constant 0 : index
    %4 = vector.load %arg3[%c0_2, %c0_3] : memref<32x256xbf16, #tpu.memory_space<vmem>>, vector<32x256xbf16>
    %c0_4 = arith.constant 0 : index
    %c0_5 = arith.constant 0 : index
    %5 = vector.load %arg2[%c0_4, %c0_5] : memref<256x128xbf16, #tpu.memory_space<vmem>>, vector<256x128xbf16>
    %cst = arith.constant dense<0.000000e+00> : vector<32x128xf32>
    %6 = tpu.matmul %4, %5, %cst {dimension_numbers = #tpu.dot_dimension_numbers<[1], [0], [0], [1], [0, 0, 1, 1], [], []>} : vector<32x256xbf16>, vector<256x128xbf16>, vector<32x128xf32> -> vector<32x128xf32>
    %7 = arith.addf %3, %6 : vector<32x128xf32>
    %c0_6 = arith.constant 0 : index
    %c0_7 = arith.constant 0 : index
    %8 = vector.load %arg7[%c0_6, %c0_7] : memref<32x128xf32, #tpu.memory_space<vmem>>, vector<32x128xf32>
    tpu.vector_store %arg7[%c0_6, %c0_7], %7 {strides = array<i32>} : memref<32x128xf32, #tpu.memory_space<vmem>>, vector<32x128xf32>,
    %c0_i32_8 = arith.constant 0 : i32
    %9 = arith.cmpi eq, %arg1, %c0_i32_8 : i32
    %10 = arith.extui %9 : i1 to i32
    %c0_i32_9 = arith.constant 0 : i32
    %11 = arith.cmpi ne, %10, %c0_i32_9 : i32
    scf.if %11 {
      %c0_10 = arith.constant 0 : index
      %c0_11 = arith.constant 0 : index
      %12 = vector.load %arg7[%c0_10, %c0_11] : memref<32x128xf32, #tpu.memory_space<vmem>>, vector<32x128xf32>
      %c0_12 = arith.constant 0 : index
      %c0_13 = arith.constant 0 : index
      %13 = vector.load %arg4[%c0_12, %c0_13] : memref<32x128xf32, #tpu.memory_space<vmem>>, vector<32x128xf32>
      tpu.vector_store %arg4[%c0_12, %c0_13], %12 {strides = array<i32>} : memref<32x128xf32, #tpu.memory_space<vmem>>, vector<32x128xf32>,
      %cst_14 = arith.constant dense<0.000000e+00> : vector<32xf32>
      %14 = vector.multi_reduction <add>, %12, %cst_14 [1] : vector<32x128xf32> to vector<32xf32>
      %15 = vector.shape_cast %14 : vector<32xf32> to vector<32x1xf32>
      %16 = arith.mulf %12, %12 : vector<32x128xf32>
      %cst_15 = arith.constant dense<0.000000e+00> : vector<32xf32>
      %17 = vector.multi_reduction <add>, %16, %cst_15 [1] : vector<32x128xf32> to vector<32xf32>
      %18 = vector.shape_cast %17 : vector<32xf32> to vector<32x1xf32>
      %19 = vector.shape_cast %15 : vector<32x1xf32> to vector<32x1xf32>
      %20 = vector.broadcast %19 : vector<32x1xf32> to vector<32x128xf32>
      %c0_16 = arith.constant 0 : index
      %c0_17 = arith.constant 0 : index
      %21 = vector.load %arg5[%c0_16, %c0_17] : memref<32x128xf32, #tpu.memory_space<vmem>>, vector<32x128xf32>
      tpu.vector_store %arg5[%c0_16, %c0_17], %20 {strides = array<i32>} : memref<32x128xf32, #tpu.memory_space<vmem>>, vector<32x128xf32>,
      %22 = vector.shape_cast %18 : vector<32x1xf32> to vector<32x1xf32>
      %23 = vector.broadcast %22 : vector<32x1xf32> to vector<32x128xf32>
      %c0_18 = arith.constant 0 : index
      %c0_19 = arith.constant 0 : index
      %24 = vector.load %arg6[%c0_18, %c0_19] : memref<32x128xf32, #tpu.memory_space<vmem>>, vector<32x128xf32>
      tpu.vector_store %arg6[%c0_18, %c0_19], %23 {strides = array<i32>} : memref<32x128xf32, #tpu.memory_space<vmem>>, vector<32x128xf32>,
    } else {
    }
    return
  }
  func.func @transform_0(%arg0: i32, %arg1: i32) -> (i32, i32) {
    %c0_i32 = arith.constant 0 : i32
    return %arg1, %arg0 : i32, i32
  }
  func.func @transform_1(%arg0: i32, %arg1: i32) -> (i32, i32) {
    %c0_i32 = arith.constant 0 : i32
    %c0_i32_0 = arith.constant 0 : i32
    %c0_i32_1 = arith.constant 0 : i32
    return %c0_i32, %c0_i32_0 : i32, i32
  }
  func.func @transform_2(%arg0: i32, %arg1: i32) -> (i32, i32) {
    %c0_i32 = arith.constant 0 : i32
    %c0_i32_0 = arith.constant 0 : i32
    return %c0_i32, %arg0 : i32, i32
  }
  func.func @transform_3(%arg0: i32, %arg1: i32) -> (i32, i32) {
    %c0_i32 = arith.constant 0 : i32
    %c0_i32_0 = arith.constant 0 : i32
    return %c0_i32, %arg0 : i32, i32
  }
  func.func @transform_4(%arg0: i32, %arg1: i32) -> (i32, i32) {
    %c0_i32 = arith.constant 0 : i32
    %c0_i32_0 = arith.constant 0 : i32
    return %c0_i32, %arg0 : i32, i32
  }
}

module attributes {stable_mosaic.version = 11 : i64} {
  func.func @_bn_act_kernel(%arg0: i32, %arg1: memref<32x128xf32, #tpu.memory_space<vmem>>, %arg2: memref<32x1xf32, #tpu.memory_space<vmem>>, %arg3: memref<32x1xf32, #tpu.memory_space<vmem>>, %arg4: memref<32x128xbf16, #tpu.memory_space<vmem>>) attributes {dimension_semantics = [#tpu.dimension_semantics<parallel>], iteration_bounds = array<i64: 1>, scalar_prefetch = 0 : i64, scratch_operands = 0 : i64, tpu.core_type = #tpu.core_type<tc>, window_params = [{transform_indices = @transform_0, window_bounds = array<i64: 32, 128>}, {pipeline_mode = #tpu.pipeline_mode<synchronous>, transform_indices = @transform_1, window_bounds = array<i64: 32, 1>}, {pipeline_mode = #tpu.pipeline_mode<synchronous>, transform_indices = @transform_2, window_bounds = array<i64: 32, 1>}, {transform_indices = @transform_3, window_bounds = array<i64: 32, 128>}]} {
    %c0 = arith.constant 0 : index
    %c0_0 = arith.constant 0 : index
    %0 = vector.load %arg1[%c0, %c0_0] : memref<32x128xf32, #tpu.memory_space<vmem>>, vector<32x128xf32>
    %c0_1 = arith.constant 0 : index
    %c0_2 = arith.constant 0 : index
    %1 = vector.load %arg2[%c0_1, %c0_2] : memref<32x1xf32, #tpu.memory_space<vmem>>, vector<32x1xf32>
    %2 = vector.broadcast %1 : vector<32x1xf32> to vector<32x128xf32>
    %3 = arith.mulf %0, %2 : vector<32x128xf32>
    %c0_3 = arith.constant 0 : index
    %c0_4 = arith.constant 0 : index
    %4 = vector.load %arg3[%c0_3, %c0_4] : memref<32x1xf32, #tpu.memory_space<vmem>>, vector<32x1xf32>
    %5 = vector.broadcast %4 : vector<32x1xf32> to vector<32x128xf32>
    %6 = arith.addf %3, %5 : vector<32x128xf32>
    %cst = arith.constant 0.000000e+00 : f32
    %7 = vector.broadcast %cst : f32 to vector<32x128xf32>
    %8 = arith.cmpf oge, %6, %7 : vector<32x128xf32>
    %cst_5 = arith.constant 2.000000e-01 : f32
    %9 = vector.broadcast %cst_5 : f32 to vector<32x128xf32>
    %10 = arith.mulf %9, %6 : vector<32x128xf32>
    %11 = arith.select %8, %6, %10 : vector<32x128xi1>, vector<32x128xf32>
    %12 = arith.truncf %11 : vector<32x128xf32> to vector<32x128xbf16>
    %c0_6 = arith.constant 0 : index
    %c0_7 = arith.constant 0 : index
    %13 = vector.load %arg4[%c0_6, %c0_7] : memref<32x128xbf16, #tpu.memory_space<vmem>>, vector<32x128xbf16>
    tpu.vector_store %arg4[%c0_6, %c0_7], %12 {strides = array<i32>} : memref<32x128xbf16, #tpu.memory_space<vmem>>, vector<32x128xbf16>,
    return
  }
  func.func @transform_0(%arg0: i32) -> (i32, i32) {
    %c0_i32 = arith.constant 0 : i32
    %c0_i32_0 = arith.constant 0 : i32
    return %c0_i32, %arg0 : i32, i32
  }
  func.func @transform_1(%arg0: i32) -> (i32, i32) {
    %c0_i32 = arith.constant 0 : i32
    %c0_i32_0 = arith.constant 0 : i32
    %c0_i32_1 = arith.constant 0 : i32
    return %c0_i32, %c0_i32_0 : i32, i32
  }
  func.func @transform_2(%arg0: i32) -> (i32, i32) {
    %c0_i32 = arith.constant 0 : i32
    %c0_i32_0 = arith.constant 0 : i32
    %c0_i32_1 = arith.constant 0 : i32
    return %c0_i32, %c0_i32_0 : i32, i32
  }
  func.func @transform_3(%arg0: i32) -> (i32, i32) {
    %c0_i32 = arith.constant 0 : i32
    %c0_i32_0 = arith.constant 0 : i32
    return %c0_i32, %arg0 : i32, i32
  }
}

module attributes {stable_mosaic.version = 11 : i64} {
  func.func @_conv_stats_kernel(%arg0: i32, %arg1: i32, %arg2: memref<512x128xbf16, #tpu.memory_space<vmem>>, %arg3: memref<64x512xbf16, #tpu.memory_space<vmem>>, %arg4: memref<64x128xf32, #tpu.memory_space<vmem>>, %arg5: memref<64x128xf32, #tpu.memory_space<vmem>>, %arg6: memref<64x128xf32, #tpu.memory_space<vmem>>, %arg7: memref<64x128xf32, #tpu.memory_space<vmem>>) attributes {dimension_semantics = [#tpu.dimension_semantics<parallel>, #tpu.dimension_semantics<arbitrary>], iteration_bounds = array<i64: 1, 1>, scalar_prefetch = 0 : i64, scratch_operands = 1 : i64, tpu.core_type = #tpu.core_type<tc>, window_params = [{transform_indices = @transform_0, window_bounds = array<i64: 512, 128>}, {pipeline_mode = #tpu.pipeline_mode<synchronous>, transform_indices = @transform_1, window_bounds = array<i64: 64, 512>}, {transform_indices = @transform_2, window_bounds = array<i64: 64, 128>}, {transform_indices = @transform_3, window_bounds = array<i64: 64, 128>}, {transform_indices = @transform_4, window_bounds = array<i64: 64, 128>}]} {
    %c0_i32 = arith.constant 0 : i32
    %0 = arith.cmpi eq, %arg1, %c0_i32 : i32
    %1 = arith.extui %0 : i1 to i32
    %c0_i32_0 = arith.constant 0 : i32
    %2 = arith.cmpi ne, %1, %c0_i32_0 : i32
    scf.if %2 {
      %cst_10 = arith.constant 0.000000e+00 : f32
      %12 = vector.broadcast %cst_10 : f32 to vector<64x128xf32>
      %c0_11 = arith.constant 0 : index
      %c0_12 = arith.constant 0 : index
      %13 = vector.load %arg7[%c0_11, %c0_12] : memref<64x128xf32, #tpu.memory_space<vmem>>, vector<64x128xf32>
      tpu.vector_store %arg7[%c0_11, %c0_12], %12 {strides = array<i32>} : memref<64x128xf32, #tpu.memory_space<vmem>>, vector<64x128xf32>,
    } else {
    }
    %c0 = arith.constant 0 : index
    %c0_1 = arith.constant 0 : index
    %3 = vector.load %arg7[%c0, %c0_1] : memref<64x128xf32, #tpu.memory_space<vmem>>, vector<64x128xf32>
    %c0_2 = arith.constant 0 : index
    %c0_3 = arith.constant 0 : index
    %4 = vector.load %arg3[%c0_2, %c0_3] : memref<64x512xbf16, #tpu.memory_space<vmem>>, vector<64x512xbf16>
    %c0_4 = arith.constant 0 : index
    %c0_5 = arith.constant 0 : index
    %5 = vector.load %arg2[%c0_4, %c0_5] : memref<512x128xbf16, #tpu.memory_space<vmem>>, vector<512x128xbf16>
    %cst = arith.constant dense<0.000000e+00> : vector<64x128xf32>
    %6 = tpu.matmul %4, %5, %cst {dimension_numbers = #tpu.dot_dimension_numbers<[1], [0], [0], [1], [0, 0, 1, 1], [], []>} : vector<64x512xbf16>, vector<512x128xbf16>, vector<64x128xf32> -> vector<64x128xf32>
    %7 = arith.addf %3, %6 : vector<64x128xf32>
    %c0_6 = arith.constant 0 : index
    %c0_7 = arith.constant 0 : index
    %8 = vector.load %arg7[%c0_6, %c0_7] : memref<64x128xf32, #tpu.memory_space<vmem>>, vector<64x128xf32>
    tpu.vector_store %arg7[%c0_6, %c0_7], %7 {strides = array<i32>} : memref<64x128xf32, #tpu.memory_space<vmem>>, vector<64x128xf32>,
    %c0_i32_8 = arith.constant 0 : i32
    %9 = arith.cmpi eq, %arg1, %c0_i32_8 : i32
    %10 = arith.extui %9 : i1 to i32
    %c0_i32_9 = arith.constant 0 : i32
    %11 = arith.cmpi ne, %10, %c0_i32_9 : i32
    scf.if %11 {
      %c0_10 = arith.constant 0 : index
      %c0_11 = arith.constant 0 : index
      %12 = vector.load %arg7[%c0_10, %c0_11] : memref<64x128xf32, #tpu.memory_space<vmem>>, vector<64x128xf32>
      %c0_12 = arith.constant 0 : index
      %c0_13 = arith.constant 0 : index
      %13 = vector.load %arg4[%c0_12, %c0_13] : memref<64x128xf32, #tpu.memory_space<vmem>>, vector<64x128xf32>
      tpu.vector_store %arg4[%c0_12, %c0_13], %12 {strides = array<i32>} : memref<64x128xf32, #tpu.memory_space<vmem>>, vector<64x128xf32>,
      %cst_14 = arith.constant dense<0.000000e+00> : vector<64xf32>
      %14 = vector.multi_reduction <add>, %12, %cst_14 [1] : vector<64x128xf32> to vector<64xf32>
      %15 = vector.shape_cast %14 : vector<64xf32> to vector<64x1xf32>
      %16 = arith.mulf %12, %12 : vector<64x128xf32>
      %cst_15 = arith.constant dense<0.000000e+00> : vector<64xf32>
      %17 = vector.multi_reduction <add>, %16, %cst_15 [1] : vector<64x128xf32> to vector<64xf32>
      %18 = vector.shape_cast %17 : vector<64xf32> to vector<64x1xf32>
      %19 = vector.shape_cast %15 : vector<64x1xf32> to vector<64x1xf32>
      %20 = vector.broadcast %19 : vector<64x1xf32> to vector<64x128xf32>
      %c0_16 = arith.constant 0 : index
      %c0_17 = arith.constant 0 : index
      %21 = vector.load %arg5[%c0_16, %c0_17] : memref<64x128xf32, #tpu.memory_space<vmem>>, vector<64x128xf32>
      tpu.vector_store %arg5[%c0_16, %c0_17], %20 {strides = array<i32>} : memref<64x128xf32, #tpu.memory_space<vmem>>, vector<64x128xf32>,
      %22 = vector.shape_cast %18 : vector<64x1xf32> to vector<64x1xf32>
      %23 = vector.broadcast %22 : vector<64x1xf32> to vector<64x128xf32>
      %c0_18 = arith.constant 0 : index
      %c0_19 = arith.constant 0 : index
      %24 = vector.load %arg6[%c0_18, %c0_19] : memref<64x128xf32, #tpu.memory_space<vmem>>, vector<64x128xf32>
      tpu.vector_store %arg6[%c0_18, %c0_19], %23 {strides = array<i32>} : memref<64x128xf32, #tpu.memory_space<vmem>>, vector<64x128xf32>,
    } else {
    }
    return
  }
  func.func @transform_0(%arg0: i32, %arg1: i32) -> (i32, i32) {
    %c0_i32 = arith.constant 0 : i32
    return %arg1, %arg0 : i32, i32
  }
  func.func @transform_1(%arg0: i32, %arg1: i32) -> (i32, i32) {
    %c0_i32 = arith.constant 0 : i32
    %c0_i32_0 = arith.constant 0 : i32
    %c0_i32_1 = arith.constant 0 : i32
    return %c0_i32, %c0_i32_0 : i32, i32
  }
  func.func @transform_2(%arg0: i32, %arg1: i32) -> (i32, i32) {
    %c0_i32 = arith.constant 0 : i32
    %c0_i32_0 = arith.constant 0 : i32
    return %c0_i32, %arg0 : i32, i32
  }
  func.func @transform_3(%arg0: i32, %arg1: i32) -> (i32, i32) {
    %c0_i32 = arith.constant 0 : i32
    %c0_i32_0 = arith.constant 0 : i32
    return %c0_i32, %arg0 : i32, i32
  }
  func.func @transform_4(%arg0: i32, %arg1: i32) -> (i32, i32) {
    %c0_i32 = arith.constant 0 : i32
    %c0_i32_0 = arith.constant 0 : i32
    return %c0_i32, %arg0 : i32, i32
  }
}

module attributes {stable_mosaic.version = 11 : i64} {
  func.func @_bn_act_kernel(%arg0: i32, %arg1: memref<64x128xf32, #tpu.memory_space<vmem>>, %arg2: memref<64x1xf32, #tpu.memory_space<vmem>>, %arg3: memref<64x1xf32, #tpu.memory_space<vmem>>, %arg4: memref<64x128xbf16, #tpu.memory_space<vmem>>) attributes {dimension_semantics = [#tpu.dimension_semantics<parallel>], iteration_bounds = array<i64: 1>, scalar_prefetch = 0 : i64, scratch_operands = 0 : i64, tpu.core_type = #tpu.core_type<tc>, window_params = [{transform_indices = @transform_0, window_bounds = array<i64: 64, 128>}, {pipeline_mode = #tpu.pipeline_mode<synchronous>, transform_indices = @transform_1, window_bounds = array<i64: 64, 1>}, {pipeline_mode = #tpu.pipeline_mode<synchronous>, transform_indices = @transform_2, window_bounds = array<i64: 64, 1>}, {transform_indices = @transform_3, window_bounds = array<i64: 64, 128>}]} {
    %c0 = arith.constant 0 : index
    %c0_0 = arith.constant 0 : index
    %0 = vector.load %arg1[%c0, %c0_0] : memref<64x128xf32, #tpu.memory_space<vmem>>, vector<64x128xf32>
    %c0_1 = arith.constant 0 : index
    %c0_2 = arith.constant 0 : index
    %1 = vector.load %arg2[%c0_1, %c0_2] : memref<64x1xf32, #tpu.memory_space<vmem>>, vector<64x1xf32>
    %2 = vector.broadcast %1 : vector<64x1xf32> to vector<64x128xf32>
    %3 = arith.mulf %0, %2 : vector<64x128xf32>
    %c0_3 = arith.constant 0 : index
    %c0_4 = arith.constant 0 : index
    %4 = vector.load %arg3[%c0_3, %c0_4] : memref<64x1xf32, #tpu.memory_space<vmem>>, vector<64x1xf32>
    %5 = vector.broadcast %4 : vector<64x1xf32> to vector<64x128xf32>
    %6 = arith.addf %3, %5 : vector<64x128xf32>
    %cst = arith.constant 0.000000e+00 : f32
    %7 = vector.broadcast %cst : f32 to vector<64x128xf32>
    %8 = arith.cmpf oge, %6, %7 : vector<64x128xf32>
    %cst_5 = arith.constant 2.000000e-01 : f32
    %9 = vector.broadcast %cst_5 : f32 to vector<64x128xf32>
    %10 = arith.mulf %9, %6 : vector<64x128xf32>
    %11 = arith.select %8, %6, %10 : vector<64x128xi1>, vector<64x128xf32>
    %12 = arith.truncf %11 : vector<64x128xf32> to vector<64x128xbf16>
    %c0_6 = arith.constant 0 : index
    %c0_7 = arith.constant 0 : index
    %13 = vector.load %arg4[%c0_6, %c0_7] : memref<64x128xbf16, #tpu.memory_space<vmem>>, vector<64x128xbf16>
    tpu.vector_store %arg4[%c0_6, %c0_7], %12 {strides = array<i32>} : memref<64x128xbf16, #tpu.memory_space<vmem>>, vector<64x128xbf16>,
    return
  }
  func.func @transform_0(%arg0: i32) -> (i32, i32) {
    %c0_i32 = arith.constant 0 : i32
    %c0_i32_0 = arith.constant 0 : i32
    return %c0_i32, %arg0 : i32, i32
  }
  func.func @transform_1(%arg0: i32) -> (i32, i32) {
    %c0_i32 = arith.constant 0 : i32
    %c0_i32_0 = arith.constant 0 : i32
    %c0_i32_1 = arith.constant 0 : i32
    return %c0_i32, %c0_i32_0 : i32, i32
  }
  func.func @transform_2(%arg0: i32) -> (i32, i32) {
    %c0_i32 = arith.constant 0 : i32
    %c0_i32_0 = arith.constant 0 : i32
    %c0_i32_1 = arith.constant 0 : i32
    return %c0_i32, %c0_i32_0 : i32, i32
  }
  func.func @transform_3(%arg0: i32) -> (i32, i32) {
    %c0_i32 = arith.constant 0 : i32
    %c0_i32_0 = arith.constant 0 : i32
    return %c0_i32, %arg0 : i32, i32
  }
}

module attributes {stable_mosaic.version = 11 : i64} {
  func.func @_conv_bias_act_kernel(%arg0: i32, %arg1: i32, %arg2: memref<1024x128xbf16, #tpu.memory_space<vmem>>, %arg3: memref<8x1024xbf16, #tpu.memory_space<vmem>>, %arg4: memref<8x1xf32, #tpu.memory_space<vmem>>, %arg5: memref<8x128xf32, #tpu.memory_space<vmem>>, %arg6: memref<8x128xf32, #tpu.memory_space<vmem>>) attributes {dimension_semantics = [#tpu.dimension_semantics<parallel>, #tpu.dimension_semantics<arbitrary>], iteration_bounds = array<i64: 1, 1>, scalar_prefetch = 0 : i64, scratch_operands = 1 : i64, tpu.core_type = #tpu.core_type<tc>, window_params = [{transform_indices = @transform_0, window_bounds = array<i64: 1024, 128>}, {pipeline_mode = #tpu.pipeline_mode<synchronous>, transform_indices = @transform_1, window_bounds = array<i64: 8, 1024>}, {pipeline_mode = #tpu.pipeline_mode<synchronous>, transform_indices = @transform_2, window_bounds = array<i64: 8, 1>}, {transform_indices = @transform_3, window_bounds = array<i64: 8, 128>}]} {
    %c0_i32 = arith.constant 0 : i32
    %0 = arith.cmpi eq, %arg1, %c0_i32 : i32
    %1 = arith.extui %0 : i1 to i32
    %c0_i32_0 = arith.constant 0 : i32
    %2 = arith.cmpi ne, %1, %c0_i32_0 : i32
    scf.if %2 {
      %cst_10 = arith.constant 0.000000e+00 : f32
      %12 = vector.broadcast %cst_10 : f32 to vector<8x128xf32>
      %c0_11 = arith.constant 0 : index
      %c0_12 = arith.constant 0 : index
      %13 = vector.load %arg6[%c0_11, %c0_12] : memref<8x128xf32, #tpu.memory_space<vmem>>, vector<8x128xf32>
      tpu.vector_store %arg6[%c0_11, %c0_12], %12 {strides = array<i32>} : memref<8x128xf32, #tpu.memory_space<vmem>>, vector<8x128xf32>,
    } else {
    }
    %c0 = arith.constant 0 : index
    %c0_1 = arith.constant 0 : index
    %3 = vector.load %arg6[%c0, %c0_1] : memref<8x128xf32, #tpu.memory_space<vmem>>, vector<8x128xf32>
    %c0_2 = arith.constant 0 : index
    %c0_3 = arith.constant 0 : index
    %4 = vector.load %arg3[%c0_2, %c0_3] : memref<8x1024xbf16, #tpu.memory_space<vmem>>, vector<8x1024xbf16>
    %c0_4 = arith.constant 0 : index
    %c0_5 = arith.constant 0 : index
    %5 = vector.load %arg2[%c0_4, %c0_5] : memref<1024x128xbf16, #tpu.memory_space<vmem>>, vector<1024x128xbf16>
    %cst = arith.constant dense<0.000000e+00> : vector<8x128xf32>
    %6 = tpu.matmul %4, %5, %cst {dimension_numbers = #tpu.dot_dimension_numbers<[1], [0], [0], [1], [0, 0, 1, 1], [], []>} : vector<8x1024xbf16>, vector<1024x128xbf16>, vector<8x128xf32> -> vector<8x128xf32>
    %7 = arith.addf %3, %6 : vector<8x128xf32>
    %c0_6 = arith.constant 0 : index
    %c0_7 = arith.constant 0 : index
    %8 = vector.load %arg6[%c0_6, %c0_7] : memref<8x128xf32, #tpu.memory_space<vmem>>, vector<8x128xf32>
    tpu.vector_store %arg6[%c0_6, %c0_7], %7 {strides = array<i32>} : memref<8x128xf32, #tpu.memory_space<vmem>>, vector<8x128xf32>,
    %c0_i32_8 = arith.constant 0 : i32
    %9 = arith.cmpi eq, %arg1, %c0_i32_8 : i32
    %10 = arith.extui %9 : i1 to i32
    %c0_i32_9 = arith.constant 0 : i32
    %11 = arith.cmpi ne, %10, %c0_i32_9 : i32
    scf.if %11 {
      %c0_10 = arith.constant 0 : index
      %c0_11 = arith.constant 0 : index
      %12 = vector.load %arg6[%c0_10, %c0_11] : memref<8x128xf32, #tpu.memory_space<vmem>>, vector<8x128xf32>
      %c0_12 = arith.constant 0 : index
      %c0_13 = arith.constant 0 : index
      %13 = vector.load %arg4[%c0_12, %c0_13] : memref<8x1xf32, #tpu.memory_space<vmem>>, vector<8x1xf32>
      %14 = vector.broadcast %13 : vector<8x1xf32> to vector<8x128xf32>
      %15 = arith.addf %12, %14 : vector<8x128xf32>
      %c0_14 = arith.constant 0 : index
      %c0_15 = arith.constant 0 : index
      %16 = vector.load %arg5[%c0_14, %c0_15] : memref<8x128xf32, #tpu.memory_space<vmem>>, vector<8x128xf32>
      tpu.vector_store %arg5[%c0_14, %c0_15], %15 {strides = array<i32>} : memref<8x128xf32, #tpu.memory_space<vmem>>, vector<8x128xf32>,
    } else {
    }
    return
  }
  func.func @transform_0(%arg0: i32, %arg1: i32) -> (i32, i32) {
    %c0_i32 = arith.constant 0 : i32
    return %arg1, %arg0 : i32, i32
  }
  func.func @transform_1(%arg0: i32, %arg1: i32) -> (i32, i32) {
    %c0_i32 = arith.constant 0 : i32
    %c0_i32_0 = arith.constant 0 : i32
    %c0_i32_1 = arith.constant 0 : i32
    return %c0_i32, %c0_i32_0 : i32, i32
  }
  func.func @transform_2(%arg0: i32, %arg1: i32) -> (i32, i32) {
    %c0_i32 = arith.constant 0 : i32
    %c0_i32_0 = arith.constant 0 : i32
    %c0_i32_1 = arith.constant 0 : i32
    return %c0_i32, %c0_i32_0 : i32, i32
  }
  func.func @transform_3(%arg0: i32, %arg1: i32) -> (i32, i32) {
    %c0_i32 = arith.constant 0 : i32
    %c0_i32_0 = arith.constant 0 : i32
    return %c0_i32, %arg0 : i32, i32
  }
}

</mosaic_0001>

<llo_original>
// kernel: tpu_custom_call.1
$region0: #{tpu_custom_call.1}
  #allocation0 [shape = 'u32[]', space=smem, size = 0x4, offset = 0x4, fixed_abs, tag = 'smem constant byte address 0x4 - core index']
  #allocation1 [shape = 'u32[144,128]{1,0:T(1,128)}', space=vmem, size = 0x12000, scoped, tag = 'internal scratch']
  %s0 = inlined_call_operand.hbm [shape: f32[8,256], index: 0, kind: input, shape index: {}]
  %s1 = inlined_call_operand.hbm [shape: f32[8,128], index: 1, kind: input, shape index: {}]
  %s2 = inlined_call_operand.hbm [shape: f32[8,256], index: 2, kind: output, shape index: {}]
  %s3 = sld [smem:[#allocation0]]
  $region49: #{tpu_custom_call.1} parent=0
    _
  %s5 = ssub.s32 1, %s3
  %s6 = scalar_select 0, %s5, %s3
  $region1: #{tpu_custom_call.1} parent=0
    #allocation2 [shape = 'u8[8192]{0}', space=vmem, size = 0x2000, scoped, tag = 'input window, operand 0']
    #allocation3 [shape = 's32[2]{0}', space=sflag, size = 0x8, scoped, tag = 'scoped memory for tpu_custom_call.1']
    #allocation4 [shape = 's32[2]{0}', space=sflag, size = 0x8, scoped, tag = 'scoped memory for tpu_custom_call.1']
    #allocation5 [shape = 'u8[4096]{0}', space=vmem, size = 0x1000, scoped, tag = 'input window, operand 1, single buffered']
    #allocation6 [shape = 's32[1]{0}', space=sflag, size = 0x4, scoped, tag = 'scoped memory for tpu_custom_call.1']
    #allocation7 [shape = 'u8[8192]{0}', space=vmem, size = 0x2000, scoped, tag = 'output window, operand 0']
    %7 = vsyncpa [#allocation3], 0
    %s8 = scalar_lea.sflag [#allocation3], 1
    %9 = vsyncpa %s8, 0
    %10 = vsyncpa [#allocation6], 0
    %11 = vsyncpa [#allocation4], 0
    %s12 = scalar_lea.sflag [#allocation4], 1
    %13 = vsyncpa %s12, 0
    loop: start=0, step=1, limit=4
    $region2: #{tpu_custom_call.1} parent=1 // loop_pre_header
      _
    $region3: #{tpu_custom_call.1} parent=1 // loop_header
      %s15 = sphi 0, %s19
      %p16 = scmp.ge.s32.totalorder %s15, 4
      %s25 = sphi 0, %s27
      %s28 = sphi 0, %s25
      %s29 = sphi 0, %s28
      %s45 = sphi 0, %s29
      %s49 = sphi 0, %s49
      %s51 = sphi 0, %s49
      %s52 = sphi 0, %s51
      %s66 = sphi 0, %s52
      %s72 = sphi 0, %s74
      %s75 = sphi 0, %s72
      %s76 = sphi 0, %s75
      %s92 = sphi 0, %s76
    $region4: #{tpu_custom_call.1} parent=1 // loop_header_branch
      %18 = sbr.rel (%p16) target = $region8
    $region5: #{tpu_custom_call.1} parent=1 // loop_body
      %s20 = ssub.s32 %s15, 1
      %s21 = ssub.s32 %s15, 2
      %s22 = sadd.s32 %s15, 1
      %s23 = ssub.s32 %s15, %s22
      %p24 = scmp.eq.s32.totalorder %s23, 0
      %s26 = sadd.s32 %s25, 1
      %s27 = scalar_select %p24, %s25, %s26
      %p30 = pneg %p24
      %p31 = scmp.eq.s32.totalorder %s15, 1
      %p32 = por %p30, %p31
      %p33 = scmp.ne.s32.totalorder %s25, %s28
      %p34 = scmp.eq.s32.totalorder %s15, 0
      %p35 = por %p33, %p34
      %p36 = scmp.ne.s32.totalorder %s25, %s28
      %p37 = scmp.eq.s32.totalorder %s20, 1
      %p38 = por %p36, %p37
      %p39 = scmp.ne.s32.totalorder %s28, %s29
      %p40 = scmp.eq.s32.totalorder %s20, 0
      %p41 = por %p39, %p40
      %p42 = scmp.ne.s32.totalorder %s28, %s29
      %p43 = scmp.eq.s32.totalorder %s21, 1
      %p44 = por %p42, %p43
      %p46 = scmp.ne.s32.totalorder %s29, %s45
      %p47 = scmp.eq.s32.totalorder %s21, 0
      %p48 = por %p46, %p47
      %s50 = sadd.s32 %s49, 1
      %p53 = scmp.eq.s32.totalorder %s15, 1
      %p54 = scmp.ne.s32.totalorder %s49, %s51
      %p55 = scmp.eq.s32.totalorder %s15, 0
      %p56 = por %p54, %p55
      %p57 = scmp.ne.s32.totalorder %s49, %s51
      %p58 = scmp.eq.s32.totalorder %s20, 1
      %p59 = por %p57, %p58
      %p60 = scmp.ne.s32.totalorder %s51, %s52
      %p61 = scmp.eq.s32.totalorder %s20, 0
      %p62 = por %p60, %p61
      %p63 = scmp.ne.s32.totalorder %s51, %s52
      %p64 = scmp.eq.s32.totalorder %s21, 1
      %p65 = por %p63, %p64
      %p67 = scmp.ne.s32.totalorder %s52, %s66
      %p68 = scmp.eq.s32.totalorder %s21, 0
      %p69 = por %p67, %p68
      %s70 = ssub.s32 %s15, %s22
      %p71 = scmp.eq.s32.totalorder %s70, 0
      %s73 = sadd.s32 %s72, 1
      %s74 = scalar_select %p71, %s72, %s73
      %p77 = pneg %p71
      %p78 = scmp.eq.s32.totalorder %s15, 1
      %p79 = por %p77, %p78
      %p80 = scmp.ne.s32.totalorder %s72, %s75
      %p81 = scmp.eq.s32.totalorder %s15, 0
      %p82 = por %p80, %p81
      %p83 = scmp.ne.s32.totalorder %s72, %s75
      %p84 = scmp.eq.s32.totalorder %s20, 1
      %p85 = por %p83, %p84
      %p86 = scmp.ne.s32.totalorder %s75, %s76
      %p87 = scmp.eq.s32.totalorder %s20, 0
      %p88 = por %p86, %p87
      %p89 = scmp.ne.s32.totalorder %s75, %s76
      %p90 = scmp.eq.s32.totalorder %s21, 1
      %p91 = por %p89, %p90
      %p93 = scmp.ne.s32.totalorder %s76, %s92
      %p94 = scmp.eq.s32.totalorder %s21, 0
      %p95 = por %p93, %p94
      %p96 = scmp.le.s32.totalorder 1, %s15
      %p97 = scmp.lt.s32.totalorder %s15, 3
      %p98 = pnand %p96, %p97
      %p99 = pneg %p98
      // Predicated region
      $region9: #{tpu_custom_call.1} parent=5 // pred_check
        _
      $region10: #{tpu_custom_call.1} parent=5 // pred_check_branch
        %101 = sbr.rel (%p98) target = $region12
      $region11: #{tpu_custom_call.1} parent=5 // pred_region
        %s102 = ssub.s32 %s15, 1
        // Predicated region
        $region13: #{tpu_custom_call.1} parent=11 // pred_check
          %p103 = pneg %p62
        $region14: #{tpu_custom_call.1} parent=11 // pred_check_branch
          %105 = sbr.rel (%p103) target = $region16
        $region15: #{tpu_custom_call.1} parent=11 // pred_region
          %s107 = ssub.s32 128, 128
          %108 = vsyncadd [#allocation6], %s107
          %s110 = sshll.u32 [#allocation5], 4
          %s111 = int_to_ptr.vmem [resolvable:$true] %s110
          %113 = dma.hbm_to_vmem [thread:$0]  %s1, 128, %s111, [#allocation6]
        $region16: #{tpu_custom_call.1} parent=11 // pred_fallthru
          _
      $region12: #{tpu_custom_call.1} parent=5 // pred_fallthru
        _
      %p114 = scmp.lt.s32.totalorder %s15, 2
      // Predicated region
      $region17: #{tpu_custom_call.1} parent=5 // pred_check
        %p115 = pneg %p114
      $region18: #{tpu_custom_call.1} parent=5 // pred_check_branch
        %117 = sbr.rel (%p115) target = $region20
      $region19: #{tpu_custom_call.1} parent=5 // pred_region
        // Predicated region
        $region21: #{tpu_custom_call.1} parent=19 // pred_check
          %p118 = pneg %p35
        $region22: #{tpu_custom_call.1} parent=19 // pred_check_branch
          %120 = sbr.rel (%p118) target = $region24
        $region23: #{tpu_custom_call.1} parent=19 // pred_region
          %s121 = sand.u32 %s25, 1
          %s122 = scalar_lea.sflag [#allocation3], %s121
          %s123 = sand.u32 %s25, 1
          %s124 = smul.addr %s123, 8
          %s125 = scalar_lea.vmem [#allocation2], %s124
          %s127 = ssub.s32 128, 128
          %128 = vsyncadd %s122, %s127
          %s129 = smul.addr %s15, 128
          %s130 = scalar_lea.hbm %s0, %s129
          %s132 = sshll.u32 %s125, 4
          %s133 = int_to_ptr.vmem [resolvable:$true] %s132
          %135 = dma.hbm_to_vmem [thread:$0]  %s130, 128, %s133, %s122
        $region24: #{tpu_custom_call.1} parent=19 // pred_fallthru
          _
      $region20: #{tpu_custom_call.1} parent=5 // pred_fallthru
        _
      %p136 = scmp.le.s32.totalorder 1, %s15
      %p137 = scmp.lt.s32.totalorder %s15, 3
      %p138 = pnand %p136, %p137
      %p139 = pneg %p138
      // Predicated region
      $region25: #{tpu_custom_call.1} parent=5 // pred_check
        _
      $region26: #{tpu_custom_call.1} parent=5 // pred_check_branch
        %141 = sbr.rel (%p138) target = $region28
      $region27: #{tpu_custom_call.1} parent=5 // pred_region
        %s142 = ssub.s32 %s15, 1
        %s143 = sand.u32 %s28, 1
        %s144 = scalar_lea.sflag [#allocation3], %s143
        %s145 = sand.u32 %s28, 1
        %s146 = smul.addr %s145, 8
        %s147 = scalar_lea.vmem [#allocation2], %s146
        // Predicated region
        $region29: #{tpu_custom_call.1} parent=27 // pred_check
          %p148 = pneg %p41
        $region30: #{tpu_custom_call.1} parent=27 // pred_check_branch
          %150 = sbr.rel (%p148) target = $region32
        $region31: #{tpu_custom_call.1} parent=27 // pred_region
          %151 = dma.done %s144, 128
        $region32: #{tpu_custom_call.1} parent=27 // pred_fallthru
          _
        // Predicated region
        $region33: #{tpu_custom_call.1} parent=27 // pred_check
          %p152 = pneg %p62
        $region34: #{tpu_custom_call.1} parent=27 // pred_check_branch
          %154 = sbr.rel (%p152) target = $region36
        $region35: #{tpu_custom_call.1} parent=27 // pred_region
          %155 = dma.done [#allocation6], 128
        $region36: #{tpu_custom_call.1} parent=27 // pred_fallthru
          _
        %s156 = sand.u32 %s28, 1
        %s157 = scalar_lea.sflag [#allocation3], %s156
        %s158 = sand.u32 %s28, 1
        %s159 = smul.addr %s158, 8
        %s160 = scalar_lea.vmem [#allocation2], %s159
        %p161 = pneg %p41
        %p162 = pneg %p38
        %p163 = pneg %p62
        %p164 = pneg %p59
        %p165 = pneg %p88
        %p166 = pneg %p85
        %s167 = sand.u32 %s75, 1
        %s168 = scalar_lea.sflag [#allocation4], %s167
        %s169 = sand.u32 %s75, 1
        %s170 = smul.addr %s169, 8
        %s171 = scalar_lea.vmem [#allocation7], %s170
        %v172 = vld [vmem:[%s147] sm:$0xff]
        %v173 = vld [vmem:[#allocation5] sm:$0xff]
        %v174 = vadd.f32 %v172, %v173
        %175 = vst [vmem:[%s171] sm:$0xff] %v174
        %s176 = sand.u32 %s75, 1
        %s177 = scalar_lea.sflag [#allocation4], %s176
        %s178 = sand.u32 %s75, 1
        %s179 = smul.addr %s178, 8
        %s180 = scalar_lea.vmem [#allocation7], %s179
        // Predicated region
        $region37: #{tpu_custom_call.1} parent=27 // pred_check
          %p181 = pneg %p85
        $region38: #{tpu_custom_call.1} parent=27 // pred_check_branch
          %183 = sbr.rel (%p181) target = $region40
        $region39: #{tpu_custom_call.1} parent=27 // pred_region
          %s185 = ssub.s32 128, 128
          %186 = vsyncadd %s177, %s185
          %s187 = smul.addr %s20, 128
          %s188 = scalar_lea.hbm %s2, %s187
          %s190 = sshll.u32 %s180, 4
          %s191 = int_to_ptr.vmem [resolvable:$true] %s190
          %193 = dma.vmem_to_hbm [thread:$0]  %s191, 128, %s188, %s177
        $region40: #{tpu_custom_call.1} parent=27 // pred_fallthru
          _
      $region28: #{tpu_custom_call.1} parent=5 // pred_fallthru
        _
      %p194 = scmp.le.s32.totalorder 2, %s15
      // Predicated region
      $region41: #{tpu_custom_call.1} parent=5 // pred_check
        %p195 = pneg %p194
      $region42: #{tpu_custom_call.1} parent=5 // pred_check_branch
        %197 = sbr.rel (%p195) target = $region44
      $region43: #{tpu_custom_call.1} parent=5 // pred_region
        %s198 = ssub.s32 %s15, 2
        // Predicated region
        $region45: #{tpu_custom_call.1} parent=43 // pred_check
          %p199 = pneg %p91
        $region46: #{tpu_custom_call.1} parent=43 // pred_check_branch
          %201 = sbr.rel (%p199) target = $region48
        $region47: #{tpu_custom_call.1} parent=43 // pred_region
          %s202 = sand.u32 %s76, 1
          %s203 = scalar_lea.sflag [#allocation4], %s202
          %s204 = sand.u32 %s76, 1
          %s205 = smul.addr %s204, 8
          %s206 = scalar_lea.vmem [#allocation7], %s205
          %207 = dma.done %s203, 128
        $region48: #{tpu_custom_call.1} parent=43 // pred_fallthru
          _
      $region44: #{tpu_custom_call.1} parent=5 // pred_fallthru
        _
    $region6: #{tpu_custom_call.1} parent=1 // loop_footer
      %s19 = sadd.s32 1, %s15
    $region7: #{tpu_custom_call.1} parent=1 // loop_footer_branch
      %14 = sbr.rel target = $region3
    $region8: #{tpu_custom_call.1} parent=1 // loop_exit
      _
    %208 = vsyncpa [#allocation3], 1
    %s209 = scalar_lea.sflag [#allocation3], 1
    %210 = vsyncpa %s209, 1
    %211 = vsyncpa [#allocation6], 1
    %212 = vsyncpa [#allocation4], 1
    %s213 = scalar_lea.sflag [#allocation4], 1
    %214 = vsyncpa %s213, 1

// kernel: _lambda_.8
$region0: #{_lambda_.8}
  #allocation0 [shape = 'u32[]', space=smem, size = 0x4, offset = 0x4, fixed_abs, tag = 'smem constant byte address 0x4 - core index']
  #allocation1 [shape = 'u32[144,128]{1,0:T(1,128)}', space=vmem, size = 0x12000, scoped, tag = 'internal scratch']
  #allocation2 [shape = 'f32[8,512]{1,0:T(8,128)}', space=vmem, size = 0x4000, scoped, tag = 'scratch operand']
  %s0 = inlined_call_operand.vmem [shape: bf16[48,512], index: 0, kind: input, shape index: {}]
  %s1 = inlined_call_operand.vmem [shape: bf16[8,48], index: 1, kind: input, shape index: {}]
  %s2 = inlined_call_operand.vmem [shape: f32[8,1], index: 2, kind: input, shape index: {}]
  %s3 = inlined_call_operand.vmem [shape: bf16[8,512], index: 3, kind: output, shape index: {}]
  %s4 = sld [smem:[#allocation0]]
  $region30: #{_lambda_.8} parent=0
    _
  %s6 = ssub.s32 1, %s4
  %s7 = scalar_select 0, %s6, %s4
  // Predicated region
  $region2: #{_lambda_.8} parent=0 // pred_check
    _
  $region3: #{_lambda_.8} parent=0 // pred_check_branch
    %9 = sbr.rel (0) target = $region5
  $region4: #{_lambda_.8} parent=0 // pred_region
    _
  $region5: #{_lambda_.8} parent=0 // pred_fallthru
    _
  // Predicated region
  $region6: #{_lambda_.8} parent=0 // pred_check
    _
  $region7: #{_lambda_.8} parent=0 // pred_check_branch
    %11 = sbr.rel (0) target = $region9
  $region8: #{_lambda_.8} parent=0 // pred_region
    _
  $region9: #{_lambda_.8} parent=0 // pred_fallthru
    _
  // Predicated region
  $region10: #{_lambda_.8} parent=0 // pred_check
    _
  $region11: #{_lambda_.8} parent=0 // pred_check_branch
    %13 = sbr.rel (0) target = $region13
  $region12: #{_lambda_.8} parent=0 // pred_region
    _
  $region13: #{_lambda_.8} parent=0 // pred_fallthru
    _
  %p15 = scmp.eq.s32.totalorder 0, 0
  // Predicated region
  $region14: #{_lambda_.8} parent=0 // pred_check
    %p16 = pneg %p15
  $region15: #{_lambda_.8} parent=0 // pred_check_branch
    %18 = sbr.rel (%p16) target = $region17
  $region16: #{_lambda_.8} parent=0 // pred_region
    %19 = vst [vmem:[#allocation2] sm:$0xff] 0.0
    %20 = vst [vmem:[#allocation2 + $0x8] sm:$0xff] 0.0
    %21 = vst [vmem:[#allocation2 + $0x10] sm:$0xff] 0.0
    %22 = vst [vmem:[#allocation2 + $0x18] sm:$0xff] 0.0
  $region17: #{_lambda_.8} parent=0 // pred_fallthru
    _
  %v23 = vld [vmem:[#allocation2] sm:$0xff]
  %v24 = vld [vmem:[#allocation2 + $0x8] sm:$0xff]
  %v25 = vld [vmem:[#allocation2 + $0x10] sm:$0xff]
  %v26 = vld [vmem:[#allocation2 + $0x18] sm:$0xff]
  %v27 = vld [vmem:[%s1] sm:$0xf]
  %v28 = vld [vmem:[%s0] sm:$0xff]
  %v29 = vld [vmem:[%s0 + $0x8] sm:$0xff]
  %v30 = vld [vmem:[%s0 + $0x10] sm:$0xff]
  %v31 = vld [vmem:[%s0 + $0x18] sm:$0xff]
  %v32 = vld [vmem:[%s0 + $0x20] sm:$0xff]
  %v33 = vld [vmem:[%s0 + $0x28] sm:$0xff]
  %v34 = vld [vmem:[%s0 + $0x30] sm:$0xff]
  %v35 = vld [vmem:[%s0 + $0x38] sm:$0xff]
  %v36 = vld [vmem:[%s0 + $0x40] sm:$0xff]
  %v37 = vld [vmem:[%s0 + $0x48] sm:$0xff]
  %v38 = vld [vmem:[%s0 + $0x50] sm:$0xff]
  %v39 = vld [vmem:[%s0 + $0x58] sm:$0xff]
  %v52 = vunpack.c.l.b16 %v28
  %v53 = vunpack.c.h.b16 %v28
  %v54 = vunpack.c.l.b16 %v29
  %v55 = vunpack.c.h.b16 %v29
  %v56 = vunpack.c.l.b16 %v30
  %v57 = vunpack.c.h.b16 %v30
  %v58 = vunpack.c.l.b16 %v31
  %v59 = vunpack.c.h.b16 %v31
  %v60 = vunpack.c.l.b16 %v32
  %v61 = vunpack.c.h.b16 %v32
  %v62 = vunpack.c.l.b16 %v33
  %v63 = vunpack.c.h.b16 %v33
  %v64 = vunpack.c.l.b16 %v34
  %v65 = vunpack.c.h.b16 %v34
  %v66 = vunpack.c.l.b16 %v35
  %v67 = vunpack.c.h.b16 %v35
  %v68 = vunpack.c.l.b16 %v36
  %v69 = vunpack.c.h.b16 %v36
  %v70 = vunpack.c.l.b16 %v37
  %v71 = vunpack.c.h.b16 %v37
  %v72 = vunpack.c.l.b16 %v38
  %v73 = vunpack.c.h.b16 %v38
  %v74 = vunpack.c.l.b16 %v39
  %v75 = vunpack.c.h.b16 %v39
  %v76 = vpack.c.b16 %v56, %v52
  %v77 = vpack.c.b16 %v57, %v53
  %v78 = vpack.c.b16 %v58, %v54
  %v79 = vpack.c.b16 %v59, %v55
  %v80 = vpack.c.b16 %v64, %v60
  %v81 = vpack.c.b16 %v65, %v61
  %v82 = vpack.c.b16 %v66, %v62
  %v83 = vpack.c.b16 %v67, %v63
  %v84 = vpack.c.b16 %v72, %v68
  %v85 = vpack.c.b16 %v73, %v69
  %v86 = vpack.c.b16 %v74, %v70
  %v87 = vpack.c.b16 %v75, %v71
  %vm100 = vcmask 392192
  %v102 = vsel %vm100, %v27, 0
  %104 = vmatprep.subr.bf16.mxu0 0
  %105 = vmatpush1.bf16.msra.mxu0 0
  %106 = vmatprep.subr.bf16.mxu0 0
  %107 = vmatpush1.bf16.msra.mxu0 0
  %108 = vmatprep.subr.bf16.mxu0 0
  %109 = vmatpush1.bf16.msra.mxu0 0
  %110 = vmatprep.subr.bf16.mxu0 0
  %111 = vmatpush1.bf16.msra.mxu0 0
  %112 = vmatprep.subr.bf16.mxu0 0
  %113 = vmatpush1.bf16.msra.mxu0 0
  %114 = vmatprep.subr.bf16.mxu0 %v85
  %115 = vmatpush1.bf16.msra.mxu0 %v84
  %116 = vmatprep.subr.bf16.mxu0 %v81
  %117 = vmatpush1.bf16.msra.mxu0 %v80
  %118 = vmatprep.subr.bf16.mxu0 %v77
  %119 = vmatpush1.bf16.msra.mxu0 %v76
  %120 = vmatprep.subr.bf16.mxu0 0
  %121 = vmatpush2.bf16.msra.mxu0 0
  %122 = vmatprep.subr.bf16.mxu0 0
  %123 = vmatpush2.bf16.msra.mxu0 0
  %124 = vmatprep.subr.bf16.mxu0 0
  %125 = vmatpush2.bf16.msra.mxu0 0
  %126 = vmatprep.subr.bf16.mxu0 0
  %127 = vmatpush2.bf16.msra.mxu0 0
  %128 = vmatprep.subr.bf16.mxu0 0
  %129 = vmatpush2.bf16.msra.mxu0 0
  %130 = vmatprep.subr.bf16.mxu0 0
  %131 = vmatpush2.bf16.msra.mxu0 0
  %132 = vmatprep.subr.bf16.mxu0 0
  %133 = vmatpush2.bf16.msra.mxu0 0
  %134 = vmatprep.subr.bf16.mxu0 0
  %135 = vmatpush2.bf16.msra.mxu0 0
  %136 = vmatprep.mubr.bf16.mxu0 0
  %137 = vmatmul.mubr.bf16.gmra.mxu0 %v102
  %v138 = vpop.f32.mrf.mxu0
  %v139 = vadd.f32 0.0, %v138
  %v140 = vpop.f32.mrf.mxu0
  %v141 = vadd.f32 0.0, %v140
  %v142 = vpop.f32.mrf.mxu0
  %v143 = vpop.f32.mrf.mxu0
  %144 = vdwg.mxu0
  %145 = vmatprep.subr.bf16.mxu0 0
  %146 = vmatpush1.bf16.msra.mxu0 0
  %147 = vmatprep.subr.bf16.mxu0 0
  %148 = vmatpush1.bf16.msra.mxu0 0
  %149 = vmatprep.subr.bf16.mxu0 0
  %150 = vmatpush1.bf16.msra.mxu0 0
  %151 = vmatprep.subr.bf16.mxu0 0
  %152 = vmatpush1.bf16.msra.mxu0 0
  %153 = vmatprep.subr.bf16.mxu0 0
  %154 = vmatpush1.bf16.msra.mxu0 0
  %155 = vmatprep.subr.bf16.mxu0 %v87
  %156 = vmatpush1.bf16.msra.mxu0 %v86
  %157 = vmatprep.subr.bf16.mxu0 %v83
  %158 = vmatpush1.bf16.msra.mxu0 %v82
  %159 = vmatprep.subr.bf16.mxu0 %v79
  %160 = vmatpush1.bf16.msra.mxu0 %v78
  %161 = vmatprep.subr.bf16.mxu0 0
  %162 = vmatpush2.bf16.msra.mxu0 0
  %163 = vmatprep.subr.bf16.mxu0 0
  %164 = vmatpush2.bf16.msra.mxu0 0
  %165 = vmatprep.subr.bf16.mxu0 0
  %166 = vmatpush2.bf16.msra.mxu0 0
  %167 = vmatprep.subr.bf16.mxu0 0
  %168 = vmatpush2.bf16.msra.mxu0 0
  %169 = vmatprep.subr.bf16.mxu0 0
  %170 = vmatpush2.bf16.msra.mxu0 0
  %171 = vmatprep.subr.bf16.mxu0 0
  %172 = vmatpush2.bf16.msra.mxu0 0
  %173 = vmatprep.subr.bf16.mxu0 0
  %174 = vmatpush2.bf16.msra.mxu0 0
  %175 = vmatprep.subr.bf16.mxu0 0
  %176 = vmatpush2.bf16.msra.mxu0 0
  %177 = vmatprep.mubr.bf16.mxu0 0
  %178 = vmatmul.mubr.bf16.gmra.mxu0 %v102
  %v179 = vpop.f32.mrf.mxu0
  %v180 = vadd.f32 0.0, %v179
  %v181 = vpop.f32.mrf.mxu0
  %v182 = vadd.f32 0.0, %v181
  %v183 = vpop.f32.mrf.mxu0
  %v184 = vpop.f32.mrf.mxu0
  %185 = vdwg.mxu0
  %v186 = vadd.f32 %v23, %v139
  %v187 = vadd.f32 %v24, %v141
  %v188 = vadd.f32 %v25, %v180
  %v189 = vadd.f32 %v26, %v182
  %190 = vst [vmem:[#allocation2] sm:$0xff] %v186
  %191 = vst [vmem:[#allocation2 + $0x8] sm:$0xff] %v187
  %192 = vst [vmem:[#allocation2 + $0x10] sm:$0xff] %v188
  %193 = vst [vmem:[#allocation2 + $0x18] sm:$0xff] %v189
  // Predicated region
  $region18: #{_lambda_.8} parent=0 // pred_check
    %p194 = pneg %p15
  $region19: #{_lambda_.8} parent=0 // pred_check_branch
    %196 = sbr.rel (%p194) target = $region21
  $region20: #{_lambda_.8} parent=0 // pred_region
    %v197 = vld [vmem:[#allocation2] sm:$0xff]
    %v198 = vld [vmem:[#allocation2 + $0x8] sm:$0xff]
    %v199 = vld [vmem:[#allocation2 + $0x10] sm:$0xff]
    %v200 = vld [vmem:[#allocation2 + $0x18] sm:$0xff]
    %v201 = vld [vmem:[%s2] sm:$0xff]
    %203 = vset.pattern.permute.xlu0 0
    %204 = vperm.xlu0 %203, %v201
    %v205 = vpop.permute.xlu0 %204
    %v207 = vadd.f32 %v197, %v205
    %v208 = vadd.f32 %v198, %v205
    %v209 = vadd.f32 %v199, %v205
    %v210 = vadd.f32 %v200, %v205
    %vm211 = vcmp.ge.f32.partialorder %v207, 0.0
    %vm212 = vcmp.ge.f32.partialorder %v208, 0.0
    %vm213 = vcmp.ge.f32.partialorder %v209, 0.0
    %vm214 = vcmp.ge.f32.partialorder %v210, 0.0
    %v215 = vmul.f32 %v207, 0.2
    %v216 = vmul.f32 %v208, 0.2
    %v217 = vmul.f32 %v209, 0.2
    %v218 = vmul.f32 %v210, 0.2
    %v219 = vsel %vm211, %v207, %v215
    %v220 = vsel %vm212, %v208, %v216
    %v221 = vsel %vm213, %v209, %v217
    %v222 = vsel %vm214, %v210, %v218
    %v223 = vpack.c.bf16 %v219, %v219
    %v224 = vpack.c.bf16 %v220, %v220
    %v225 = vpack.c.bf16 %v221, %v221
    %v226 = vpack.c.bf16 %v222, %v222
    %v231 = vunpack.c.l.b16 %v223
    %v232 = vunpack.c.l.b16 %v224
    %v233 = vunpack.c.l.b16 %v225
    %v234 = vunpack.c.l.b16 %v226
    %v235 = vpack.c.b16 %v232, %v231
    %v236 = vpack.c.b16 %v234, %v233
    %239 = vst [vmem:[%s3] sm:$0xff] %v235
    %240 = vst [vmem:[%s3 + $0x8] sm:$0xff] %v236
  $region21: #{_lambda_.8} parent=0 // pred_fallthru
    _
  // Predicated region
  $region22: #{_lambda_.8} parent=0 // pred_check
    _
  $region23: #{_lambda_.8} parent=0 // pred_check_branch
    %242 = sbr.rel (0) target = $region25
  $region24: #{_lambda_.8} parent=0 // pred_region
    _
  $region25: #{_lambda_.8} parent=0 // pred_fallthru
    _
  // Predicated region
  $region26: #{_lambda_.8} parent=0 // pred_check
    _
  $region27: #{_lambda_.8} parent=0 // pred_check_branch
    %244 = sbr.rel (0) target = $region29
  $region28: #{_lambda_.8} parent=0 // pred_region
    _
  $region29: #{_lambda_.8} parent=0 // pred_fallthru
    _

// kernel: _lambda_.9
$region0: #{_lambda_.9}
  #allocation0 [shape = 'u32[]', space=smem, size = 0x4, offset = 0x4, fixed_abs, tag = 'smem constant byte address 0x4 - core index']
  #allocation1 [shape = 'u32[144,128]{1,0:T(1,128)}', space=vmem, size = 0x12000, scoped, tag = 'internal scratch']
  #allocation2 [shape = 'f32[16,128]{1,0:T(8,128)}', space=vmem, size = 0x2000, scoped, tag = 'scratch operand']
  %s0 = inlined_call_operand.vmem [shape: bf16[128,128], index: 0, kind: input, shape index: {}]
  %s1 = inlined_call_operand.vmem [shape: bf16[16,128], index: 1, kind: input, shape index: {}]
  %s2 = inlined_call_operand.vmem [shape: f32[16,128], index: 2, kind: output, shape index: {0}]
  %s3 = inlined_call_operand.vmem [shape: f32[16,128], index: 3, kind: output, shape index: {1}]
  %s4 = inlined_call_operand.vmem [shape: f32[16,128], index: 4, kind: output, shape index: {2}]
  %5 = xla_tuple %s2, %s3, %s4
  %s6 = sld [smem:[#allocation0]]
  $region42: #{_lambda_.9} parent=0
    _
  %s8 = ssub.s32 1, %s6
  %s9 = scalar_select 0, %s8, %s6
  // Predicated region
  $region2: #{_lambda_.9} parent=0 // pred_check
    _
  $region3: #{_lambda_.9} parent=0 // pred_check_branch
    %11 = sbr.rel (0) target = $region5
  $region4: #{_lambda_.9} parent=0 // pred_region
    _
  $region5: #{_lambda_.9} parent=0 // pred_fallthru
    _
  // Predicated region
  $region6: #{_lambda_.9} parent=0 // pred_check
    _
  $region7: #{_lambda_.9} parent=0 // pred_check_branch
    %13 = sbr.rel (0) target = $region9
  $region8: #{_lambda_.9} parent=0 // pred_region
    _
  $region9: #{_lambda_.9} parent=0 // pred_fallthru
    _
  %p15 = scmp.eq.s32.totalorder 0, 0
  // Predicated region
  $region10: #{_lambda_.9} parent=0 // pred_check
    %p16 = pneg %p15
  $region11: #{_lambda_.9} parent=0 // pred_check_branch
    %18 = sbr.rel (%p16) target = $region13
  $region12: #{_lambda_.9} parent=0 // pred_region
    %19 = vst [vmem:[#allocation2] sm:$0xff] 0.0
    %20 = vst [vmem:[#allocation2 + $0x8] sm:$0xff] 0.0
  $region13: #{_lambda_.9} parent=0 // pred_fallthru
    _
  %v21 = vld [vmem:[#allocation2] sm:$0xff]
  %v22 = vld [vmem:[#allocation2 + $0x8] sm:$0xff]
  %v23 = vld [vmem:[%s1] sm:$0xf]
  %v24 = vld [vmem:[%s1 + $0x4] sm:$0xf]
  %v25 = vld [vmem:[%s0] sm:$0xf]
  %v26 = vld [vmem:[%s0 + $0x4] sm:$0xf]
  %v27 = vld [vmem:[%s0 + $0x8] sm:$0xf]
  %v28 = vld [vmem:[%s0 + $0xc] sm:$0xf]
  %v29 = vld [vmem:[%s0 + $0x10] sm:$0xf]
  %v30 = vld [vmem:[%s0 + $0x14] sm:$0xf]
  %v31 = vld [vmem:[%s0 + $0x18] sm:$0xf]
  %v32 = vld [vmem:[%s0 + $0x1c] sm:$0xf]
  %v33 = vld [vmem:[%s0 + $0x20] sm:$0xf]
  %v34 = vld [vmem:[%s0 + $0x24] sm:$0xf]
  %v35 = vld [vmem:[%s0 + $0x28] sm:$0xf]
  %v36 = vld [vmem:[%s0 + $0x2c] sm:$0xf]
  %v37 = vld [vmem:[%s0 + $0x30] sm:$0xf]
  %v38 = vld [vmem:[%s0 + $0x34] sm:$0xf]
  %v39 = vld [vmem:[%s0 + $0x38] sm:$0xf]
  %v40 = vld [vmem:[%s0 + $0x3c] sm:$0xf]
  %v43 = vunpack.c.l.b16 %v23
  %v44 = vunpack.c.l.b16 %v24
  %v45 = vpack.c.b16 %v44, %v43
  %v63 = vunpack.c.l.b16 %v25
  %v64 = vunpack.c.l.b16 %v26
  %v65 = vunpack.c.l.b16 %v27
  %v66 = vunpack.c.l.b16 %v28
  %v67 = vunpack.c.l.b16 %v29
  %v68 = vunpack.c.l.b16 %v30
  %v69 = vunpack.c.l.b16 %v31
  %v70 = vunpack.c.l.b16 %v32
  %v71 = vunpack.c.l.b16 %v33
  %v72 = vunpack.c.l.b16 %v34
  %v73 = vunpack.c.l.b16 %v35
  %v74 = vunpack.c.l.b16 %v36
  %v75 = vunpack.c.l.b16 %v37
  %v76 = vunpack.c.l.b16 %v38
  %v77 = vunpack.c.l.b16 %v39
  %v78 = vunpack.c.l.b16 %v40
  %v79 = vpack.c.b16 %v64, %v63
  %v80 = vpack.c.b16 %v66, %v65
  %v81 = vpack.c.b16 %v68, %v67
  %v82 = vpack.c.b16 %v70, %v69
  %v83 = vpack.c.b16 %v72, %v71
  %v84 = vpack.c.b16 %v74, %v73
  %v85 = vpack.c.b16 %v76, %v75
  %v86 = vpack.c.b16 %v78, %v77
  %95 = vmatprep.subr.bf16.mxu0 0
  %96 = vmatpush1.bf16.msra.mxu0 %v86
  %97 = vmatprep.subr.bf16.mxu0 0
  %98 = vmatpush1.bf16.msra.mxu0 %v85
  %99 = vmatprep.subr.bf16.mxu0 0
  %100 = vmatpush1.bf16.msra.mxu0 %v84
  %101 = vmatprep.subr.bf16.mxu0 0
  %102 = vmatpush1.bf16.msra.mxu0 %v83
  %103 = vmatprep.subr.bf16.mxu0 0
  %104 = vmatpush1.bf16.msra.mxu0 %v82
  %105 = vmatprep.subr.bf16.mxu0 0
  %106 = vmatpush1.bf16.msra.mxu0 %v81
  %107 = vmatprep.subr.bf16.mxu0 0
  %108 = vmatpush1.bf16.msra.mxu0 %v80
  %109 = vmatprep.subr.bf16.mxu0 0
  %110 = vmatpush1.bf16.msra.mxu0 %v79
  %111 = vmatprep.subr.bf16.mxu0 0
  %112 = vmatpush2.bf16.msra.mxu0 0
  %113 = vmatprep.subr.bf16.mxu0 0
  %114 = vmatpush2.bf16.msra.mxu0 0
  %115 = vmatprep.subr.bf16.mxu0 0
  %116 = vmatpush2.bf16.msra.mxu0 0
  %117 = vmatprep.subr.bf16.mxu0 0
  %118 = vmatpush2.bf16.msra.mxu0 0
  %119 = vmatprep.subr.bf16.mxu0 0
  %120 = vmatpush2.bf16.msra.mxu0 0
  %121 = vmatprep.subr.bf16.mxu0 0
  %122 = vmatpush2.bf16.msra.mxu0 0
  %123 = vmatprep.subr.bf16.mxu0 0
  %124 = vmatpush2.bf16.msra.mxu0 0
  %125 = vmatprep.subr.bf16.mxu0 0
  %126 = vmatpush2.bf16.msra.mxu0 0
  %127 = vmatprep.mubr.bf16.mxu0 0
  %128 = vmatmul.mubr.bf16.gmra.mxu0 %v45
  %v129 = vpop.f32.mrf.mxu0
  %v130 = vadd.f32 0.0, %v129
  %v131 = vpop.f32.mrf.mxu0
  %v132 = vpop.f32.mrf.mxu0
  %v133 = vadd.f32 0.0, %v132
  %v134 = vpop.f32.mrf.mxu0
  %135 = vdwg.mxu0
  %v136 = vadd.f32 %v21, %v130
  %v137 = vadd.f32 %v22, %v133
  %138 = vst [vmem:[#allocation2] sm:$0xff] %v136
  %139 = vst [vmem:[#allocation2 + $0x8] sm:$0xff] %v137
  // Predicated region
  $region14: #{_lambda_.9} parent=0 // pred_check
    %p140 = pneg %p15
  $region15: #{_lambda_.9} parent=0 // pred_check_branch
    %142 = sbr.rel (%p140) target = $region17
  $region16: #{_lambda_.9} parent=0 // pred_region
    %v143 = vld [vmem:[#allocation2] sm:$0xff]
    %v144 = vld [vmem:[#allocation2 + $0x8] sm:$0xff]
    %145 = vst [vmem:[%s2] sm:$0xff] %v143
    %146 = vst [vmem:[%s2 + $0x8] sm:$0xff] %v144
    %147 = vadd.xlane.f32.xlu0 %v143
    %v148 = vpop.xlane.xlu0 %147
    %149 = vadd.xlane.f32.xlu0 %v144
    %v150 = vpop.xlane.xlu0 %149
    %v151 = vmul.f32 %v143, %v143
    %v152 = vmul.f32 %v144, %v144
    %153 = vadd.xlane.f32.xlu0 %v151
    %v154 = vpop.xlane.xlu0 %153
    %155 = vadd.xlane.f32.xlu0 %v152
    %v156 = vpop.xlane.xlu0 %155
    %157 = vst [vmem:[%s3] sm:$0xff] %v148
    %158 = vst [vmem:[%s3 + $0x8] sm:$0xff] %v150
    %159 = vst [vmem:[%s4] sm:$0xff] %v154
    %160 = vst [vmem:[%s4 + $0x8] sm:$0xff] %v156
  $region17: #{_lambda_.9} parent=0 // pred_fallthru
    _
  // Predicated region
  $region18: #{_lambda_.9} parent=0 // pred_check
    _
  $region19: #{_lambda_.9} parent=0 // pred_check_branch
    %162 = sbr.rel (0) target = $region21
  $region20: #{_lambda_.9} parent=0 // pred_region
    _
  $region21: #{_lambda_.9} parent=0 // pred_fallthru
    _
  // Predicated region
  $region22: #{_lambda_.9} parent=0 // pred_check
    _
  $region23: #{_lambda_.9} parent=0 // pred_check_branch
    %164 = sbr.rel (0) target = $region25
  $region24: #{_lambda_.9} parent=0 // pred_region
    _
  $region25: #{_lambda_.9} parent=0 // pred_fallthru
    _
  // Predicated region
  $region26: #{_lambda_.9} parent=0 // pred_check
    _
  $region27: #{_lambda_.9} parent=0 // pred_check_branch
    %166 = sbr.rel (0) target = $region29
  $region28: #{_lambda_.9} parent=0 // pred_region
    _
  $region29: #{_lambda_.9} parent=0 // pred_fallthru
    _
  // Predicated region
  $region30: #{_lambda_.9} parent=0 // pred_check
    _
  $region31: #{_lambda_.9} parent=0 // pred_check_branch
    %168 = sbr.rel (0) target = $region33
  $region32: #{_lambda_.9} parent=0 // pred_region
    _
  $region33: #{_lambda_.9} parent=0 // pred_fallthru
    _
  // Predicated region
  $region34: #{_lambda_.9} parent=0 // pred_check
    _
  $region35: #{_lambda_.9} parent=0 // pred_check_branch
    %170 = sbr.rel (0) target = $region37
  $region36: #{_lambda_.9} parent=0 // pred_region
    _
  $region37: #{_lambda_.9} parent=0 // pred_fallthru
    _
  // Predicated region
  $region38: #{_lambda_.9} parent=0 // pred_check
    _
  $region39: #{_lambda_.9} parent=0 // pred_check_branch
    %172 = sbr.rel (0) target = $region41
  $region40: #{_lambda_.9} parent=0 // pred_region
    _
  $region41: #{_lambda_.9} parent=0 // pred_fallthru
    _

// kernel: _lambda_.10
$region0: #{_lambda_.10}
  #allocation0 [shape = 'u32[]', space=smem, size = 0x4, offset = 0x4, fixed_abs, tag = 'smem constant byte address 0x4 - core index']
  #allocation1 [shape = 'u32[144,128]{1,0:T(1,128)}', space=vmem, size = 0x12000, scoped, tag = 'internal scratch']
  %s0 = inlined_call_operand.vmem [shape: f32[16,128], index: 0, kind: input, shape index: {}]
  %s1 = inlined_call_operand.vmem [shape: f32[16,1], index: 1, kind: input, shape index: {}]
  %s2 = inlined_call_operand.vmem [shape: f32[16,1], index: 2, kind: input, shape index: {}]
  %s3 = inlined_call_operand.vmem [shape: bf16[16,128], index: 3, kind: output, shape index: {}]
  %s4 = sld [smem:[#allocation0]]
  $region22: #{_lambda_.10} parent=0
    _
  %s6 = ssub.s32 1, %s4
  %s7 = scalar_select 0, %s6, %s4
  // Predicated region
  $region2: #{_lambda_.10} parent=0 // pred_check
    _
  $region3: #{_lambda_.10} parent=0 // pred_check_branch
    %9 = sbr.rel (0) target = $region5
  $region4: #{_lambda_.10} parent=0 // pred_region
    _
  $region5: #{_lambda_.10} parent=0 // pred_fallthru
    _
  // Predicated region
  $region6: #{_lambda_.10} parent=0 // pred_check
    _
  $region7: #{_lambda_.10} parent=0 // pred_check_branch
    %11 = sbr.rel (0) target = $region9
  $region8: #{_lambda_.10} parent=0 // pred_region
    _
  $region9: #{_lambda_.10} parent=0 // pred_fallthru
    _
  // Predicated region
  $region10: #{_lambda_.10} parent=0 // pred_check
    _
  $region11: #{_lambda_.10} parent=0 // pred_check_branch
    %13 = sbr.rel (0) target = $region13
  $region12: #{_lambda_.10} parent=0 // pred_region
    _
  $region13: #{_lambda_.10} parent=0 // pred_fallthru
    _
  %v14 = vld [vmem:[%s0] sm:$0xff]
  %v15 = vld [vmem:[%s0 + $0x8] sm:$0xff]
  %v16 = vld [vmem:[%s1] sm:$0xff]
  %v17 = vld [vmem:[%s1 + $0x8] sm:$0xff]
  %19 = vset.pattern.permute.xlu0 0
  %20 = vperm.xlu0 %19, %v16
  %v21 = vpop.permute.xlu0 %20
  %24 = vset.pattern.permute.xlu0 0
  %25 = vperm.xlu0 %24, %v17
  %v26 = vpop.permute.xlu0 %25
  %v28 = vmul.f32 %v14, %v21
  %v29 = vmul.f32 %v15, %v26
  %v30 = vld [vmem:[%s2] sm:$0xff]
  %v31 = vld [vmem:[%s2 + $0x8] sm:$0xff]
  %33 = vset.pattern.permute.xlu0 0
  %34 = vperm.xlu0 %33, %v30
  %v35 = vpop.permute.xlu0 %34
  %38 = vset.pattern.permute.xlu0 0
  %39 = vperm.xlu0 %38, %v31
  %v40 = vpop.permute.xlu0 %39
  %v42 = vadd.f32 %v28, %v35
  %v43 = vadd.f32 %v29, %v40
  %vm44 = vcmp.ge.f32.partialorder %v42, 0.0
  %vm45 = vcmp.ge.f32.partialorder %v43, 0.0
  %v46 = vmul.f32 %v42, 0.2
  %v47 = vmul.f32 %v43, 0.2
  %v48 = vsel %vm44, %v42, %v46
  %v49 = vsel %vm45, %v43, %v47
  %v50 = vpack.c.bf16 %v49, %v48
  %v52 = vunpack.c.l.b16 %v50
  %v53 = vunpack.c.h.b16 %v50
  %v54 = vpack.c.b16 %v52, %v52
  %v55 = vpack.c.b16 %v53, %v53
  %58 = vst [vmem:[%s3] sm:$0xf] %v54
  %59 = vst [vmem:[%s3 + $0x4] sm:$0xf] %v55
  // Predicated region
  $region14: #{_lambda_.10} parent=0 // pred_check
    _
  $region15: #{_lambda_.10} parent=0 // pred_check_branch
    %61 = sbr.rel (0) target = $region17
  $region16: #{_lambda_.10} parent=0 // pred_region
    _
  $region17: #{_lambda_.10} parent=0 // pred_fallthru
    _
  // Predicated region
  $region18: #{_lambda_.10} parent=0 // pred_check
    _
  $region19: #{_lambda_.10} parent=0 // pred_check_branch
    %63 = sbr.rel (0) target = $region21
  $region20: #{_lambda_.10} parent=0 // pred_region
    _
  $region21: #{_lambda_.10} parent=0 // pred_fallthru
    _

// kernel: _lambda_.12
$region0: #{_lambda_.12}
  #allocation0 [shape = 'u32[]', space=smem, size = 0x4, offset = 0x4, fixed_abs, tag = 'smem constant byte address 0x4 - core index']
  #allocation1 [shape = 'u32[144,128]{1,0:T(1,128)}', space=vmem, size = 0x12000, scoped, tag = 'internal scratch']
  %s0 = inlined_call_operand.vmem [shape: f32[32,128], index: 0, kind: input, shape index: {}]
  %s1 = inlined_call_operand.vmem [shape: f32[32,1], index: 1, kind: input, shape index: {}]
  %s2 = inlined_call_operand.vmem [shape: f32[32,1], index: 2, kind: input, shape index: {}]
  %s3 = inlined_call_operand.vmem [shape: bf16[32,128], index: 3, kind: output, shape index: {}]
  %s4 = sld [smem:[#allocation0]]
  $region22: #{_lambda_.12} parent=0
    _
  %s6 = ssub.s32 1, %s4
  %s7 = scalar_select 0, %s6, %s4
  // Predicated region
  $region2: #{_lambda_.12} parent=0 // pred_check
    _
  $region3: #{_lambda_.12} parent=0 // pred_check_branch
    %9 = sbr.rel (0) target = $region5
  $region4: #{_lambda_.12} parent=0 // pred_region
    _
  $region5: #{_lambda_.12} parent=0 // pred_fallthru
    _
  // Predicated region
  $region6: #{_lambda_.12} parent=0 // pred_check
    _
  $region7: #{_lambda_.12} parent=0 // pred_check_branch
    %11 = sbr.rel (0) target = $region9
  $region8: #{_lambda_.12} parent=0 // pred_region
    _
  $region9: #{_lambda_.12} parent=0 // pred_fallthru
    _
  // Predicated region
  $region10: #{_lambda_.12} parent=0 // pred_check
    _
  $region11: #{_lambda_.12} parent=0 // pred_check_branch
    %13 = sbr.rel (0) target = $region13
  $region12: #{_lambda_.12} parent=0 // pred_region
    _
  $region13: #{_lambda_.12} parent=0 // pred_fallthru
    _
  %v14 = vld [vmem:[%s0] sm:$0xff]
  %v15 = vld [vmem:[%s0 + $0x8] sm:$0xff]
  %v16 = vld [vmem:[%s0 + $0x10] sm:$0xff]
  %v17 = vld [vmem:[%s0 + $0x18] sm:$0xff]
  %v18 = vld [vmem:[%s1] sm:$0xff]
  %v19 = vld [vmem:[%s1 + $0x8] sm:$0xff]
  %v20 = vld [vmem:[%s1 + $0x10] sm:$0xff]
  %v21 = vld [vmem:[%s1 + $0x18] sm:$0xff]
  %23 = vset.pattern.permute.xlu0 0
  %24 = vperm.xlu0 %23, %v18
  %v25 = vpop.permute.xlu0 %24
  %28 = vset.pattern.permute.xlu0 0
  %29 = vperm.xlu0 %28, %v19
  %v30 = vpop.permute.xlu0 %29
  %33 = vset.pattern.permute.xlu0 0
  %34 = vperm.xlu0 %33, %v20
  %v35 = vpop.permute.xlu0 %34
  %38 = vset.pattern.permute.xlu0 0
  %39 = vperm.xlu0 %38, %v21
  %v40 = vpop.permute.xlu0 %39
  %v42 = vmul.f32 %v14, %v25
  %v43 = vmul.f32 %v15, %v30
  %v44 = vmul.f32 %v16, %v35
  %v45 = vmul.f32 %v17, %v40
  %v46 = vld [vmem:[%s2] sm:$0xff]
  %v47 = vld [vmem:[%s2 + $0x8] sm:$0xff]
  %v48 = vld [vmem:[%s2 + $0x10] sm:$0xff]
  %v49 = vld [vmem:[%s2 + $0x18] sm:$0xff]
  %51 = vset.pattern.permute.xlu0 0
  %52 = vperm.xlu0 %51, %v46
  %v53 = vpop.permute.xlu0 %52
  %56 = vset.pattern.permute.xlu0 0
  %57 = vperm.xlu0 %56, %v47
  %v58 = vpop.permute.xlu0 %57
  %61 = vset.pattern.permute.xlu0 0
  %62 = vperm.xlu0 %61, %v48
  %v63 = vpop.permute.xlu0 %62
  %66 = vset.pattern.permute.xlu0 0
  %67 = vperm.xlu0 %66, %v49
  %v68 = vpop.permute.xlu0 %67
  %v70 = vadd.f32 %v42, %v53
  %v71 = vadd.f32 %v43, %v58
  %v72 = vadd.f32 %v44, %v63
  %v73 = vadd.f32 %v45, %v68
  %vm74 = vcmp.ge.f32.partialorder %v70, 0.0
  %vm75 = vcmp.ge.f32.partialorder %v71, 0.0
  %vm76 = vcmp.ge.f32.partialorder %v72, 0.0
  %vm77 = vcmp.ge.f32.partialorder %v73, 0.0
  %v78 = vmul.f32 %v70, 0.2
  %v79 = vmul.f32 %v71, 0.2
  %v80 = vmul.f32 %v72, 0.2
  %v81 = vmul.f32 %v73, 0.2
  %v82 = vsel %vm74, %v70, %v78
  %v83 = vsel %vm75, %v71, %v79
  %v84 = vsel %vm76, %v72, %v80
  %v85 = vsel %vm77, %v73, %v81
  %v86 = vpack.c.bf16 %v83, %v82
  %v87 = vpack.c.bf16 %v85, %v84
  %v90 = vunpack.c.l.b16 %v86
  %v91 = vunpack.c.h.b16 %v86
  %v92 = vunpack.c.l.b16 %v87
  %v93 = vunpack.c.h.b16 %v87
  %v94 = vpack.c.b16 %v90, %v90
  %v95 = vpack.c.b16 %v91, %v91
  %v96 = vpack.c.b16 %v92, %v92
  %v97 = vpack.c.b16 %v93, %v93
  %102 = vst [vmem:[%s3] sm:$0xf] %v94
  %103 = vst [vmem:[%s3 + $0x4] sm:$0xf] %v95
  %104 = vst [vmem:[%s3 + $0x8] sm:$0xf] %v96
  %105 = vst [vmem:[%s3 + $0xc] sm:$0xf] %v97
  // Predicated region
  $region14: #{_lambda_.12} parent=0 // pred_check
    _
  $region15: #{_lambda_.12} parent=0 // pred_check_branch
    %107 = sbr.rel (0) target = $region17
  $region16: #{_lambda_.12} parent=0 // pred_region
    _
  $region17: #{_lambda_.12} parent=0 // pred_fallthru
    _
  // Predicated region
  $region18: #{_lambda_.12} parent=0 // pred_check
    _
  $region19: #{_lambda_.12} parent=0 // pred_check_branch
    %109 = sbr.rel (0) target = $region21
  $region20: #{_lambda_.12} parent=0 // pred_region
    _
  $region21: #{_lambda_.12} parent=0 // pred_fallthru
    _

// kernel: _lambda_.11
$region0: #{_lambda_.11}
  #allocation0 [shape = 'u32[]', space=smem, size = 0x4, offset = 0x4, fixed_abs, tag = 'smem constant byte address 0x4 - core index']
  #allocation1 [shape = 'u32[144,128]{1,0:T(1,128)}', space=vmem, size = 0x12000, scoped, tag = 'internal scratch']
  #allocation2 [shape = 'f32[32,128]{1,0:T(8,128)}', space=vmem, size = 0x4000, scoped, tag = 'scratch operand']
  %s0 = inlined_call_operand.vmem [shape: bf16[256,128], index: 0, kind: input, shape index: {}]
  %s1 = inlined_call_operand.vmem [shape: bf16[32,256], index: 1, kind: input, shape index: {}]
  %s2 = inlined_call_operand.vmem [shape: f32[32,128], index: 2, kind: output, shape index: {0}]
  %s3 = inlined_call_operand.vmem [shape: f32[32,128], index: 3, kind: output, shape index: {1}]
  %s4 = inlined_call_operand.vmem [shape: f32[32,128], index: 4, kind: output, shape index: {2}]
  %5 = xla_tuple %s2, %s3, %s4
  %s6 = sld [smem:[#allocation0]]
  $region42: #{_lambda_.11} parent=0
    _
  %s8 = ssub.s32 1, %s6
  %s9 = scalar_select 0, %s8, %s6
  // Predicated region
  $region2: #{_lambda_.11} parent=0 // pred_check
    _
  $region3: #{_lambda_.11} parent=0 // pred_check_branch
    %11 = sbr.rel (0) target = $region5
  $region4: #{_lambda_.11} parent=0 // pred_region
    _
  $region5: #{_lambda_.11} parent=0 // pred_fallthru
    _
  // Predicated region
  $region6: #{_lambda_.11} parent=0 // pred_check
    _
  $region7: #{_lambda_.11} parent=0 // pred_check_branch
    %13 = sbr.rel (0) target = $region9
  $region8: #{_lambda_.11} parent=0 // pred_region
    _
  $region9: #{_lambda_.11} parent=0 // pred_fallthru
    _
  %p15 = scmp.eq.s32.totalorder 0, 0
  // Predicated region
  $region10: #{_lambda_.11} parent=0 // pred_check
    %p16 = pneg %p15
  $region11: #{_lambda_.11} parent=0 // pred_check_branch
    %18 = sbr.rel (%p16) target = $region13
  $region12: #{_lambda_.11} parent=0 // pred_region
    %19 = vst [vmem:[#allocation2] sm:$0xff] 0.0
    %20 = vst [vmem:[#allocation2 + $0x8] sm:$0xff] 0.0
    %21 = vst [vmem:[#allocation2 + $0x10] sm:$0xff] 0.0
    %22 = vst [vmem:[#allocation2 + $0x18] sm:$0xff] 0.0
  $region13: #{_lambda_.11} parent=0 // pred_fallthru
    _
  %v23 = vld [vmem:[#allocation2] sm:$0xff]
  %v24 = vld [vmem:[#allocation2 + $0x8] sm:$0xff]
  %v25 = vld [vmem:[#allocation2 + $0x10] sm:$0xff]
  %v26 = vld [vmem:[#allocation2 + $0x18] sm:$0xff]
  %v27 = vld [vmem:[%s1] sm:$0xff]
  %v28 = vld [vmem:[%s1 + $0x8] sm:$0xff]
  %v29 = vld [vmem:[%s1 + $0x10] sm:$0xff]
  %v30 = vld [vmem:[%s1 + $0x18] sm:$0xff]
  %v31 = vld [vmem:[%s0] sm:$0xf]
  %v32 = vld [vmem:[%s0 + $0x4] sm:$0xf]
  %v33 = vld [vmem:[%s0 + $0x8] sm:$0xf]
  %v34 = vld [vmem:[%s0 + $0xc] sm:$0xf]
  %v35 = vld [vmem:[%s0 + $0x10] sm:$0xf]
  %v36 = vld [vmem:[%s0 + $0x14] sm:$0xf]
  %v37 = vld [vmem:[%s0 + $0x18] sm:$0xf]
  %v38 = vld [vmem:[%s0 + $0x1c] sm:$0xf]
  %v39 = vld [vmem:[%s0 + $0x20] sm:$0xf]
  %v40 = vld [vmem:[%s0 + $0x24] sm:$0xf]
  %v41 = vld [vmem:[%s0 + $0x28] sm:$0xf]
  %v42 = vld [vmem:[%s0 + $0x2c] sm:$0xf]
  %v43 = vld [vmem:[%s0 + $0x30] sm:$0xf]
  %v44 = vld [vmem:[%s0 + $0x34] sm:$0xf]
  %v45 = vld [vmem:[%s0 + $0x38] sm:$0xf]
  %v46 = vld [vmem:[%s0 + $0x3c] sm:$0xf]
  %v47 = vld [vmem:[%s0 + $0x40] sm:$0xf]
  %v48 = vld [vmem:[%s0 + $0x44] sm:$0xf]
  %v49 = vld [vmem:[%s0 + $0x48] sm:$0xf]
  %v50 = vld [vmem:[%s0 + $0x4c] sm:$0xf]
  %v51 = vld [vmem:[%s0 + $0x50] sm:$0xf]
  %v52 = vld [vmem:[%s0 + $0x54] sm:$0xf]
  %v53 = vld [vmem:[%s0 + $0x58] sm:$0xf]
  %v54 = vld [vmem:[%s0 + $0x5c] sm:$0xf]
  %v55 = vld [vmem:[%s0 + $0x60] sm:$0xf]
  %v56 = vld [vmem:[%s0 + $0x64] sm:$0xf]
  %v57 = vld [vmem:[%s0 + $0x68] sm:$0xf]
  %v58 = vld [vmem:[%s0 + $0x6c] sm:$0xf]
  %v59 = vld [vmem:[%s0 + $0x70] sm:$0xf]
  %v60 = vld [vmem:[%s0 + $0x74] sm:$0xf]
  %v61 = vld [vmem:[%s0 + $0x78] sm:$0xf]
  %v62 = vld [vmem:[%s0 + $0x7c] sm:$0xf]
  %v67 = vunpack.c.l.b16 %v27
  %v68 = vunpack.c.h.b16 %v27
  %v69 = vunpack.c.l.b16 %v28
  %v70 = vunpack.c.h.b16 %v28
  %v71 = vunpack.c.l.b16 %v29
  %v72 = vunpack.c.h.b16 %v29
  %v73 = vunpack.c.l.b16 %v30
  %v74 = vunpack.c.h.b16 %v30
  %v75 = vpack.c.b16 %v69, %v67
  %v76 = vpack.c.b16 %v70, %v68
  %v77 = vpack.c.b16 %v73, %v71
  %v78 = vpack.c.b16 %v74, %v72
  %v115 = vunpack.c.l.b16 %v31
  %v116 = vunpack.c.l.b16 %v32
  %v117 = vunpack.c.l.b16 %v33
  %v118 = vunpack.c.l.b16 %v34
  %v119 = vunpack.c.l.b16 %v35
  %v120 = vunpack.c.l.b16 %v36
  %v121 = vunpack.c.l.b16 %v37
  %v122 = vunpack.c.l.b16 %v38
  %v123 = vunpack.c.l.b16 %v39
  %v124 = vunpack.c.l.b16 %v40
  %v125 = vunpack.c.l.b16 %v41
  %v126 = vunpack.c.l.b16 %v42
  %v127 = vunpack.c.l.b16 %v43
  %v128 = vunpack.c.l.b16 %v44
  %v129 = vunpack.c.l.b16 %v45
  %v130 = vunpack.c.l.b16 %v46
  %v131 = vunpack.c.l.b16 %v47
  %v132 = vunpack.c.l.b16 %v48
  %v133 = vunpack.c.l.b16 %v49
  %v134 = vunpack.c.l.b16 %v50
  %v135 = vunpack.c.l.b16 %v51
  %v136 = vunpack.c.l.b16 %v52
  %v137 = vunpack.c.l.b16 %v53
  %v138 = vunpack.c.l.b16 %v54
  %v139 = vunpack.c.l.b16 %v55
  %v140 = vunpack.c.l.b16 %v56
  %v141 = vunpack.c.l.b16 %v57
  %v142 = vunpack.c.l.b16 %v58
  %v143 = vunpack.c.l.b16 %v59
  %v144 = vunpack.c.l.b16 %v60
  %v145 = vunpack.c.l.b16 %v61
  %v146 = vunpack.c.l.b16 %v62
  %v147 = vpack.c.b16 %v116, %v115
  %v148 = vpack.c.b16 %v118, %v117
  %v149 = vpack.c.b16 %v120, %v119
  %v150 = vpack.c.b16 %v122, %v121
  %v151 = vpack.c.b16 %v124, %v123
  %v152 = vpack.c.b16 %v126, %v125
  %v153 = vpack.c.b16 %v128, %v127
  %v154 = vpack.c.b16 %v130, %v129
  %v155 = vpack.c.b16 %v132, %v131
  %v156 = vpack.c.b16 %v134, %v133
  %v157 = vpack.c.b16 %v136, %v135
  %v158 = vpack.c.b16 %v138, %v137
  %v159 = vpack.c.b16 %v140, %v139
  %v160 = vpack.c.b16 %v142, %v141
  %v161 = vpack.c.b16 %v144, %v143
  %v162 = vpack.c.b16 %v146, %v145
  %179 = vmatprep.subr.bf16.mxu0 0
  %180 = vmatpush1.bf16.msra.mxu0 %v154
  %181 = vmatprep.subr.bf16.mxu0 0
  %182 = vmatpush1.bf16.msra.mxu0 %v153
  %183 = vmatprep.subr.bf16.mxu0 0
  %184 = vmatpush1.bf16.msra.mxu0 %v152
  %185 = vmatprep.subr.bf16.mxu0 0
  %186 = vmatpush1.bf16.msra.mxu0 %v151
  %187 = vmatprep.subr.bf16.mxu0 0
  %188 = vmatpush1.bf16.msra.mxu0 %v150
  %189 = vmatprep.subr.bf16.mxu0 0
  %190 = vmatpush1.bf16.msra.mxu0 %v149
  %191 = vmatprep.subr.bf16.mxu0 0
  %192 = vmatpush1.bf16.msra.mxu0 %v148
  %193 = vmatprep.subr.bf16.mxu0 0
  %194 = vmatpush1.bf16.msra.mxu0 %v147
  %195 = vmatprep.subr.bf16.mxu0 0
  %196 = vmatpush2.bf16.msra.mxu0 %v162
  %197 = vmatprep.subr.bf16.mxu0 0
  %198 = vmatpush2.bf16.msra.mxu0 %v161
  %199 = vmatprep.subr.bf16.mxu0 0
  %200 = vmatpush2.bf16.msra.mxu0 %v160
  %201 = vmatprep.subr.bf16.mxu0 0
  %202 = vmatpush2.bf16.msra.mxu0 %v159
  %203 = vmatprep.subr.bf16.mxu0 0
  %204 = vmatpush2.bf16.msra.mxu0 %v158
  %205 = vmatprep.subr.bf16.mxu0 0
  %206 = vmatpush2.bf16.msra.mxu0 %v157
  %207 = vmatprep.subr.bf16.mxu0 0
  %208 = vmatpush2.bf16.msra.mxu0 %v156
  %209 = vmatprep.subr.bf16.mxu0 0
  %210 = vmatpush2.bf16.msra.mxu0 %v155
  %211 = vmatprep.mubr.bf16.mxu0 %v76
  %212 = vmatmul.mubr.bf16.gmra.mxu0 %v75
  %v213 = vpop.f32.mrf.mxu0
  %v214 = vadd.f32 0.0, %v213
  %v215 = vpop.f32.mrf.mxu0
  %v216 = vpop.f32.mrf.mxu0
  %v217 = vadd.f32 0.0, %v216
  %v218 = vpop.f32.mrf.mxu0
  %219 = vmatprep.mubr.bf16.mxu0 %v78
  %220 = vmatmul.mubr.bf16.gmra.mxu0 %v77
  %v221 = vpop.f32.mrf.mxu0
  %v222 = vadd.f32 0.0, %v221
  %v223 = vpop.f32.mrf.mxu0
  %v224 = vpop.f32.mrf.mxu0
  %v225 = vadd.f32 0.0, %v224
  %v226 = vpop.f32.mrf.mxu0
  %227 = vdwg.mxu0
  %v228 = vadd.f32 %v23, %v214
  %v229 = vadd.f32 %v24, %v217
  %v230 = vadd.f32 %v25, %v222
  %v231 = vadd.f32 %v26, %v225
  %232 = vst [vmem:[#allocation2] sm:$0xff] %v228
  %233 = vst [vmem:[#allocation2 + $0x8] sm:$0xff] %v229
  %234 = vst [vmem:[#allocation2 + $0x10] sm:$0xff] %v230
  %235 = vst [vmem:[#allocation2 + $0x18] sm:$0xff] %v231
  // Predicated region
  $region14: #{_lambda_.11} parent=0 // pred_check
    %p236 = pneg %p15
  $region15: #{_lambda_.11} parent=0 // pred_check_branch
    %238 = sbr.rel (%p236) target = $region17
  $region16: #{_lambda_.11} parent=0 // pred_region
    %v239 = vld [vmem:[#allocation2] sm:$0xff]
    %v240 = vld [vmem:[#allocation2 + $0x8] sm:$0xff]
    %v241 = vld [vmem:[#allocation2 + $0x10] sm:$0xff]
    %v242 = vld [vmem:[#allocation2 + $0x18] sm:$0xff]
    %243 = vst [vmem:[%s2] sm:$0xff] %v239
    %244 = vst [vmem:[%s2 + $0x8] sm:$0xff] %v240
    %245 = vst [vmem:[%s2 + $0x10] sm:$0xff] %v241
    %246 = vst [vmem:[%s2 + $0x18] sm:$0xff] %v242
    %247 = vadd.xlane.f32.xlu0 %v239
    %v248 = vpop.xlane.xlu0 %247
    %249 = vadd.xlane.f32.xlu0 %v240
    %v250 = vpop.xlane.xlu0 %249
    %251 = vadd.xlane.f32.xlu0 %v241
    %v252 = vpop.xlane.xlu0 %251
    %253 = vadd.xlane.f32.xlu0 %v242
    %v254 = vpop.xlane.xlu0 %253
    %v255 = vmul.f32 %v239, %v239
    %v256 = vmul.f32 %v240, %v240
    %v257 = vmul.f32 %v241, %v241
    %v258 = vmul.f32 %v242, %v242
    %259 = vadd.xlane.f32.xlu0 %v255
    %v260 = vpop.xlane.xlu0 %259
    %261 = vadd.xlane.f32.xlu0 %v256
    %v262 = vpop.xlane.xlu0 %261
    %263 = vadd.xlane.f32.xlu0 %v257
    %v264 = vpop.xlane.xlu0 %263
    %265 = vadd.xlane.f32.xlu0 %v258
    %v266 = vpop.xlane.xlu0 %265
    %267 = vst [vmem:[%s3] sm:$0xff] %v248
    %268 = vst [vmem:[%s3 + $0x8] sm:$0xff] %v250
    %269 = vst [vmem:[%s3 + $0x10] sm:$0xff] %v252
    %270 = vst [vmem:[%s3 + $0x18] sm:$0xff] %v254
    %271 = vst [vmem:[%s4] sm:$0xff] %v260
    %272 = vst [vmem:[%s4 + $0x8] sm:$0xff] %v262
    %273 = vst [vmem:[%s4 + $0x10] sm:$0xff] %v264
    %274 = vst [vmem:[%s4 + $0x18] sm:$0xff] %v266
  $region17: #{_lambda_.11} parent=0 // pred_fallthru
    _
  // Predicated region
  $region18: #{_lambda_.11} parent=0 // pred_check
    _
  $region19: #{_lambda_.11} parent=0 // pred_check_branch
    %276 = sbr.rel (0) target = $region21
  $region20: #{_lambda_.11} parent=0 // pred_region
    _
  $region21: #{_lambda_.11} parent=0 // pred_fallthru
    _
  // Predicated region
  $region22: #{_lambda_.11} parent=0 // pred_check
    _
  $region23: #{_lambda_.11} parent=0 // pred_check_branch
    %278 = sbr.rel (0) target = $region25
  $region24: #{_lambda_.11} parent=0 // pred_region
    _
  $region25: #{_lambda_.11} parent=0 // pred_fallthru
    _
  // Predicated region
  $region26: #{_lambda_.11} parent=0 // pred_check
    _
  $region27: #{_lambda_.11} parent=0 // pred_check_branch
    %280 = sbr.rel (0) target = $region29
  $region28: #{_lambda_.11} parent=0 // pred_region
    _
  $region29: #{_lambda_.11} parent=0 // pred_fallthru
    _
  // Predicated region
  $region30: #{_lambda_.11} parent=0 // pred_check
    _
  $region31: #{_lambda_.11} parent=0 // pred_check_branch
    %282 = sbr.rel (0) target = $region33
  $region32: #{_lambda_.11} parent=0 // pred_region
    _
  $region33: #{_lambda_.11} parent=0 // pred_fallthru
    _
  // Predicated region
  $region34: #{_lambda_.11} parent=0 // pred_check
    _
  $region35: #{_lambda_.11} parent=0 // pred_check_branch
    %284 = sbr.rel (0) target = $region37
  $region36: #{_lambda_.11} parent=0 // pred_region
    _
  $region37: #{_lambda_.11} parent=0 // pred_fallthru
    _
  // Predicated region
  $region38: #{_lambda_.11} parent=0 // pred_check
    _
  $region39: #{_lambda_.11} parent=0 // pred_check_branch
    %286 = sbr.rel (0) target = $region41
  $region40: #{_lambda_.11} parent=0 // pred_region
    _
  $region41: #{_lambda_.11} parent=0 // pred_fallthru
    _

// kernel: _lambda_.13
$region0: #{_lambda_.13}
  #allocation0 [shape = 'u32[]', space=smem, size = 0x4, offset = 0x4, fixed_abs, tag = 'smem constant byte address 0x4 - core index']
  #allocation1 [shape = 'u32[144,128]{1,0:T(1,128)}', space=vmem, size = 0x12000, scoped, tag = 'internal scratch']
  #allocation2 [shape = 'f32[64,128]{1,0:T(8,128)}', space=vmem, size = 0x8000, scoped, tag = 'scratch operand']
  %s0 = inlined_call_operand.vmem [shape: bf16[512,128], index: 0, kind: input, shape index: {}]
  %s1 = inlined_call_operand.vmem [shape: bf16[64,512], index: 1, kind: input, shape index: {}]
  %s2 = inlined_call_operand.vmem [shape: f32[64,128], index: 2, kind: output, shape index: {0}]
  %s3 = inlined_call_operand.vmem [shape: f32[64,128], index: 3, kind: output, shape index: {1}]
  %s4 = inlined_call_operand.vmem [shape: f32[64,128], index: 4, kind: output, shape index: {2}]
  %5 = xla_tuple %s2, %s3, %s4
  %s6 = sld [smem:[#allocation0]]
  $region42: #{_lambda_.13} parent=0
    _
  %s8 = ssub.s32 1, %s6
  %s9 = scalar_select 0, %s8, %s6
  // Predicated region
  $region2: #{_lambda_.13} parent=0 // pred_check
    _
  $region3: #{_lambda_.13} parent=0 // pred_check_branch
    %11 = sbr.rel (0) target = $region5
  $region4: #{_lambda_.13} parent=0 // pred_region
    _
  $region5: #{_lambda_.13} parent=0 // pred_fallthru
    _
  // Predicated region
  $region6: #{_lambda_.13} parent=0 // pred_check
    _
  $region7: #{_lambda_.13} parent=0 // pred_check_branch
    %13 = sbr.rel (0) target = $region9
  $region8: #{_lambda_.13} parent=0 // pred_region
    _
  $region9: #{_lambda_.13} parent=0 // pred_fallthru
    _
  %p15 = scmp.eq.s32.totalorder 0, 0
  // Predicated region
  $region10: #{_lambda_.13} parent=0 // pred_check
    %p16 = pneg %p15
  $region11: #{_lambda_.13} parent=0 // pred_check_branch
    %18 = sbr.rel (%p16) target = $region13
  $region12: #{_lambda_.13} parent=0 // pred_region
    %19 = vst [vmem:[#allocation2] sm:$0xff] 0.0
    %20 = vst [vmem:[#allocation2 + $0x8] sm:$0xff] 0.0
    %21 = vst [vmem:[#allocation2 + $0x10] sm:$0xff] 0.0
    %22 = vst [vmem:[#allocation2 + $0x18] sm:$0xff] 0.0
    %23 = vst [vmem:[#allocation2 + $0x20] sm:$0xff] 0.0
    %24 = vst [vmem:[#allocation2 + $0x28] sm:$0xff] 0.0
    %25 = vst [vmem:[#allocation2 + $0x30] sm:$0xff] 0.0
    %26 = vst [vmem:[#allocation2 + $0x38] sm:$0xff] 0.0
  $region13: #{_lambda_.13} parent=0 // pred_fallthru
    _
  %v27 = vld [vmem:[#allocation2] sm:$0xff]
  %v28 = vld [vmem:[#allocation2 + $0x8] sm:$0xff]
  %v29 = vld [vmem:[#allocation2 + $0x10] sm:$0xff]
  %v30 = vld [vmem:[#allocation2 + $0x18] sm:$0xff]
  %v31 = vld [vmem:[#allocation2 + $0x20] sm:$0xff]
  %v32 = vld [vmem:[#allocation2 + $0x28] sm:$0xff]
  %v33 = vld [vmem:[#allocation2 + $0x30] sm:$0xff]
  %v34 = vld [vmem:[#allocation2 + $0x38] sm:$0xff]
  %v35 = vld [vmem:[%s1] sm:$0xff]
  %v36 = vld [vmem:[%s1 + $0x8] sm:$0xff]
  %v37 = vld [vmem:[%s1 + $0x10] sm:$0xff]
  %v38 = vld [vmem:[%s1 + $0x18] sm:$0xff]
  %v39 = vld [vmem:[%s1 + $0x20] sm:$0xff]
  %v40 = vld [vmem:[%s1 + $0x28] sm:$0xff]
  %v41 = vld [vmem:[%s1 + $0x30] sm:$0xff]
  %v42 = vld [vmem:[%s1 + $0x38] sm:$0xff]
  %v43 = vld [vmem:[%s1 + $0x40] sm:$0xff]
  %v44 = vld [vmem:[%s1 + $0x48] sm:$0xff]
  %v45 = vld [vmem:[%s1 + $0x50] sm:$0xff]
  %v46 = vld [vmem:[%s1 + $0x58] sm:$0xff]
  %v47 = vld [vmem:[%s1 + $0x60] sm:$0xff]
  %v48 = vld [vmem:[%s1 + $0x68] sm:$0xff]
  %v49 = vld [vmem:[%s1 + $0x70] sm:$0xff]
  %v50 = vld [vmem:[%s1 + $0x78] sm:$0xff]
  %v51 = vld [vmem:[%s0] sm:$0xf]
  %v52 = vld [vmem:[%s0 + $0x4] sm:$0xf]
  %v53 = vld [vmem:[%s0 + $0x8] sm:$0xf]
  %v54 = vld [vmem:[%s0 + $0xc] sm:$0xf]
  %v55 = vld [vmem:[%s0 + $0x10] sm:$0xf]
  %v56 = vld [vmem:[%s0 + $0x14] sm:$0xf]
  %v57 = vld [vmem:[%s0 + $0x18] sm:$0xf]
  %v58 = vld [vmem:[%s0 + $0x1c] sm:$0xf]
  %v59 = vld [vmem:[%s0 + $0x20] sm:$0xf]
  %v60 = vld [vmem:[%s0 + $0x24] sm:$0xf]
  %v61 = vld [vmem:[%s0 + $0x28] sm:$0xf]
  %v62 = vld [vmem:[%s0 + $0x2c] sm:$0xf]
  %v63 = vld [vmem:[%s0 + $0x30] sm:$0xf]
  %v64 = vld [vmem:[%s0 + $0x34] sm:$0xf]
  %v65 = vld [vmem:[%s0 + $0x38] sm:$0xf]
  %v66 = vld [vmem:[%s0 + $0x3c] sm:$0xf]
  %v67 = vld [vmem:[%s0 + $0x40] sm:$0xf]
  %v68 = vld [vmem:[%s0 + $0x44] sm:$0xf]
  %v69 = vld [vmem:[%s0 + $0x48] sm:$0xf]
  %v70 = vld [vmem:[%s0 + $0x4c] sm:$0xf]
  %v71 = vld [vmem:[%s0 + $0x50] sm:$0xf]
  %v72 = vld [vmem:[%s0 + $0x54] sm:$0xf]
  %v73 = vld [vmem:[%s0 + $0x58] sm:$0xf]
  %v74 = vld [vmem:[%s0 + $0x5c] sm:$0xf]
  %v75 = vld [vmem:[%s0 + $0x60] sm:$0xf]
  %v76 = vld [vmem:[%s0 + $0x64] sm:$0xf]
  %v77 = vld [vmem:[%s0 + $0x68] sm:$0xf]
  %v78 = vld [vmem:[%s0 + $0x6c] sm:$0xf]
  %v79 = vld [vmem:[%s0 + $0x70] sm:$0xf]
  %v80 = vld [vmem:[%s0 + $0x74] sm:$0xf]
  %v81 = vld [vmem:[%s0 + $0x78] sm:$0xf]
  %v82 = vld [vmem:[%s0 + $0x7c] sm:$0xf]
  %v83 = vld [vmem:[%s0 + $0x80] sm:$0xf]
  %v84 = vld [vmem:[%s0 + $0x84] sm:$0xf]
  %v85 = vld [vmem:[%s0 + $0x88] sm:$0xf]
  %v86 = vld [vmem:[%s0 + $0x8c] sm:$0xf]
  %v87 = vld [vmem:[%s0 + $0x90] sm:$0xf]
  %v88 = vld [vmem:[%s0 + $0x94] sm:$0xf]
  %v89 = vld [vmem:[%s0 + $0x98] sm:$0xf]
  %v90 = vld [vmem:[%s0 + $0x9c] sm:$0xf]
  %v91 = vld [vmem:[%s0 + $0xa0] sm:$0xf]
  %v92 = vld [vmem:[%s0 + $0xa4] sm:$0xf]
  %v93 = vld [vmem:[%s0 + $0xa8] sm:$0xf]
  %v94 = vld [vmem:[%s0 + $0xac] sm:$0xf]
  %v95 = vld [vmem:[%s0 + $0xb0] sm:$0xf]
  %v96 = vld [vmem:[%s0 + $0xb4] sm:$0xf]
  %v97 = vld [vmem:[%s0 + $0xb8] sm:$0xf]
  %v98 = vld [vmem:[%s0 + $0xbc] sm:$0xf]
  %v99 = vld [vmem:[%s0 + $0xc0] sm:$0xf]
  %v100 = vld [vmem:[%s0 + $0xc4] sm:$0xf]
  %v101 = vld [vmem:[%s0 + $0xc8] sm:$0xf]
  %v102 = vld [vmem:[%s0 + $0xcc] sm:$0xf]
  %v103 = vld [vmem:[%s0 + $0xd0] sm:$0xf]
  %v104 = vld [vmem:[%s0 + $0xd4] sm:$0xf]
  %v105 = vld [vmem:[%s0 + $0xd8] sm:$0xf]
  %v106 = vld [vmem:[%s0 + $0xdc] sm:$0xf]
  %v107 = vld [vmem:[%s0 + $0xe0] sm:$0xf]
  %v108 = vld [vmem:[%s0 + $0xe4] sm:$0xf]
  %v109 = vld [vmem:[%s0 + $0xe8] sm:$0xf]
  %v110 = vld [vmem:[%s0 + $0xec] sm:$0xf]
  %v111 = vld [vmem:[%s0 + $0xf0] sm:$0xf]
  %v112 = vld [vmem:[%s0 + $0xf4] sm:$0xf]
  %v113 = vld [vmem:[%s0 + $0xf8] sm:$0xf]
  %v114 = vld [vmem:[%s0 + $0xfc] sm:$0xf]
  %v131 = vunpack.c.l.b16 %v35
  %v132 = vunpack.c.h.b16 %v35
  %v133 = vunpack.c.l.b16 %v36
  %v134 = vunpack.c.h.b16 %v36
  %v135 = vunpack.c.l.b16 %v37
  %v136 = vunpack.c.h.b16 %v37
  %v137 = vunpack.c.l.b16 %v38
  %v138 = vunpack.c.h.b16 %v38
  %v139 = vunpack.c.l.b16 %v39
  %v140 = vunpack.c.h.b16 %v39
  %v141 = vunpack.c.l.b16 %v40
  %v142 = vunpack.c.h.b16 %v40
  %v143 = vunpack.c.l.b16 %v41
  %v144 = vunpack.c.h.b16 %v41
  %v145 = vunpack.c.l.b16 %v42
  %v146 = vunpack.c.h.b16 %v42
  %v147 = vunpack.c.l.b16 %v43
  %v148 = vunpack.c.h.b16 %v43
  %v149 = vunpack.c.l.b16 %v44
  %v150 = vunpack.c.h.b16 %v44
  %v151 = vunpack.c.l.b16 %v45
  %v152 = vunpack.c.h.b16 %v45
  %v153 = vunpack.c.l.b16 %v46
  %v154 = vunpack.c.h.b16 %v46
  %v155 = vunpack.c.l.b16 %v47
  %v156 = vunpack.c.h.b16 %v47
  %v157 = vunpack.c.l.b16 %v48
  %v158 = vunpack.c.h.b16 %v48
  %v159 = vunpack.c.l.b16 %v49
  %v160 = vunpack.c.h.b16 %v49
  %v161 = vunpack.c.l.b16 %v50
  %v162 = vunpack.c.h.b16 %v50
  %v163 = vpack.c.b16 %v135, %v131
  %v164 = vpack.c.b16 %v136, %v132
  %v165 = vpack.c.b16 %v137, %v133
  %v166 = vpack.c.b16 %v138, %v134
  %v167 = vpack.c.b16 %v143, %v139
  %v168 = vpack.c.b16 %v144, %v140
  %v169 = vpack.c.b16 %v145, %v141
  %v170 = vpack.c.b16 %v146, %v142
  %v171 = vpack.c.b16 %v151, %v147
  %v172 = vpack.c.b16 %v152, %v148
  %v173 = vpack.c.b16 %v153, %v149
  %v174 = vpack.c.b16 %v154, %v150
  %v175 = vpack.c.b16 %v159, %v155
  %v176 = vpack.c.b16 %v160, %v156
  %v177 = vpack.c.b16 %v161, %v157
  %v178 = vpack.c.b16 %v162, %v158
  %v259 = vunpack.c.l.b16 %v51
  %v260 = vunpack.c.l.b16 %v52
  %v261 = vunpack.c.l.b16 %v53
  %v262 = vunpack.c.l.b16 %v54
  %v263 = vunpack.c.l.b16 %v55
  %v264 = vunpack.c.l.b16 %v56
  %v265 = vunpack.c.l.b16 %v57
  %v266 = vunpack.c.l.b16 %v58
  %v267 = vunpack.c.l.b16 %v59
  %v268 = vunpack.c.l.b16 %v60
  %v269 = vunpack.c.l.b16 %v61
  %v270 = vunpack.c.l.b16 %v62
  %v271 = vunpack.c.l.b16 %v63
  %v272 = vunpack.c.l.b16 %v64
  %v273 = vunpack.c.l.b16 %v65
  %v274 = vunpack.c.l.b16 %v66
  %v275 = vunpack.c.l.b16 %v67
  %v276 = vunpack.c.l.b16 %v68
  %v277 = vunpack.c.l.b16 %v69
  %v278 = vunpack.c.l.b16 %v70
  %v279 = vunpack.c.l.b16 %v71
  %v280 = vunpack.c.l.b16 %v72
  %v281 = vunpack.c.l.b16 %v73
  %v282 = vunpack.c.l.b16 %v74
  %v283 = vunpack.c.l.b16 %v75
  %v284 = vunpack.c.l.b16 %v76
  %v285 = vunpack.c.l.b16 %v77
  %v286 = vunpack.c.l.b16 %v78
  %v287 = vunpack.c.l.b16 %v79
  %v288 = vunpack.c.l.b16 %v80
  %v289 = vunpack.c.l.b16 %v81
  %v290 = vunpack.c.l.b16 %v82
  %v291 = vunpack.c.l.b16 %v83
  %v292 = vunpack.c.l.b16 %v84
  %v293 = vunpack.c.l.b16 %v85
  %v294 = vunpack.c.l.b16 %v86
  %v295 = vunpack.c.l.b16 %v87
  %v296 = vunpack.c.l.b16 %v88
  %v297 = vunpack.c.l.b16 %v89
  %v298 = vunpack.c.l.b16 %v90
  %v299 = vunpack.c.l.b16 %v91
  %v300 = vunpack.c.l.b16 %v92
  %v301 = vunpack.c.l.b16 %v93
  %v302 = vunpack.c.l.b16 %v94
  %v303 = vunpack.c.l.b16 %v95
  %v304 = vunpack.c.l.b16 %v96
  %v305 = vunpack.c.l.b16 %v97
  %v306 = vunpack.c.l.b16 %v98
  %v307 = vunpack.c.l.b16 %v99
  %v308 = vunpack.c.l.b16 %v100
  %v309 = vunpack.c.l.b16 %v101
  %v310 = vunpack.c.l.b16 %v102
  %v311 = vunpack.c.l.b16 %v103
  %v312 = vunpack.c.l.b16 %v104
  %v313 = vunpack.c.l.b16 %v105
  %v314 = vunpack.c.l.b16 %v106
  %v315 = vunpack.c.l.b16 %v107
  %v316 = vunpack.c.l.b16 %v108
  %v317 = vunpack.c.l.b16 %v109
  %v318 = vunpack.c.l.b16 %v110
  %v319 = vunpack.c.l.b16 %v111
  %v320 = vunpack.c.l.b16 %v112
  %v321 = vunpack.c.l.b16 %v113
  %v322 = vunpack.c.l.b16 %v114
  %v323 = vpack.c.b16 %v260, %v259
  %v324 = vpack.c.b16 %v262, %v261
  %v325 = vpack.c.b16 %v264, %v263
  %v326 = vpack.c.b16 %v266, %v265
  %v327 = vpack.c.b16 %v268, %v267
  %v328 = vpack.c.b16 %v270, %v269
  %v329 = vpack.c.b16 %v272, %v271
  %v330 = vpack.c.b16 %v274, %v273
  %v331 = vpack.c.b16 %v276, %v275
  %v332 = vpack.c.b16 %v278, %v277
  %v333 = vpack.c.b16 %v280, %v279
  %v334 = vpack.c.b16 %v282, %v281
  %v335 = vpack.c.b16 %v284, %v283
  %v336 = vpack.c.b16 %v286, %v285
  %v337 = vpack.c.b16 %v288, %v287
  %v338 = vpack.c.b16 %v290, %v289
  %v339 = vpack.c.b16 %v292, %v291
  %v340 = vpack.c.b16 %v294, %v293
  %v341 = vpack.c.b16 %v296, %v295
  %v342 = vpack.c.b16 %v298, %v297
  %v343 = vpack.c.b16 %v300, %v299
  %v344 = vpack.c.b16 %v302, %v301
  %v345 = vpack.c.b16 %v304, %v303
  %v346 = vpack.c.b16 %v306, %v305
  %v347 = vpack.c.b16 %v308, %v307
  %v348 = vpack.c.b16 %v310, %v309
  %v349 = vpack.c.b16 %v312, %v311
  %v350 = vpack.c.b16 %v314, %v313
  %v351 = vpack.c.b16 %v316, %v315
  %v352 = vpack.c.b16 %v318, %v317
  %v353 = vpack.c.b16 %v320, %v319
  %v354 = vpack.c.b16 %v322, %v321
  %387 = vmatprep.subr.bf16.mxu0 0
  %388 = vmatpush1.bf16.msra.mxu0 %v330
  %389 = vmatprep.subr.bf16.mxu0 0
  %390 = vmatpush1.bf16.msra.mxu0 %v329
  %391 = vmatprep.subr.bf16.mxu0 0
  %392 = vmatpush1.bf16.msra.mxu0 %v328
  %393 = vmatprep.subr.bf16.mxu0 0
  %394 = vmatpush1.bf16.msra.mxu0 %v327
  %395 = vmatprep.subr.bf16.mxu0 0
  %396 = vmatpush1.bf16.msra.mxu0 %v326
  %397 = vmatprep.subr.bf16.mxu0 0
  %398 = vmatpush1.bf16.msra.mxu0 %v325
  %399 = vmatprep.subr.bf16.mxu0 0
  %400 = vmatpush1.bf16.msra.mxu0 %v324
  %401 = vmatprep.subr.bf16.mxu0 0
  %402 = vmatpush1.bf16.msra.mxu0 %v323
  %403 = vmatprep.subr.bf16.mxu0 0
  %404 = vmatpush2.bf16.msra.mxu0 %v338
  %405 = vmatprep.subr.bf16.mxu0 0
  %406 = vmatpush2.bf16.msra.mxu0 %v337
  %407 = vmatprep.subr.bf16.mxu0 0
  %408 = vmatpush2.bf16.msra.mxu0 %v336
  %409 = vmatprep.subr.bf16.mxu0 0
  %410 = vmatpush2.bf16.msra.mxu0 %v335
  %411 = vmatprep.subr.bf16.mxu0 0
  %412 = vmatpush2.bf16.msra.mxu0 %v334
  %413 = vmatprep.subr.bf16.mxu0 0
  %414 = vmatpush2.bf16.msra.mxu0 %v333
  %415 = vmatprep.subr.bf16.mxu0 0
  %416 = vmatpush2.bf16.msra.mxu0 %v332
  %417 = vmatprep.subr.bf16.mxu0 0
  %418 = vmatpush2.bf16.msra.mxu0 %v331
  %419 = vmatprep.mubr.bf16.mxu0 %v164
  %420 = vmatmul.mubr.bf16.gmra.mxu0 %v163
  %v421 = vpop.f32.mrf.mxu0
  %v422 = vadd.f32 0.0, %v421
  %v423 = vpop.f32.mrf.mxu0
  %v424 = vpop.f32.mrf.mxu0
  %v425 = vadd.f32 0.0, %v424
  %v426 = vpop.f32.mrf.mxu0
  %427 = vmatprep.mubr.bf16.mxu0 %v168
  %428 = vmatmul.mubr.bf16.gmra.mxu0 %v167
  %v429 = vpop.f32.mrf.mxu0
  %v430 = vadd.f32 0.0, %v429
  %v431 = vpop.f32.mrf.mxu0
  %v432 = vpop.f32.mrf.mxu0
  %v433 = vadd.f32 0.0, %v432
  %v434 = vpop.f32.mrf.mxu0
  %435 = vmatprep.mubr.bf16.mxu0 %v172
  %436 = vmatmul.mubr.bf16.gmra.mxu0 %v171
  %v437 = vpop.f32.mrf.mxu0
  %v438 = vadd.f32 0.0, %v437
  %v439 = vpop.f32.mrf.mxu0
  %v440 = vpop.f32.mrf.mxu0
  %v441 = vadd.f32 0.0, %v440
  %v442 = vpop.f32.mrf.mxu0
  %443 = vmatprep.mubr.bf16.mxu0 %v176
  %444 = vmatmul.mubr.bf16.gmra.mxu0 %v175
  %v445 = vpop.f32.mrf.mxu0
  %v446 = vadd.f32 0.0, %v445
  %v447 = vpop.f32.mrf.mxu0
  %v448 = vpop.f32.mrf.mxu0
  %v449 = vadd.f32 0.0, %v448
  %v450 = vpop.f32.mrf.mxu0
  %451 = vdwg.mxu0
  %452 = vmatprep.subr.bf16.mxu0 0
  %453 = vmatpush1.bf16.msra.mxu0 %v346
  %454 = vmatprep.subr.bf16.mxu0 0
  %455 = vmatpush1.bf16.msra.mxu0 %v345
  %456 = vmatprep.subr.bf16.mxu0 0
  %457 = vmatpush1.bf16.msra.mxu0 %v344
  %458 = vmatprep.subr.bf16.mxu0 0
  %459 = vmatpush1.bf16.msra.mxu0 %v343
  %460 = vmatprep.subr.bf16.mxu0 0
  %461 = vmatpush1.bf16.msra.mxu0 %v342
  %462 = vmatprep.subr.bf16.mxu0 0
  %463 = vmatpush1.bf16.msra.mxu0 %v341
  %464 = vmatprep.subr.bf16.mxu0 0
  %465 = vmatpush1.bf16.msra.mxu0 %v340
  %466 = vmatprep.subr.bf16.mxu0 0
  %467 = vmatpush1.bf16.msra.mxu0 %v339
  %468 = vmatprep.subr.bf16.mxu0 0
  %469 = vmatpush2.bf16.msra.mxu0 %v354
  %470 = vmatprep.subr.bf16.mxu0 0
  %471 = vmatpush2.bf16.msra.mxu0 %v353
  %472 = vmatprep.subr.bf16.mxu0 0
  %473 = vmatpush2.bf16.msra.mxu0 %v352
  %474 = vmatprep.subr.bf16.mxu0 0
  %475 = vmatpush2.bf16.msra.mxu0 %v351
  %476 = vmatprep.subr.bf16.mxu0 0
  %477 = vmatpush2.bf16.msra.mxu0 %v350
  %478 = vmatprep.subr.bf16.mxu0 0
  %479 = vmatpush2.bf16.msra.mxu0 %v349
  %480 = vmatprep.subr.bf16.mxu0 0
  %481 = vmatpush2.bf16.msra.mxu0 %v348
  %482 = vmatprep.subr.bf16.mxu0 0
  %483 = vmatpush2.bf16.msra.mxu0 %v347
  %484 = vmatprep.mubr.bf16.mxu0 %v166
  %485 = vmatmul.mubr.bf16.gmra.mxu0 %v165
  %v486 = vpop.f32.mrf.mxu0
  %v487 = vadd.f32 %v422, %v486
  %v488 = vpop.f32.mrf.mxu0
  %v489 = vpop.f32.mrf.mxu0
  %v490 = vadd.f32 %v425, %v489
  %v491 = vpop.f32.mrf.mxu0
  %492 = vmatprep.mubr.bf16.mxu0 %v170
  %493 = vmatmul.mubr.bf16.gmra.mxu0 %v169
  %v494 = vpop.f32.mrf.mxu0
  %v495 = vadd.f32 %v430, %v494
  %v496 = vpop.f32.mrf.mxu0
  %v497 = vpop.f32.mrf.mxu0
  %v498 = vadd.f32 %v433, %v497
  %v499 = vpop.f32.mrf.mxu0
  %500 = vmatprep.mubr.bf16.mxu0 %v174
  %501 = vmatmul.mubr.bf16.gmra.mxu0 %v173
  %v502 = vpop.f32.mrf.mxu0
  %v503 = vadd.f32 %v438, %v502
  %v504 = vpop.f32.mrf.mxu0
  %v505 = vpop.f32.mrf.mxu0
  %v506 = vadd.f32 %v441, %v505
  %v507 = vpop.f32.mrf.mxu0
  %508 = vmatprep.mubr.bf16.mxu0 %v178
  %509 = vmatmul.mubr.bf16.gmra.mxu0 %v177
  %v510 = vpop.f32.mrf.mxu0
  %v511 = vadd.f32 %v446, %v510
  %v512 = vpop.f32.mrf.mxu0
  %v513 = vpop.f32.mrf.mxu0
  %v514 = vadd.f32 %v449, %v513
  %v515 = vpop.f32.mrf.mxu0
  %516 = vdwg.mxu0
  %v517 = vadd.f32 %v27, %v487
  %v518 = vadd.f32 %v28, %v490
  %v519 = vadd.f32 %v29, %v495
  %v520 = vadd.f32 %v30, %v498
  %v521 = vadd.f32 %v31, %v503
  %v522 = vadd.f32 %v32, %v506
  %v523 = vadd.f32 %v33, %v511
  %v524 = vadd.f32 %v34, %v514
  %525 = vst [vmem:[#allocation2] sm:$0xff] %v517
  %526 = vst [vmem:[#allocation2 + $0x8] sm:$0xff] %v518
  %527 = vst [vmem:[#allocation2 + $0x10] sm:$0xff] %v519
  %528 = vst [vmem:[#allocation2 + $0x18] sm:$0xff] %v520
  %529 = vst [vmem:[#allocation2 + $0x20] sm:$0xff] %v521
  %530 = vst [vmem:[#allocation2 + $0x28] sm:$0xff] %v522
  %531 = vst [vmem:[#allocation2 + $0x30] sm:$0xff] %v523
  %532 = vst [vmem:[#allocation2 + $0x38] sm:$0xff] %v524
  // Predicated region
  $region14: #{_lambda_.13} parent=0 // pred_check
    %p533 = pneg %p15
  $region15: #{_lambda_.13} parent=0 // pred_check_branch
    %535 = sbr.rel (%p533) target = $region17
  $region16: #{_lambda_.13} parent=0 // pred_region
    %v536 = vld [vmem:[#allocation2] sm:$0xff]
    %v537 = vld [vmem:[#allocation2 + $0x8] sm:$0xff]
    %v538 = vld [vmem:[#allocation2 + $0x10] sm:$0xff]
    %v539 = vld [vmem:[#allocation2 + $0x18] sm:$0xff]
    %v540 = vld [vmem:[#allocation2 + $0x20] sm:$0xff]
    %v541 = vld [vmem:[#allocation2 + $0x28] sm:$0xff]
    %v542 = vld [vmem:[#allocation2 + $0x30] sm:$0xff]
    %v543 = vld [vmem:[#allocation2 + $0x38] sm:$0xff]
    %544 = vst [vmem:[%s2] sm:$0xff] %v536
    %545 = vst [vmem:[%s2 + $0x8] sm:$0xff] %v537
    %546 = vst [vmem:[%s2 + $0x10] sm:$0xff] %v538
    %547 = vst [vmem:[%s2 + $0x18] sm:$0xff] %v539
    %548 = vst [vmem:[%s2 + $0x20] sm:$0xff] %v540
    %549 = vst [vmem:[%s2 + $0x28] sm:$0xff] %v541
    %550 = vst [vmem:[%s2 + $0x30] sm:$0xff] %v542
    %551 = vst [vmem:[%s2 + $0x38] sm:$0xff] %v543
    %552 = vadd.xlane.f32.xlu0 %v536
    %v553 = vpop.xlane.xlu0 %552
    %554 = vadd.xlane.f32.xlu0 %v537
    %v555 = vpop.xlane.xlu0 %554
    %556 = vadd.xlane.f32.xlu0 %v538
    %v557 = vpop.xlane.xlu0 %556
    %558 = vadd.xlane.f32.xlu0 %v539
    %v559 = vpop.xlane.xlu0 %558
    %560 = vadd.xlane.f32.xlu0 %v540
    %v561 = vpop.xlane.xlu0 %560
    %562 = vadd.xlane.f32.xlu0 %v541
    %v563 = vpop.xlane.xlu0 %562
    %564 = vadd.xlane.f32.xlu0 %v542
    %v565 = vpop.xlane.xlu0 %564
    %566 = vadd.xlane.f32.xlu0 %v543
    %v567 = vpop.xlane.xlu0 %566
    %v568 = vmul.f32 %v536, %v536
    %v569 = vmul.f32 %v537, %v537
    %v570 = vmul.f32 %v538, %v538
    %v571 = vmul.f32 %v539, %v539
    %v572 = vmul.f32 %v540, %v540
    %v573 = vmul.f32 %v541, %v541
    %v574 = vmul.f32 %v542, %v542
    %v575 = vmul.f32 %v543, %v543
    %576 = vadd.xlane.f32.xlu0 %v568
    %v577 = vpop.xlane.xlu0 %576
    %578 = vadd.xlane.f32.xlu0 %v569
    %v579 = vpop.xlane.xlu0 %578
    %580 = vadd.xlane.f32.xlu0 %v570
    %v581 = vpop.xlane.xlu0 %580
    %582 = vadd.xlane.f32.xlu0 %v571
    %v583 = vpop.xlane.xlu0 %582
    %584 = vadd.xlane.f32.xlu0 %v572
    %v585 = vpop.xlane.xlu0 %584
    %586 = vadd.xlane.f32.xlu0 %v573
    %v587 = vpop.xlane.xlu0 %586
    %588 = vadd.xlane.f32.xlu0 %v574
    %v589 = vpop.xlane.xlu0 %588
    %590 = vadd.xlane.f32.xlu0 %v575
    %v591 = vpop.xlane.xlu0 %590
    %592 = vst [vmem:[%s3] sm:$0xff] %v553
    %593 = vst [vmem:[%s3 + $0x8] sm:$0xff] %v555
    %594 = vst [vmem:[%s3 + $0x10] sm:$0xff] %v557
    %595 = vst [vmem:[%s3 + $0x18] sm:$0xff] %v559
    %596 = vst [vmem:[%s3 + $0x20] sm:$0xff] %v561
    %597 = vst [vmem:[%s3 + $0x28] sm:$0xff] %v563
    %598 = vst [vmem:[%s3 + $0x30] sm:$0xff] %v565
    %599 = vst [vmem:[%s3 + $0x38] sm:$0xff] %v567
    %600 = vst [vmem:[%s4] sm:$0xff] %v577
    %601 = vst [vmem:[%s4 + $0x8] sm:$0xff] %v579
    %602 = vst [vmem:[%s4 + $0x10] sm:$0xff] %v581
    %603 = vst [vmem:[%s4 + $0x18] sm:$0xff] %v583
    %604 = vst [vmem:[%s4 + $0x20] sm:$0xff] %v585
    %605 = vst [vmem:[%s4 + $0x28] sm:$0xff] %v587
    %606 = vst [vmem:[%s4 + $0x30] sm:$0xff] %v589
    %607 = vst [vmem:[%s4 + $0x38] sm:$0xff] %v591
  $region17: #{_lambda_.13} parent=0 // pred_fallthru
    _
  // Predicated region
  $region18: #{_lambda_.13} parent=0 // pred_check
    _
  $region19: #{_lambda_.13} parent=0 // pred_check_branch
    %609 = sbr.rel (0) target = $region21
  $region20: #{_lambda_.13} parent=0 // pred_region
    _
  $region21: #{_lambda_.13} parent=0 // pred_fallthru
    _
  // Predicated region
  $region22: #{_lambda_.13} parent=0 // pred_check
    _
  $region23: #{_lambda_.13} parent=0 // pred_check_branch
    %611 = sbr.rel (0) target = $region25
  $region24: #{_lambda_.13} parent=0 // pred_region
    _
  $region25: #{_lambda_.13} parent=0 // pred_fallthru
    _
  // Predicated region
  $region26: #{_lambda_.13} parent=0 // pred_check
    _
  $region27: #{_lambda_.13} parent=0 // pred_check_branch
    %613 = sbr.rel (0) target = $region29
  $region28: #{_lambda_.13} parent=0 // pred_region
    _
  $region29: #{_lambda_.13} parent=0 // pred_fallthru
    _
  // Predicated region
  $region30: #{_lambda_.13} parent=0 // pred_check
    _
  $region31: #{_lambda_.13} parent=0 // pred_check_branch
    %615 = sbr.rel (0) target = $region33
  $region32: #{_lambda_.13} parent=0 // pred_region
    _
  $region33: #{_lambda_.13} parent=0 // pred_fallthru
    _
  // Predicated region
  $region34: #{_lambda_.13} parent=0 // pred_check
    _
  $region35: #{_lambda_.13} parent=0 // pred_check_branch
    %617 = sbr.rel (0) target = $region37
  $region36: #{_lambda_.13} parent=0 // pred_region
    _
  $region37: #{_lambda_.13} parent=0 // pred_fallthru
    _
  // Predicated region
  $region38: #{_lambda_.13} parent=0 // pred_check
    _
  $region39: #{_lambda_.13} parent=0 // pred_check_branch
    %619 = sbr.rel (0) target = $region41
  $region40: #{_lambda_.13} parent=0 // pred_region
    _
  $region41: #{_lambda_.13} parent=0 // pred_fallthru
    _

// kernel: _lambda_.14
$region0: #{_lambda_.14}
  #allocation0 [shape = 'u32[]', space=smem, size = 0x4, offset = 0x4, fixed_abs, tag = 'smem constant byte address 0x4 - core index']
  #allocation1 [shape = 'u32[144,128]{1,0:T(1,128)}', space=vmem, size = 0x12000, scoped, tag = 'internal scratch']
  %s0 = inlined_call_operand.vmem [shape: f32[64,128], index: 0, kind: input, shape index: {}]
  %s1 = inlined_call_operand.vmem [shape: f32[64,1], index: 1, kind: input, shape index: {}]
  %s2 = inlined_call_operand.vmem [shape: f32[64,1], index: 2, kind: input, shape index: {}]
  %s3 = inlined_call_operand.vmem [shape: bf16[64,128], index: 3, kind: output, shape index: {}]
  %s4 = sld [smem:[#allocation0]]
  $region22: #{_lambda_.14} parent=0
    _
  %s6 = ssub.s32 1, %s4
  %s7 = scalar_select 0, %s6, %s4
  // Predicated region
  $region2: #{_lambda_.14} parent=0 // pred_check
    _
  $region3: #{_lambda_.14} parent=0 // pred_check_branch
    %9 = sbr.rel (0) target = $region5
  $region4: #{_lambda_.14} parent=0 // pred_region
    _
  $region5: #{_lambda_.14} parent=0 // pred_fallthru
    _
  // Predicated region
  $region6: #{_lambda_.14} parent=0 // pred_check
    _
  $region7: #{_lambda_.14} parent=0 // pred_check_branch
    %11 = sbr.rel (0) target = $region9
  $region8: #{_lambda_.14} parent=0 // pred_region
    _
  $region9: #{_lambda_.14} parent=0 // pred_fallthru
    _
  // Predicated region
  $region10: #{_lambda_.14} parent=0 // pred_check
    _
  $region11: #{_lambda_.14} parent=0 // pred_check_branch
    %13 = sbr.rel (0) target = $region13
  $region12: #{_lambda_.14} parent=0 // pred_region
    _
  $region13: #{_lambda_.14} parent=0 // pred_fallthru
    _
  %v14 = vld [vmem:[%s0] sm:$0xff]
  %v15 = vld [vmem:[%s0 + $0x8] sm:$0xff]
  %v16 = vld [vmem:[%s0 + $0x10] sm:$0xff]
  %v17 = vld [vmem:[%s0 + $0x18] sm:$0xff]
  %v18 = vld [vmem:[%s0 + $0x20] sm:$0xff]
  %v19 = vld [vmem:[%s0 + $0x28] sm:$0xff]
  %v20 = vld [vmem:[%s0 + $0x30] sm:$0xff]
  %v21 = vld [vmem:[%s0 + $0x38] sm:$0xff]
  %v22 = vld [vmem:[%s1] sm:$0xff]
  %v23 = vld [vmem:[%s1 + $0x8] sm:$0xff]
  %v24 = vld [vmem:[%s1 + $0x10] sm:$0xff]
  %v25 = vld [vmem:[%s1 + $0x18] sm:$0xff]
  %v26 = vld [vmem:[%s1 + $0x20] sm:$0xff]
  %v27 = vld [vmem:[%s1 + $0x28] sm:$0xff]
  %v28 = vld [vmem:[%s1 + $0x30] sm:$0xff]
  %v29 = vld [vmem:[%s1 + $0x38] sm:$0xff]
  %31 = vset.pattern.permute.xlu0 0
  %32 = vperm.xlu0 %31, %v22
  %v33 = vpop.permute.xlu0 %32
  %36 = vset.pattern.permute.xlu0 0
  %37 = vperm.xlu0 %36, %v23
  %v38 = vpop.permute.xlu0 %37
  %41 = vset.pattern.permute.xlu0 0
  %42 = vperm.xlu0 %41, %v24
  %v43 = vpop.permute.xlu0 %42
  %46 = vset.pattern.permute.xlu0 0
  %47 = vperm.xlu0 %46, %v25
  %v48 = vpop.permute.xlu0 %47
  %51 = vset.pattern.permute.xlu0 0
  %52 = vperm.xlu0 %51, %v26
  %v53 = vpop.permute.xlu0 %52
  %56 = vset.pattern.permute.xlu0 0
  %57 = vperm.xlu0 %56, %v27
  %v58 = vpop.permute.xlu0 %57
  %61 = vset.pattern.permute.xlu0 0
  %62 = vperm.xlu0 %61, %v28
  %v63 = vpop.permute.xlu0 %62
  %66 = vset.pattern.permute.xlu0 0
  %67 = vperm.xlu0 %66, %v29
  %v68 = vpop.permute.xlu0 %67
  %v70 = vmul.f32 %v14, %v33
  %v71 = vmul.f32 %v15, %v38
  %v72 = vmul.f32 %v16, %v43
  %v73 = vmul.f32 %v17, %v48
  %v74 = vmul.f32 %v18, %v53
  %v75 = vmul.f32 %v19, %v58
  %v76 = vmul.f32 %v20, %v63
  %v77 = vmul.f32 %v21, %v68
  %v78 = vld [vmem:[%s2] sm:$0xff]
  %v79 = vld [vmem:[%s2 + $0x8] sm:$0xff]
  %v80 = vld [vmem:[%s2 + $0x10] sm:$0xff]
  %v81 = vld [vmem:[%s2 + $0x18] sm:$0xff]
  %v82 = vld [vmem:[%s2 + $0x20] sm:$0xff]
  %v83 = vld [vmem:[%s2 + $0x28] sm:$0xff]
  %v84 = vld [vmem:[%s2 + $0x30] sm:$0xff]
  %v85 = vld [vmem:[%s2 + $0x38] sm:$0xff]
  %87 = vset.pattern.permute.xlu0 0
  %88 = vperm.xlu0 %87, %v78
  %v89 = vpop.permute.xlu0 %88
  %92 = vset.pattern.permute.xlu0 0
  %93 = vperm.xlu0 %92, %v79
  %v94 = vpop.permute.xlu0 %93
  %97 = vset.pattern.permute.xlu0 0
  %98 = vperm.xlu0 %97, %v80
  %v99 = vpop.permute.xlu0 %98
  %102 = vset.pattern.permute.xlu0 0
  %103 = vperm.xlu0 %102, %v81
  %v104 = vpop.permute.xlu0 %103
  %107 = vset.pattern.permute.xlu0 0
  %108 = vperm.xlu0 %107, %v82
  %v109 = vpop.permute.xlu0 %108
  %112 = vset.pattern.permute.xlu0 0
  %113 = vperm.xlu0 %112, %v83
  %v114 = vpop.permute.xlu0 %113
  %117 = vset.pattern.permute.xlu0 0
  %118 = vperm.xlu0 %117, %v84
  %v119 = vpop.permute.xlu0 %118
  %122 = vset.pattern.permute.xlu0 0
  %123 = vperm.xlu0 %122, %v85
  %v124 = vpop.permute.xlu0 %123
  %v126 = vadd.f32 %v70, %v89
  %v127 = vadd.f32 %v71, %v94
  %v128 = vadd.f32 %v72, %v99
  %v129 = vadd.f32 %v73, %v104
  %v130 = vadd.f32 %v74, %v109
  %v131 = vadd.f32 %v75, %v114
  %v132 = vadd.f32 %v76, %v119
  %v133 = vadd.f32 %v77, %v124
  %vm134 = vcmp.ge.f32.partialorder %v126, 0.0
  %vm135 = vcmp.ge.f32.partialorder %v127, 0.0
  %vm136 = vcmp.ge.f32.partialorder %v128, 0.0
  %vm137 = vcmp.ge.f32.partialorder %v129, 0.0
  %vm138 = vcmp.ge.f32.partialorder %v130, 0.0
  %vm139 = vcmp.ge.f32.partialorder %v131, 0.0
  %vm140 = vcmp.ge.f32.partialorder %v132, 0.0
  %vm141 = vcmp.ge.f32.partialorder %v133, 0.0
  %v142 = vmul.f32 %v126, 0.2
  %v143 = vmul.f32 %v127, 0.2
  %v144 = vmul.f32 %v128, 0.2
  %v145 = vmul.f32 %v129, 0.2
  %v146 = vmul.f32 %v130, 0.2
  %v147 = vmul.f32 %v131, 0.2
  %v148 = vmul.f32 %v132, 0.2
  %v149 = vmul.f32 %v133, 0.2
  %v150 = vsel %vm134, %v126, %v142
  %v151 = vsel %vm135, %v127, %v143
  %v152 = vsel %vm136, %v128, %v144
  %v153 = vsel %vm137, %v129, %v145
  %v154 = vsel %vm138, %v130, %v146
  %v155 = vsel %vm139, %v131, %v147
  %v156 = vsel %vm140, %v132, %v148
  %v157 = vsel %vm141, %v133, %v149
  %v158 = vpack.c.bf16 %v151, %v150
  %v159 = vpack.c.bf16 %v153, %v152
  %v160 = vpack.c.bf16 %v155, %v154
  %v161 = vpack.c.bf16 %v157, %v156
  %v166 = vunpack.c.l.b16 %v158
  %v167 = vunpack.c.h.b16 %v158
  %v168 = vunpack.c.l.b16 %v159
  %v169 = vunpack.c.h.b16 %v159
  %v170 = vunpack.c.l.b16 %v160
  %v171 = vunpack.c.h.b16 %v160
  %v172 = vunpack.c.l.b16 %v161
  %v173 = vunpack.c.h.b16 %v161
  %v174 = vpack.c.b16 %v166, %v166
  %v175 = vpack.c.b16 %v167, %v167
  %v176 = vpack.c.b16 %v168, %v168
  %v177 = vpack.c.b16 %v169, %v169
  %v178 = vpack.c.b16 %v170, %v170
  %v179 = vpack.c.b16 %v171, %v171
  %v180 = vpack.c.b16 %v172, %v172
  %v181 = vpack.c.b16 %v173, %v173
  %190 = vst [vmem:[%s3] sm:$0xf] %v174
  %191 = vst [vmem:[%s3 + $0x4] sm:$0xf] %v175
  %192 = vst [vmem:[%s3 + $0x8] sm:$0xf] %v176
  %193 = vst [vmem:[%s3 + $0xc] sm:$0xf] %v177
  %194 = vst [vmem:[%s3 + $0x10] sm:$0xf] %v178
  %195 = vst [vmem:[%s3 + $0x14] sm:$0xf] %v179
  %196 = vst [vmem:[%s3 + $0x18] sm:$0xf] %v180
  %197 = vst [vmem:[%s3 + $0x1c] sm:$0xf] %v181
  // Predicated region
  $region14: #{_lambda_.14} parent=0 // pred_check
    _
  $region15: #{_lambda_.14} parent=0 // pred_check_branch
    %199 = sbr.rel (0) target = $region17
  $region16: #{_lambda_.14} parent=0 // pred_region
    _
  $region17: #{_lambda_.14} parent=0 // pred_fallthru
    _
  // Predicated region
  $region18: #{_lambda_.14} parent=0 // pred_check
    _
  $region19: #{_lambda_.14} parent=0 // pred_check_branch
    %201 = sbr.rel (0) target = $region21
  $region20: #{_lambda_.14} parent=0 // pred_region
    _
  $region21: #{_lambda_.14} parent=0 // pred_fallthru
    _

// kernel: _lambda_.15
$region0: #{_lambda_.15}
  #allocation0 [shape = 'u32[]', space=smem, size = 0x4, offset = 0x4, fixed_abs, tag = 'smem constant byte address 0x4 - core index']
  #allocation1 [shape = 'u32[144,128]{1,0:T(1,128)}', space=vmem, size = 0x12000, scoped, tag = 'internal scratch']
  #allocation2 [shape = 'f32[8,128]{1,0:T(8,128)}', space=vmem, size = 0x1000, scoped, tag = 'scratch operand']
  %s0 = inlined_call_operand.vmem [shape: bf16[1024,128], index: 0, kind: input, shape index: {}]
  %s1 = inlined_call_operand.vmem [shape: bf16[8,1024], index: 1, kind: input, shape index: {}]
  %s2 = inlined_call_operand.vmem [shape: f32[8,1], index: 2, kind: input, shape index: {}]
  %s3 = inlined_call_operand.vmem [shape: f32[8,128], index: 3, kind: output, shape index: {}]
  %s4 = sld [smem:[#allocation0]]
  $region30: #{_lambda_.15} parent=0
    _
  %s6 = ssub.s32 1, %s4
  %s7 = scalar_select 0, %s6, %s4
  // Predicated region
  $region2: #{_lambda_.15} parent=0 // pred_check
    _
  $region3: #{_lambda_.15} parent=0 // pred_check_branch
    %9 = sbr.rel (0) target = $region5
  $region4: #{_lambda_.15} parent=0 // pred_region
    _
  $region5: #{_lambda_.15} parent=0 // pred_fallthru
    _
  // Predicated region
  $region6: #{_lambda_.15} parent=0 // pred_check
    _
  $region7: #{_lambda_.15} parent=0 // pred_check_branch
    %11 = sbr.rel (0) target = $region9
  $region8: #{_lambda_.15} parent=0 // pred_region
    _
  $region9: #{_lambda_.15} parent=0 // pred_fallthru
    _
  // Predicated region
  $region10: #{_lambda_.15} parent=0 // pred_check
    _
  $region11: #{_lambda_.15} parent=0 // pred_check_branch
    %13 = sbr.rel (0) target = $region13
  $region12: #{_lambda_.15} parent=0 // pred_region
    _
  $region13: #{_lambda_.15} parent=0 // pred_fallthru
    _
  %p15 = scmp.eq.s32.totalorder 0, 0
  // Predicated region
  $region14: #{_lambda_.15} parent=0 // pred_check
    %p16 = pneg %p15
  $region15: #{_lambda_.15} parent=0 // pred_check_branch
    %18 = sbr.rel (%p16) target = $region17
  $region16: #{_lambda_.15} parent=0 // pred_region
    %19 = vst [vmem:[#allocation2] sm:$0xff] 0.0
  $region17: #{_lambda_.15} parent=0 // pred_fallthru
    _
  %v20 = vld [vmem:[#allocation2] sm:$0xff]
  %v21 = vld [vmem:[%s1] sm:$0xff]
  %v22 = vld [vmem:[%s1 + $0x8] sm:$0xff]
  %v23 = vld [vmem:[%s1 + $0x10] sm:$0xff]
  %v24 = vld [vmem:[%s1 + $0x18] sm:$0xff]
  %v25 = vld [vmem:[%s0] sm:$0xf]
  %v26 = vld [vmem:[%s0 + $0x4] sm:$0xf]
  %v27 = vld [vmem:[%s0 + $0x8] sm:$0xf]
  %v28 = vld [vmem:[%s0 + $0xc] sm:$0xf]
  %v29 = vld [vmem:[%s0 + $0x10] sm:$0xf]
  %v30 = vld [vmem:[%s0 + $0x14] sm:$0xf]
  %v31 = vld [vmem:[%s0 + $0x18] sm:$0xf]
  %v32 = vld [vmem:[%s0 + $0x1c] sm:$0xf]
  %v33 = vld [vmem:[%s0 + $0x20] sm:$0xf]
  %v34 = vld [vmem:[%s0 + $0x24] sm:$0xf]
  %v35 = vld [vmem:[%s0 + $0x28] sm:$0xf]
  %v36 = vld [vmem:[%s0 + $0x2c] sm:$0xf]
  %v37 = vld [vmem:[%s0 + $0x30] sm:$0xf]
  %v38 = vld [vmem:[%s0 + $0x34] sm:$0xf]
  %v39 = vld [vmem:[%s0 + $0x38] sm:$0xf]
  %v40 = vld [vmem:[%s0 + $0x3c] sm:$0xf]
  %v41 = vld [vmem:[%s0 + $0x40] sm:$0xf]
  %v42 = vld [vmem:[%s0 + $0x44] sm:$0xf]
  %v43 = vld [vmem:[%s0 + $0x48] sm:$0xf]
  %v44 = vld [vmem:[%s0 + $0x4c] sm:$0xf]
  %v45 = vld [vmem:[%s0 + $0x50] sm:$0xf]
  %v46 = vld [vmem:[%s0 + $0x54] sm:$0xf]
  %v47 = vld [vmem:[%s0 + $0x58] sm:$0xf]
  %v48 = vld [vmem:[%s0 + $0x5c] sm:$0xf]
  %v49 = vld [vmem:[%s0 + $0x60] sm:$0xf]
  %v50 = vld [vmem:[%s0 + $0x64] sm:$0xf]
  %v51 = vld [vmem:[%s0 + $0x68] sm:$0xf]
  %v52 = vld [vmem:[%s0 + $0x6c] sm:$0xf]
  %v53 = vld [vmem:[%s0 + $0x70] sm:$0xf]
  %v54 = vld [vmem:[%s0 + $0x74] sm:$0xf]
  %v55 = vld [vmem:[%s0 + $0x78] sm:$0xf]
  %v56 = vld [vmem:[%s0 + $0x7c] sm:$0xf]
  %v57 = vld [vmem:[%s0 + $0x80] sm:$0xf]
  %v58 = vld [vmem:[%s0 + $0x84] sm:$0xf]
  %v59 = vld [vmem:[%s0 + $0x88] sm:$0xf]
  %v60 = vld [vmem:[%s0 + $0x8c] sm:$0xf]
  %v61 = vld [vmem:[%s0 + $0x90] sm:$0xf]
  %v62 = vld [vmem:[%s0 + $0x94] sm:$0xf]
  %v63 = vld [vmem:[%s0 + $0x98] sm:$0xf]
  %v64 = vld [vmem:[%s0 + $0x9c] sm:$0xf]
  %v65 = vld [vmem:[%s0 + $0xa0] sm:$0xf]
  %v66 = vld [vmem:[%s0 + $0xa4] sm:$0xf]
  %v67 = vld [vmem:[%s0 + $0xa8] sm:$0xf]
  %v68 = vld [vmem:[%s0 + $0xac] sm:$0xf]
  %v69 = vld [vmem:[%s0 + $0xb0] sm:$0xf]
  %v70 = vld [vmem:[%s0 + $0xb4] sm:$0xf]
  %v71 = vld [vmem:[%s0 + $0xb8] sm:$0xf]
  %v72 = vld [vmem:[%s0 + $0xbc] sm:$0xf]
  %v73 = vld [vmem:[%s0 + $0xc0] sm:$0xf]
  %v74 = vld [vmem:[%s0 + $0xc4] sm:$0xf]
  %v75 = vld [vmem:[%s0 + $0xc8] sm:$0xf]
  %v76 = vld [vmem:[%s0 + $0xcc] sm:$0xf]
  %v77 = vld [vmem:[%s0 + $0xd0] sm:$0xf]
  %v78 = vld [vmem:[%s0 + $0xd4] sm:$0xf]
  %v79 = vld [vmem:[%s0 + $0xd8] sm:$0xf]
  %v80 = vld [vmem:[%s0 + $0xdc] sm:$0xf]
  %v81 = vld [vmem:[%s0 + $0xe0] sm:$0xf]
  %v82 = vld [vmem:[%s0 + $0xe4] sm:$0xf]
  %v83 = vld [vmem:[%s0 + $0xe8] sm:$0xf]
  %v84 = vld [vmem:[%s0 + $0xec] sm:$0xf]
  %v85 = vld [vmem:[%s0 + $0xf0] sm:$0xf]
  %v86 = vld [vmem:[%s0 + $0xf4] sm:$0xf]
  %v87 = vld [vmem:[%s0 + $0xf8] sm:$0xf]
  %v88 = vld [vmem:[%s0 + $0xfc] sm:$0xf]
  %v89 = vld [vmem:[%s0 + $0x100] sm:$0xf]
  %v90 = vld [vmem:[%s0 + $0x104] sm:$0xf]
  %v91 = vld [vmem:[%s0 + $0x108] sm:$0xf]
  %v92 = vld [vmem:[%s0 + $0x10c] sm:$0xf]
  %v93 = vld [vmem:[%s0 + $0x110] sm:$0xf]
  %v94 = vld [vmem:[%s0 + $0x114] sm:$0xf]
  %v95 = vld [vmem:[%s0 + $0x118] sm:$0xf]
  %v96 = vld [vmem:[%s0 + $0x11c] sm:$0xf]
  %v97 = vld [vmem:[%s0 + $0x120] sm:$0xf]
  %v98 = vld [vmem:[%s0 + $0x124] sm:$0xf]
  %v99 = vld [vmem:[%s0 + $0x128] sm:$0xf]
  %v100 = vld [vmem:[%s0 + $0x12c] sm:$0xf]
  %v101 = vld [vmem:[%s0 + $0x130] sm:$0xf]
  %v102 = vld [vmem:[%s0 + $0x134] sm:$0xf]
  %v103 = vld [vmem:[%s0 + $0x138] sm:$0xf]
  %v104 = vld [vmem:[%s0 + $0x13c] sm:$0xf]
  %v105 = vld [vmem:[%s0 + $0x140] sm:$0xf]
  %v106 = vld [vmem:[%s0 + $0x144] sm:$0xf]
  %v107 = vld [vmem:[%s0 + $0x148] sm:$0xf]
  %v108 = vld [vmem:[%s0 + $0x14c] sm:$0xf]
  %v109 = vld [vmem:[%s0 + $0x150] sm:$0xf]
  %v110 = vld [vmem:[%s0 + $0x154] sm:$0xf]
  %v111 = vld [vmem:[%s0 + $0x158] sm:$0xf]
  %v112 = vld [vmem:[%s0 + $0x15c] sm:$0xf]
  %v113 = vld [vmem:[%s0 + $0x160] sm:$0xf]
  %v114 = vld [vmem:[%s0 + $0x164] sm:$0xf]
  %v115 = vld [vmem:[%s0 + $0x168] sm:$0xf]
  %v116 = vld [vmem:[%s0 + $0x16c] sm:$0xf]
  %v117 = vld [vmem:[%s0 + $0x170] sm:$0xf]
  %v118 = vld [vmem:[%s0 + $0x174] sm:$0xf]
  %v119 = vld [vmem:[%s0 + $0x178] sm:$0xf]
  %v120 = vld [vmem:[%s0 + $0x17c] sm:$0xf]
  %v121 = vld [vmem:[%s0 + $0x180] sm:$0xf]
  %v122 = vld [vmem:[%s0 + $0x184] sm:$0xf]
  %v123 = vld [vmem:[%s0 + $0x188] sm:$0xf]
  %v124 = vld [vmem:[%s0 + $0x18c] sm:$0xf]
  %v125 = vld [vmem:[%s0 + $0x190] sm:$0xf]
  %v126 = vld [vmem:[%s0 + $0x194] sm:$0xf]
  %v127 = vld [vmem:[%s0 + $0x198] sm:$0xf]
  %v128 = vld [vmem:[%s0 + $0x19c] sm:$0xf]
  %v129 = vld [vmem:[%s0 + $0x1a0] sm:$0xf]
  %v130 = vld [vmem:[%s0 + $0x1a4] sm:$0xf]
  %v131 = vld [vmem:[%s0 + $0x1a8] sm:$0xf]
  %v132 = vld [vmem:[%s0 + $0x1ac] sm:$0xf]
  %v133 = vld [vmem:[%s0 + $0x1b0] sm:$0xf]
  %v134 = vld [vmem:[%s0 + $0x1b4] sm:$0xf]
  %v135 = vld [vmem:[%s0 + $0x1b8] sm:$0xf]
  %v136 = vld [vmem:[%s0 + $0x1bc] sm:$0xf]
  %v137 = vld [vmem:[%s0 + $0x1c0] sm:$0xf]
  %v138 = vld [vmem:[%s0 + $0x1c4] sm:$0xf]
  %v139 = vld [vmem:[%s0 + $0x1c8] sm:$0xf]
  %v140 = vld [vmem:[%s0 + $0x1cc] sm:$0xf]
  %v141 = vld [vmem:[%s0 + $0x1d0] sm:$0xf]
  %v142 = vld [vmem:[%s0 + $0x1d4] sm:$0xf]
  %v143 = vld [vmem:[%s0 + $0x1d8] sm:$0xf]
  %v144 = vld [vmem:[%s0 + $0x1dc] sm:$0xf]
  %v145 = vld [vmem:[%s0 + $0x1e0] sm:$0xf]
  %v146 = vld [vmem:[%s0 + $0x1e4] sm:$0xf]
  %v147 = vld [vmem:[%s0 + $0x1e8] sm:$0xf]
  %v148 = vld [vmem:[%s0 + $0x1ec] sm:$0xf]
  %v149 = vld [vmem:[%s0 + $0x1f0] sm:$0xf]
  %v150 = vld [vmem:[%s0 + $0x1f4] sm:$0xf]
  %v151 = vld [vmem:[%s0 + $0x1f8] sm:$0xf]
  %v152 = vld [vmem:[%s0 + $0x1fc] sm:$0xf]
  %v157 = vunpack.c.l.b16 %v21
  %v158 = vunpack.c.h.b16 %v21
  %v159 = vunpack.c.l.b16 %v22
  %v160 = vunpack.c.h.b16 %v22
  %v161 = vunpack.c.l.b16 %v23
  %v162 = vunpack.c.h.b16 %v23
  %v163 = vunpack.c.l.b16 %v24
  %v164 = vunpack.c.h.b16 %v24
  %v165 = vpack.c.b16 %v157, %v157
  %v166 = vpack.c.b16 %v158, %v158
  %v167 = vpack.c.b16 %v159, %v159
  %v168 = vpack.c.b16 %v160, %v160
  %v169 = vpack.c.b16 %v161, %v161
  %v170 = vpack.c.b16 %v162, %v162
  %v171 = vpack.c.b16 %v163, %v163
  %v172 = vpack.c.b16 %v164, %v164
  %v309 = vunpack.c.l.b16 %v25
  %v310 = vunpack.c.l.b16 %v26
  %v311 = vunpack.c.l.b16 %v27
  %v312 = vunpack.c.l.b16 %v28
  %v313 = vunpack.c.l.b16 %v29
  %v314 = vunpack.c.l.b16 %v30
  %v315 = vunpack.c.l.b16 %v31
  %v316 = vunpack.c.l.b16 %v32
  %v317 = vunpack.c.l.b16 %v33
  %v318 = vunpack.c.l.b16 %v34
  %v319 = vunpack.c.l.b16 %v35
  %v320 = vunpack.c.l.b16 %v36
  %v321 = vunpack.c.l.b16 %v37
  %v322 = vunpack.c.l.b16 %v38
  %v323 = vunpack.c.l.b16 %v39
  %v324 = vunpack.c.l.b16 %v40
  %v325 = vunpack.c.l.b16 %v41
  %v326 = vunpack.c.l.b16 %v42
  %v327 = vunpack.c.l.b16 %v43
  %v328 = vunpack.c.l.b16 %v44
  %v329 = vunpack.c.l.b16 %v45
  %v330 = vunpack.c.l.b16 %v46
  %v331 = vunpack.c.l.b16 %v47
  %v332 = vunpack.c.l.b16 %v48
  %v333 = vunpack.c.l.b16 %v49
  %v334 = vunpack.c.l.b16 %v50
  %v335 = vunpack.c.l.b16 %v51
  %v336 = vunpack.c.l.b16 %v52
  %v337 = vunpack.c.l.b16 %v53
  %v338 = vunpack.c.l.b16 %v54
  %v339 = vunpack.c.l.b16 %v55
  %v340 = vunpack.c.l.b16 %v56
  %v341 = vunpack.c.l.b16 %v57
  %v342 = vunpack.c.l.b16 %v58
  %v343 = vunpack.c.l.b16 %v59
  %v344 = vunpack.c.l.b16 %v60
  %v345 = vunpack.c.l.b16 %v61
  %v346 = vunpack.c.l.b16 %v62
  %v347 = vunpack.c.l.b16 %v63
  %v348 = vunpack.c.l.b16 %v64
  %v349 = vunpack.c.l.b16 %v65
  %v350 = vunpack.c.l.b16 %v66
  %v351 = vunpack.c.l.b16 %v67
  %v352 = vunpack.c.l.b16 %v68
  %v353 = vunpack.c.l.b16 %v69
  %v354 = vunpack.c.l.b16 %v70
  %v355 = vunpack.c.l.b16 %v71
  %v356 = vunpack.c.l.b16 %v72
  %v357 = vunpack.c.l.b16 %v73
  %v358 = vunpack.c.l.b16 %v74
  %v359 = vunpack.c.l.b16 %v75
  %v360 = vunpack.c.l.b16 %v76
  %v361 = vunpack.c.l.b16 %v77
  %v362 = vunpack.c.l.b16 %v78
  %v363 = vunpack.c.l.b16 %v79
  %v364 = vunpack.c.l.b16 %v80
  %v365 = vunpack.c.l.b16 %v81
  %v366 = vunpack.c.l.b16 %v82
  %v367 = vunpack.c.l.b16 %v83
  %v368 = vunpack.c.l.b16 %v84
  %v369 = vunpack.c.l.b16 %v85
  %v370 = vunpack.c.l.b16 %v86
  %v371 = vunpack.c.l.b16 %v87
  %v372 = vunpack.c.l.b16 %v88
  %v373 = vunpack.c.l.b16 %v89
  %v374 = vunpack.c.l.b16 %v90
  %v375 = vunpack.c.l.b16 %v91
  %v376 = vunpack.c.l.b16 %v92
  %v377 = vunpack.c.l.b16 %v93
  %v378 = vunpack.c.l.b16 %v94
  %v379 = vunpack.c.l.b16 %v95
  %v380 = vunpack.c.l.b16 %v96
  %v381 = vunpack.c.l.b16 %v97
  %v382 = vunpack.c.l.b16 %v98
  %v383 = vunpack.c.l.b16 %v99
  %v384 = vunpack.c.l.b16 %v100
  %v385 = vunpack.c.l.b16 %v101
  %v386 = vunpack.c.l.b16 %v102
  %v387 = vunpack.c.l.b16 %v103
  %v388 = vunpack.c.l.b16 %v104
  %v389 = vunpack.c.l.b16 %v105
  %v390 = vunpack.c.l.b16 %v106
  %v391 = vunpack.c.l.b16 %v107
  %v392 = vunpack.c.l.b16 %v108
  %v393 = vunpack.c.l.b16 %v109
  %v394 = vunpack.c.l.b16 %v110
  %v395 = vunpack.c.l.b16 %v111
  %v396 = vunpack.c.l.b16 %v112
  %v397 = vunpack.c.l.b16 %v113
  %v398 = vunpack.c.l.b16 %v114
  %v399 = vunpack.c.l.b16 %v115
  %v400 = vunpack.c.l.b16 %v116
  %v401 = vunpack.c.l.b16 %v117
  %v402 = vunpack.c.l.b16 %v118
  %v403 = vunpack.c.l.b16 %v119
  %v404 = vunpack.c.l.b16 %v120
  %v405 = vunpack.c.l.b16 %v121
  %v406 = vunpack.c.l.b16 %v122
  %v407 = vunpack.c.l.b16 %v123
  %v408 = vunpack.c.l.b16 %v124
  %v409 = vunpack.c.l.b16 %v125
  %v410 = vunpack.c.l.b16 %v126
  %v411 = vunpack.c.l.b16 %v127
  %v412 = vunpack.c.l.b16 %v128
  %v413 = vunpack.c.l.b16 %v129
  %v414 = vunpack.c.l.b16 %v130
  %v415 = vunpack.c.l.b16 %v131
  %v416 = vunpack.c.l.b16 %v132
  %v417 = vunpack.c.l.b16 %v133
  %v418 = vunpack.c.l.b16 %v134
  %v419 = vunpack.c.l.b16 %v135
  %v420 = vunpack.c.l.b16 %v136
  %v421 = vunpack.c.l.b16 %v137
  %v422 = vunpack.c.l.b16 %v138
  %v423 = vunpack.c.l.b16 %v139
  %v424 = vunpack.c.l.b16 %v140
  %v425 = vunpack.c.l.b16 %v141
  %v426 = vunpack.c.l.b16 %v142
  %v427 = vunpack.c.l.b16 %v143
  %v428 = vunpack.c.l.b16 %v144
  %v429 = vunpack.c.l.b16 %v145
  %v430 = vunpack.c.l.b16 %v146
  %v431 = vunpack.c.l.b16 %v147
  %v432 = vunpack.c.l.b16 %v148
  %v433 = vunpack.c.l.b16 %v149
  %v434 = vunpack.c.l.b16 %v150
  %v435 = vunpack.c.l.b16 %v151
  %v436 = vunpack.c.l.b16 %v152
  %v437 = vpack.c.b16 %v310, %v309
  %v438 = vpack.c.b16 %v312, %v311
  %v439 = vpack.c.b16 %v314, %v313
  %v440 = vpack.c.b16 %v316, %v315
  %v441 = vpack.c.b16 %v318, %v317
  %v442 = vpack.c.b16 %v320, %v319
  %v443 = vpack.c.b16 %v322, %v321
  %v444 = vpack.c.b16 %v324, %v323
  %v445 = vpack.c.b16 %v326, %v325
  %v446 = vpack.c.b16 %v328, %v327
  %v447 = vpack.c.b16 %v330, %v329
  %v448 = vpack.c.b16 %v332, %v331
  %v449 = vpack.c.b16 %v334, %v333
  %v450 = vpack.c.b16 %v336, %v335
  %v451 = vpack.c.b16 %v338, %v337
  %v452 = vpack.c.b16 %v340, %v339
  %v453 = vpack.c.b16 %v342, %v341
  %v454 = vpack.c.b16 %v344, %v343
  %v455 = vpack.c.b16 %v346, %v345
  %v456 = vpack.c.b16 %v348, %v347
  %v457 = vpack.c.b16 %v350, %v349
  %v458 = vpack.c.b16 %v352, %v351
  %v459 = vpack.c.b16 %v354, %v353
  %v460 = vpack.c.b16 %v356, %v355
  %v461 = vpack.c.b16 %v358, %v357
  %v462 = vpack.c.b16 %v360, %v359
  %v463 = vpack.c.b16 %v362, %v361
  %v464 = vpack.c.b16 %v364, %v363
  %v465 = vpack.c.b16 %v366, %v365
  %v466 = vpack.c.b16 %v368, %v367
  %v467 = vpack.c.b16 %v370, %v369
  %v468 = vpack.c.b16 %v372, %v371
  %v469 = vpack.c.b16 %v374, %v373
  %v470 = vpack.c.b16 %v376, %v375
  %v471 = vpack.c.b16 %v378, %v377
  %v472 = vpack.c.b16 %v380, %v379
  %v473 = vpack.c.b16 %v382, %v381
  %v474 = vpack.c.b16 %v384, %v383
  %v475 = vpack.c.b16 %v386, %v385
  %v476 = vpack.c.b16 %v388, %v387
  %v477 = vpack.c.b16 %v390, %v389
  %v478 = vpack.c.b16 %v392, %v391
  %v479 = vpack.c.b16 %v394, %v393
  %v480 = vpack.c.b16 %v396, %v395
  %v481 = vpack.c.b16 %v398, %v397
  %v482 = vpack.c.b16 %v400, %v399
  %v483 = vpack.c.b16 %v402, %v401
  %v484 = vpack.c.b16 %v404, %v403
  %v485 = vpack.c.b16 %v406, %v405
  %v486 = vpack.c.b16 %v408, %v407
  %v487 = vpack.c.b16 %v410, %v409
  %v488 = vpack.c.b16 %v412, %v411
  %v489 = vpack.c.b16 %v414, %v413
  %v490 = vpack.c.b16 %v416, %v415
  %v491 = vpack.c.b16 %v418, %v417
  %v492 = vpack.c.b16 %v420, %v419
  %v493 = vpack.c.b16 %v422, %v421
  %v494 = vpack.c.b16 %v424, %v423
  %v495 = vpack.c.b16 %v426, %v425
  %v496 = vpack.c.b16 %v428, %v427
  %v497 = vpack.c.b16 %v430, %v429
  %v498 = vpack.c.b16 %v432, %v431
  %v499 = vpack.c.b16 %v434, %v433
  %v500 = vpack.c.b16 %v436, %v435
  %565 = vmatprep.subr.bf16.mxu0 0
  %566 = vmatpush1.bf16.msra.mxu0 %v444
  %567 = vmatprep.subr.bf16.mxu0 0
  %568 = vmatpush1.bf16.msra.mxu0 %v443
  %569 = vmatprep.subr.bf16.mxu0 0
  %570 = vmatpush1.bf16.msra.mxu0 %v442
  %571 = vmatprep.subr.bf16.mxu0 0
  %572 = vmatpush1.bf16.msra.mxu0 %v441
  %573 = vmatprep.subr.bf16.mxu0 0
  %574 = vmatpush1.bf16.msra.mxu0 %v440
  %575 = vmatprep.subr.bf16.mxu0 0
  %576 = vmatpush1.bf16.msra.mxu0 %v439
  %577 = vmatprep.subr.bf16.mxu0 0
  %578 = vmatpush1.bf16.msra.mxu0 %v438
  %579 = vmatprep.subr.bf16.mxu0 0
  %580 = vmatpush1.bf16.msra.mxu0 %v437
  %581 = vmatprep.subr.bf16.mxu0 0
  %582 = vmatpush2.bf16.msra.mxu0 %v452
  %583 = vmatprep.subr.bf16.mxu0 0
  %584 = vmatpush2.bf16.msra.mxu0 %v451
  %585 = vmatprep.subr.bf16.mxu0 0
  %586 = vmatpush2.bf16.msra.mxu0 %v450
  %587 = vmatprep.subr.bf16.mxu0 0
  %588 = vmatpush2.bf16.msra.mxu0 %v449
  %589 = vmatprep.subr.bf16.mxu0 0
  %590 = vmatpush2.bf16.msra.mxu0 %v448
  %591 = vmatprep.subr.bf16.mxu0 0
  %592 = vmatpush2.bf16.msra.mxu0 %v447
  %593 = vmatprep.subr.bf16.mxu0 0
  %594 = vmatpush2.bf16.msra.mxu0 %v446
  %595 = vmatprep.subr.bf16.mxu0 0
  %596 = vmatpush2.bf16.msra.mxu0 %v445
  %597 = vmatprep.mubr.bf16.mxu0 %v166
  %598 = vmatmul.mubr.bf16.gmra.mxu0 %v165
  %v599 = vpop.f32.mrf.mxu0
  %v600 = vadd.f32 0.0, %v599
  %v601 = vpop.f32.mrf.mxu0
  %v602 = vpop.f32.mrf.mxu0
  %v603 = vpop.f32.mrf.mxu0
  %604 = vdwg.mxu0
  %605 = vmatprep.subr.bf16.mxu0 0
  %606 = vmatpush1.bf16.msra.mxu0 %v460
  %607 = vmatprep.subr.bf16.mxu0 0
  %608 = vmatpush1.bf16.msra.mxu0 %v459
  %609 = vmatprep.subr.bf16.mxu0 0
  %610 = vmatpush1.bf16.msra.mxu0 %v458
  %611 = vmatprep.subr.bf16.mxu0 0
  %612 = vmatpush1.bf16.msra.mxu0 %v457
  %613 = vmatprep.subr.bf16.mxu0 0
  %614 = vmatpush1.bf16.msra.mxu0 %v456
  %615 = vmatprep.subr.bf16.mxu0 0
  %616 = vmatpush1.bf16.msra.mxu0 %v455
  %617 = vmatprep.subr.bf16.mxu0 0
  %618 = vmatpush1.bf16.msra.mxu0 %v454
  %619 = vmatprep.subr.bf16.mxu0 0
  %620 = vmatpush1.bf16.msra.mxu0 %v453
  %621 = vmatprep.subr.bf16.mxu0 0
  %622 = vmatpush2.bf16.msra.mxu0 %v468
  %623 = vmatprep.subr.bf16.mxu0 0
  %624 = vmatpush2.bf16.msra.mxu0 %v467
  %625 = vmatprep.subr.bf16.mxu0 0
  %626 = vmatpush2.bf16.msra.mxu0 %v466
  %627 = vmatprep.subr.bf16.mxu0 0
  %628 = vmatpush2.bf16.msra.mxu0 %v465
  %629 = vmatprep.subr.bf16.mxu0 0
  %630 = vmatpush2.bf16.msra.mxu0 %v464
  %631 = vmatprep.subr.bf16.mxu0 0
  %632 = vmatpush2.bf16.msra.mxu0 %v463
  %633 = vmatprep.subr.bf16.mxu0 0
  %634 = vmatpush2.bf16.msra.mxu0 %v462
  %635 = vmatprep.subr.bf16.mxu0 0
  %636 = vmatpush2.bf16.msra.mxu0 %v461
  %637 = vmatprep.mubr.bf16.mxu0 %v168
  %638 = vmatmul.mubr.bf16.gmra.mxu0 %v167
  %v639 = vpop.f32.mrf.mxu0
  %v640 = vadd.f32 %v600, %v639
  %v641 = vpop.f32.mrf.mxu0
  %v642 = vpop.f32.mrf.mxu0
  %v643 = vpop.f32.mrf.mxu0
  %644 = vdwg.mxu0
  %645 = vmatprep.subr.bf16.mxu0 0
  %646 = vmatpush1.bf16.msra.mxu0 %v476
  %647 = vmatprep.subr.bf16.mxu0 0
  %648 = vmatpush1.bf16.msra.mxu0 %v475
  %649 = vmatprep.subr.bf16.mxu0 0
  %650 = vmatpush1.bf16.msra.mxu0 %v474
  %651 = vmatprep.subr.bf16.mxu0 0
  %652 = vmatpush1.bf16.msra.mxu0 %v473
  %653 = vmatprep.subr.bf16.mxu0 0
  %654 = vmatpush1.bf16.msra.mxu0 %v472
  %655 = vmatprep.subr.bf16.mxu0 0
  %656 = vmatpush1.bf16.msra.mxu0 %v471
  %657 = vmatprep.subr.bf16.mxu0 0
  %658 = vmatpush1.bf16.msra.mxu0 %v470
  %659 = vmatprep.subr.bf16.mxu0 0
  %660 = vmatpush1.bf16.msra.mxu0 %v469
  %661 = vmatprep.subr.bf16.mxu0 0
  %662 = vmatpush2.bf16.msra.mxu0 %v484
  %663 = vmatprep.subr.bf16.mxu0 0
  %664 = vmatpush2.bf16.msra.mxu0 %v483
  %665 = vmatprep.subr.bf16.mxu0 0
  %666 = vmatpush2.bf16.msra.mxu0 %v482
  %667 = vmatprep.subr.bf16.mxu0 0
  %668 = vmatpush2.bf16.msra.mxu0 %v481
  %669 = vmatprep.subr.bf16.mxu0 0
  %670 = vmatpush2.bf16.msra.mxu0 %v480
  %671 = vmatprep.subr.bf16.mxu0 0
  %672 = vmatpush2.bf16.msra.mxu0 %v479
  %673 = vmatprep.subr.bf16.mxu0 0
  %674 = vmatpush2.bf16.msra.mxu0 %v478
  %675 = vmatprep.subr.bf16.mxu0 0
  %676 = vmatpush2.bf16.msra.mxu0 %v477
  %677 = vmatprep.mubr.bf16.mxu0 %v170
  %678 = vmatmul.mubr.bf16.gmra.mxu0 %v169
  %v679 = vpop.f32.mrf.mxu0
  %v680 = vadd.f32 %v640, %v679
  %v681 = vpop.f32.mrf.mxu0
  %v682 = vpop.f32.mrf.mxu0
  %v683 = vpop.f32.mrf.mxu0
  %684 = vdwg.mxu0
  %685 = vmatprep.subr.bf16.mxu0 0
  %686 = vmatpush1.bf16.msra.mxu0 %v492
  %687 = vmatprep.subr.bf16.mxu0 0
  %688 = vmatpush1.bf16.msra.mxu0 %v491
  %689 = vmatprep.subr.bf16.mxu0 0
  %690 = vmatpush1.bf16.msra.mxu0 %v490
  %691 = vmatprep.subr.bf16.mxu0 0
  %692 = vmatpush1.bf16.msra.mxu0 %v489
  %693 = vmatprep.subr.bf16.mxu0 0
  %694 = vmatpush1.bf16.msra.mxu0 %v488
  %695 = vmatprep.subr.bf16.mxu0 0
  %696 = vmatpush1.bf16.msra.mxu0 %v487
  %697 = vmatprep.subr.bf16.mxu0 0
  %698 = vmatpush1.bf16.msra.mxu0 %v486
  %699 = vmatprep.subr.bf16.mxu0 0
  %700 = vmatpush1.bf16.msra.mxu0 %v485
  %701 = vmatprep.subr.bf16.mxu0 0
  %702 = vmatpush2.bf16.msra.mxu0 %v500
  %703 = vmatprep.subr.bf16.mxu0 0
  %704 = vmatpush2.bf16.msra.mxu0 %v499
  %705 = vmatprep.subr.bf16.mxu0 0
  %706 = vmatpush2.bf16.msra.mxu0 %v498
  %707 = vmatprep.subr.bf16.mxu0 0
  %708 = vmatpush2.bf16.msra.mxu0 %v497
  %709 = vmatprep.subr.bf16.mxu0 0
  %710 = vmatpush2.bf16.msra.mxu0 %v496
  %711 = vmatprep.subr.bf16.mxu0 0
  %712 = vmatpush2.bf16.msra.mxu0 %v495
  %713 = vmatprep.subr.bf16.mxu0 0
  %714 = vmatpush2.bf16.msra.mxu0 %v494
  %715 = vmatprep.subr.bf16.mxu0 0
  %716 = vmatpush2.bf16.msra.mxu0 %v493
  %717 = vmatprep.mubr.bf16.mxu0 %v172
  %718 = vmatmul.mubr.bf16.gmra.mxu0 %v171
  %v719 = vpop.f32.mrf.mxu0
  %v720 = vadd.f32 %v680, %v719
  %v721 = vpop.f32.mrf.mxu0
  %v722 = vpop.f32.mrf.mxu0
  %v723 = vpop.f32.mrf.mxu0
  %724 = vdwg.mxu0
  %v725 = vadd.f32 %v20, %v720
  %726 = vst [vmem:[#allocation2] sm:$0xff] %v725
  // Predicated region
  $region18: #{_lambda_.15} parent=0 // pred_check
    %p727 = pneg %p15
  $region19: #{_lambda_.15} parent=0 // pred_check_branch
    %729 = sbr.rel (%p727) target = $region21
  $region20: #{_lambda_.15} parent=0 // pred_region
    %v730 = vld [vmem:[#allocation2] sm:$0xff]
    %v731 = vld [vmem:[%s2] sm:$0xff]
    %733 = vset.pattern.permute.xlu0 0
    %734 = vperm.xlu0 %733, %v731
    %v735 = vpop.permute.xlu0 %734
    %v737 = vadd.f32 %v730, %v735
    %738 = vst [vmem:[%s3] sm:$0xff] %v737
  $region21: #{_lambda_.15} parent=0 // pred_fallthru
    _
  // Predicated region
  $region22: #{_lambda_.15} parent=0 // pred_check
    _
  $region23: #{_lambda_.15} parent=0 // pred_check_branch
    %740 = sbr.rel (0) target = $region25
  $region24: #{_lambda_.15} parent=0 // pred_region
    _
  $region25: #{_lambda_.15} parent=0 // pred_fallthru
    _
  // Predicated region
  $region26: #{_lambda_.15} parent=0 // pred_check
    _
  $region27: #{_lambda_.15} parent=0 // pred_check_branch
    %742 = sbr.rel (0) target = $region29
  $region28: #{_lambda_.15} parent=0 // pred_region
    _
  $region29: #{_lambda_.15} parent=0 // pred_fallthru
    _

</llo_original>
